<compile_context>
chip_gen: v5e
topology: v5e:2x2
jax: 0.10.0
libtpu: 0.0.40
codegen_flags: <defaults>
</compile_context>

<pallas_src>
import functools
import math

import jax
import jax.numpy as jnp
from jax import lax
from jax.experimental import pallas as pl
from jax.experimental.pallas import tpu as pltpu


# Contract last dim of lhs with last dim of rhs (i.e. lhs @ rhs.T) so that
# PyTorch-layout (out_features, in_features) weights are used directly and the
# transpose is folded into the MXU operand push (no XLU transpose, no copies).
_TRANS_B = (((1,), (1,)), ((), ()))


def _embedder_kernel(N, S, H, dh,
                     x_ref, wl_ref, bl_ref,
                     wqkv_ref, bqkv_ref, wo_ref, bo_ref,
                     g1_ref, be1_ref,
                     w1_ref, b1f_ref, w2_ref, b2f_ref,
                     g2_ref, be2_ref,
                     out_ref):
    E = wl_ref.shape[1]
    eps = 1e-5
    inv_sqrt_dh = 1.0 / math.sqrt(dh)
    bf16, f32 = jnp.bfloat16, jnp.float32

    # ---- Linear(1, E): broadcasted scale + shift -> (N*S, E), f32
    h = x_ref[...] * wl_ref[...] + bl_ref[...]

    # ---- Fused QKV projection: one (N*S, E) @ (E, 3E) MXU push, bf16 in / f32 acc.
    qkv = lax.dot_general(h.astype(bf16), wqkv_ref[...], _TRANS_B,
                          preferred_element_type=f32) + bqkv_ref[...]

    # ---- Per (batch, head): only the tiny (S,S) score/softmax/ctx part.
    ctx_rows = []
    for n in range(N):
        blk = qkv[n * S:(n + 1) * S, :]                             # (S, 3E)
        head_ctx = []
        for hd in range(H):
            q = blk[:, hd * dh:(hd + 1) * dh]                       # (S, dh)
            k = blk[:, E + hd * dh:E + (hd + 1) * dh]
            v = blk[:, 2 * E + hd * dh:2 * E + (hd + 1) * dh]
            # q @ k.T with the transpose folded into the dot (no XLU transpose).
            s = lax.dot_general(q, k, _TRANS_B,
                                preferred_element_type=f32) * inv_sqrt_dh
            s = s - jnp.max(s, axis=-1, keepdims=True)
            p = jnp.exp(s)
            p = p * pl.reciprocal(jnp.sum(p, axis=-1, keepdims=True), approx=True)
            head_ctx.append(jnp.dot(p, v, preferred_element_type=f32))  # (S, dh)
        ctx_rows.append(jnp.concatenate(head_ctx, axis=-1))         # (S, E)
    ctx = jnp.concatenate(ctx_rows, axis=0)                         # (N*S, E)

    # ---- Fused output projection: one (N*S, E) @ (E, E) MXU push.
    attn = lax.dot_general(ctx.astype(bf16), wo_ref[...], _TRANS_B,
                           preferred_element_type=f32) + bo_ref[...]

    # ---- Residual + LayerNorm1 (post-norm, PyTorch default norm_first=False)
    x1 = h + attn
    mu = jnp.mean(x1, axis=-1, keepdims=True)
    var = jnp.mean(jnp.square(x1 - mu), axis=-1, keepdims=True)
    x1 = (x1 - mu) * lax.rsqrt(var + eps) * g1_ref[...] + be1_ref[...]

    # ---- Feed-forward: linear2(relu(linear1(x)))  (dropout=0 -> no-op)
    hff = lax.dot_general(x1.astype(bf16), w1_ref[...], _TRANS_B,
                          preferred_element_type=f32) + b1f_ref[...]
    hff = jnp.maximum(hff, 0.0)
    ff = lax.dot_general(hff.astype(bf16), w2_ref[...], _TRANS_B,
                         preferred_element_type=f32) + b2f_ref[...]

    # ---- Residual + LayerNorm2
    x2 = x1 + ff
    mu2 = jnp.mean(x2, axis=-1, keepdims=True)
    var2 = jnp.mean(jnp.square(x2 - mu2), axis=-1, keepdims=True)
    x2 = (x2 - mu2) * lax.rsqrt(var2 + eps) * g2_ref[...] + be2_ref[...]

    # ---- mean over batch (PyTorch dim=1) + relu -> (S, E)
    m = jnp.zeros((S, E), dtype=f32)
    for n in range(N):
        m = m + x2[n * S:(n + 1) * S, :]
    out_ref[...] = jnp.maximum(m * (1.0 / N), 0.0)


def prepare_params(params, nhead=4):
    """One-time (init-time) param prep: fuse Wq/Wk/Wv, cast weights to bf16.

    Keeps the PyTorch (out_features, in_features) layout so the per-call path
    does NO weight transposes/copies in HBM; the kernel contracts the last dims.
    """
    E = params["w_lin"].shape[0]
    FF = params["w1"].shape[0]
    f32, bf16 = jnp.float32, jnp.bfloat16
    return dict(
        wl=params["w_lin"].reshape(1, E).astype(f32),
        bl=params["b_lin"].reshape(1, E).astype(f32),
        wqkv=jnp.concatenate([params["wq"], params["wk"], params["wv"]],
                             axis=0).astype(bf16),                   # (3E, E)
        bqkv=jnp.concatenate([params["bq"], params["bk"], params["bv"]]
                             ).reshape(1, 3 * E).astype(f32),
        wo=params["wo"].astype(bf16),                                # (E, E)
        bo=params["bo"].reshape(1, E).astype(f32),
        g1=params["g1"].reshape(1, E).astype(f32),
        be1=params["be1"].reshape(1, E).astype(f32),
        w1=params["w1"].astype(bf16),                                # (FF, E)
        b1f=params["b1f"].reshape(1, FF).astype(f32),
        w2=params["w2"].astype(bf16),                                # (E, FF)
        b2f=params["b2f"].reshape(1, E).astype(f32),
        g2=params["g2"].reshape(1, E).astype(f32),
        be2=params["be2"].reshape(1, E).astype(f32),
        nhead=nhead, E=E, FF=FF,
    )


def embedder_forward(x, prepped):
    """x: (S, N, 1) float32, returns (S, E) float32."""
    S, N, one = x.shape
    assert one == 1
    E, H = prepped["E"], prepped["nhead"]
    dh = E // H

    # Only per-call data prep is the tiny (S*N scalars) activation relayout.
    x2d = jnp.transpose(x[:, :, 0], (1, 0)).reshape(N * S, 1).astype(jnp.float32)

    kernel = functools.partial(_embedder_kernel, N, S, H, dh)
    vmem = pl.BlockSpec(memory_space=pltpu.MemorySpace.VMEM)

    return pl.pallas_call(
        kernel,
        out_shape=jax.ShapeDtypeStruct((S, E), jnp.float32),
        in_specs=[vmem] * 15,
        out_specs=vmem,
        compiler_params=pltpu.CompilerParams(
            vmem_limit_bytes=16 * 1024 * 1024),
    )(x2d, prepped["wl"], prepped["bl"],
      prepped["wqkv"], prepped["bqkv"], prepped["wo"], prepped["bo"],
      prepped["g1"], prepped["be1"],
      prepped["w1"], prepped["b1f"], prepped["w2"], prepped["b2f"],
      prepped["g2"], prepped["be2"])


def embedder_ref(x, params, nhead=4):
    """Pure-JAX f32 reference mirroring the PyTorch module exactly."""
    S, N, _ = x.shape
    E = params["w_lin"].shape[0]
    H, dh = nhead, E // nhead
    h = x @ params["w_lin"].T + params["b_lin"]                      # (S, N, E)
    q = h @ params["wq"].T + params["bq"]
    k = h @ params["wk"].T + params["bk"]
    v = h @ params["wv"].T + params["bv"]

    def split(t):
        return t.reshape(S, N, H, dh).transpose(1, 2, 0, 3)          # (N, H, S, dh)

    qh, kh, vh = split(q), split(k), split(v)
    s = jnp.einsum("nhqd,nhkd->nhqk", qh, kh) / math.sqrt(dh)
    a = jax.nn.softmax(s, axis=-1)
    ctx = jnp.einsum("nhqk,nhkd->nhqd", a, vh)
    ctx = ctx.transpose(2, 0, 1, 3).reshape(S, N, E)
    attn = ctx @ params["wo"].T + params["bo"]

    def ln(t, g, b):
        mu = t.mean(-1, keepdims=True)
        var = ((t - mu) ** 2).mean(-1, keepdims=True)
        return (t - mu) / jnp.sqrt(var + 1e-5) * g + b

    x1 = ln(h + attn, params["g1"], params["be1"])
    ff = jax.nn.relu(x1 @ params["w1"].T + params["b1f"]) @ params["w2"].T + params["b2f"]
    x2 = ln(x1 + ff, params["g2"], params["be2"])
    return jax.nn.relu(x2.mean(axis=1))                              # (S, E)


if __name__ == "__main__":
    E, H, FF = 256, 4, 2048      # module defaults: embedding_size=256, nhead=4, dim_feedforward=2048
    S, N = 8, 2                  # small (seq, batch)

    key = jax.random.PRNGKey(0)
    ks = jax.random.split(key, 16)

    def w(k, shape, scale=0.05):
        return (scale * jax.random.normal(k, shape)).astype(jnp.float32)

    params = {
        "w_lin": w(ks[0], (E, 1)), "b_lin": w(ks[1], (E,)),
        "wq": w(ks[2], (E, E)), "bq": w(ks[3], (E,)),
        "wk": w(ks[4], (E, E)), "bk": w(ks[5], (E,)),
        "wv": w(ks[6], (E, E)), "bv": w(ks[7], (E,)),
        "wo": w(ks[8], (E, E)), "bo": w(ks[9], (E,)),
        "g1": jnp.ones((E,), jnp.float32), "be1": jnp.zeros((E,), jnp.float32),
        "w1": w(ks[10], (FF, E)), "b1f": w(ks[11], (FF,)),
        "w2": w(ks[12], (E, FF)), "b2f": w(ks[13], (E,)),
        "g2": jnp.ones((E,), jnp.float32), "be2": jnp.zeros((E,), jnp.float32),
    }

    x = jax.random.normal(ks[14], (S, N, 1), dtype=jnp.float32)

    prepped = prepare_params(params, nhead=H)        # once, at "init" time
    out = jax.block_until_ready(embedder_forward(x, prepped))
    ref = jax.block_until_ready(embedder_ref(x, params, nhead=H))

    assert out.shape == (S, E), out.shape
    max_err = float(jnp.max(jnp.abs(out - ref)))
    assert max_err < 2e-2, f"max_err={max_err}"      # bf16 weights/activations at the dots
    print("KERNEL_OK")
</pallas_src>

<mosaic_0001>
module attributes {stable_mosaic.version = 11 : i64} {
  func.func @_embedder_kernel(%arg0: memref<16x1xf32, #tpu.memory_space<vmem>>, %arg1: memref<1x256xf32, #tpu.memory_space<vmem>>, %arg2: memref<1x256xf32, #tpu.memory_space<vmem>>, %arg3: memref<768x256xbf16, #tpu.memory_space<vmem>>, %arg4: memref<1x768xf32, #tpu.memory_space<vmem>>, %arg5: memref<256x256xbf16, #tpu.memory_space<vmem>>, %arg6: memref<1x256xf32, #tpu.memory_space<vmem>>, %arg7: memref<1x256xf32, #tpu.memory_space<vmem>>, %arg8: memref<1x256xf32, #tpu.memory_space<vmem>>, %arg9: memref<2048x256xbf16, #tpu.memory_space<vmem>>, %arg10: memref<1x2048xf32, #tpu.memory_space<vmem>>, %arg11: memref<256x2048xbf16, #tpu.memory_space<vmem>>, %arg12: memref<1x256xf32, #tpu.memory_space<vmem>>, %arg13: memref<1x256xf32, #tpu.memory_space<vmem>>, %arg14: memref<1x256xf32, #tpu.memory_space<vmem>>, %arg15: memref<8x256xf32, #tpu.memory_space<vmem>>) attributes {dimension_semantics = [], scalar_prefetch = 0 : i64, scratch_operands = 0 : i64, tpu.core_type = #tpu.core_type<tc>} {
    %c0 = arith.constant 0 : index
    %c0_0 = arith.constant 0 : index
    %0 = vector.load %arg0[%c0, %c0_0] : memref<16x1xf32, #tpu.memory_space<vmem>>, vector<16x1xf32>
    %c0_1 = arith.constant 0 : index
    %c0_2 = arith.constant 0 : index
    %1 = vector.load %arg1[%c0_1, %c0_2] : memref<1x256xf32, #tpu.memory_space<vmem>>, vector<1x256xf32>
    %2 = vector.broadcast %0 : vector<16x1xf32> to vector<16x256xf32>
    %3 = vector.broadcast %1 : vector<1x256xf32> to vector<16x256xf32>
    %4 = arith.mulf %2, %3 : vector<16x256xf32>
    %c0_3 = arith.constant 0 : index
    %c0_4 = arith.constant 0 : index
    %5 = vector.load %arg2[%c0_3, %c0_4] : memref<1x256xf32, #tpu.memory_space<vmem>>, vector<1x256xf32>
    %6 = vector.broadcast %5 : vector<1x256xf32> to vector<16x256xf32>
    %7 = arith.addf %4, %6 : vector<16x256xf32>
    %8 = arith.truncf %7 : vector<16x256xf32> to vector<16x256xbf16>
    %c0_5 = arith.constant 0 : index
    %c0_6 = arith.constant 0 : index
    %9 = vector.load %arg3[%c0_5, %c0_6] : memref<768x256xbf16, #tpu.memory_space<vmem>>, vector<768x256xbf16>
    %cst = arith.constant dense<0.000000e+00> : vector<16x768xf32>
    %10 = tpu.matmul %8, %9, %cst {dimension_numbers = #tpu.dot_dimension_numbers<[1], [1], [0], [0], [0, 0, 1, 0], [], []>} : vector<16x256xbf16>, vector<768x256xbf16>, vector<16x768xf32> -> vector<16x768xf32>
    %c0_7 = arith.constant 0 : index
    %c0_8 = arith.constant 0 : index
    %11 = vector.load %arg4[%c0_7, %c0_8] : memref<1x768xf32, #tpu.memory_space<vmem>>, vector<1x768xf32>
    %12 = vector.broadcast %11 : vector<1x768xf32> to vector<16x768xf32>
    %13 = arith.addf %10, %12 : vector<16x768xf32>
    %14 = vector.extract_strided_slice %13 {offsets = [0, 0], sizes = [8, 768], strides = [1, 1]} : vector<16x768xf32> to vector<8x768xf32>
    %15 = vector.extract_strided_slice %14 {offsets = [0, 0], sizes = [8, 64], strides = [1, 1]} : vector<8x768xf32> to vector<8x64xf32>
    %16 = vector.extract_strided_slice %14 {offsets = [0, 256], sizes = [8, 64], strides = [1, 1]} : vector<8x768xf32> to vector<8x64xf32>
    %17 = vector.extract_strided_slice %14 {offsets = [0, 512], sizes = [8, 64], strides = [1, 1]} : vector<8x768xf32> to vector<8x64xf32>
    %cst_9 = arith.constant dense<0.000000e+00> : vector<8x8xf32>
    %18 = tpu.matmul %15, %16, %cst_9 {dimension_numbers = #tpu.dot_dimension_numbers<[1], [1], [0], [0], [0, 0, 1, 0], [], []>} : vector<8x64xf32>, vector<8x64xf32>, vector<8x8xf32> -> vector<8x8xf32>
    %cst_10 = arith.constant 1.250000e-01 : f32
    %19 = vector.broadcast %cst_10 : f32 to vector<8x8xf32>
    %20 = arith.mulf %18, %19 : vector<8x8xf32>
    %cst_11 = arith.constant dense<0xFF800000> : vector<8xf32>
    %21 = vector.multi_reduction <maximumf>, %20, %cst_11 [1] : vector<8x8xf32> to vector<8xf32>
    %22 = vector.shape_cast %21 : vector<8xf32> to vector<8x1xf32>
    %23 = vector.broadcast %22 : vector<8x1xf32> to vector<8x8xf32>
    %24 = arith.subf %20, %23 : vector<8x8xf32>
    %25 = math.exp %24 : vector<8x8xf32>
    %cst_12 = arith.constant dense<0.000000e+00> : vector<8xf32>
    %26 = vector.multi_reduction <add>, %25, %cst_12 [1] : vector<8x8xf32> to vector<8xf32>
    %27 = vector.shape_cast %26 : vector<8xf32> to vector<8x1xf32>
    %28 = tpu.reciprocal %27 {approx = true} : vector<8x1xf32> -> vector<8x1xf32>
    %29 = vector.broadcast %28 : vector<8x1xf32> to vector<8x8xf32>
    %30 = arith.mulf %25, %29 : vector<8x8xf32>
    %cst_13 = arith.constant dense<0.000000e+00> : vector<8x64xf32>
    %31 = tpu.matmul %30, %17, %cst_13 {dimension_numbers = #tpu.dot_dimension_numbers<[1], [0], [0], [1], [0, 0, 1, 1], [], []>} : vector<8x8xf32>, vector<8x64xf32>, vector<8x64xf32> -> vector<8x64xf32>
    %32 = vector.extract_strided_slice %14 {offsets = [0, 64], sizes = [8, 64], strides = [1, 1]} : vector<8x768xf32> to vector<8x64xf32>
    %33 = vector.extract_strided_slice %14 {offsets = [0, 320], sizes = [8, 64], strides = [1, 1]} : vector<8x768xf32> to vector<8x64xf32>
    %34 = vector.extract_strided_slice %14 {offsets = [0, 576], sizes = [8, 64], strides = [1, 1]} : vector<8x768xf32> to vector<8x64xf32>
    %cst_14 = arith.constant dense<0.000000e+00> : vector<8x8xf32>
    %35 = tpu.matmul %32, %33, %cst_14 {dimension_numbers = #tpu.dot_dimension_numbers<[1], [1], [0], [0], [0, 0, 1, 0], [], []>} : vector<8x64xf32>, vector<8x64xf32>, vector<8x8xf32> -> vector<8x8xf32>
    %cst_15 = arith.constant 1.250000e-01 : f32
    %36 = vector.broadcast %cst_15 : f32 to vector<8x8xf32>
    %37 = arith.mulf %35, %36 : vector<8x8xf32>
    %cst_16 = arith.constant dense<0xFF800000> : vector<8xf32>
    %38 = vector.multi_reduction <maximumf>, %37, %cst_16 [1] : vector<8x8xf32> to vector<8xf32>
    %39 = vector.shape_cast %38 : vector<8xf32> to vector<8x1xf32>
    %40 = vector.broadcast %39 : vector<8x1xf32> to vector<8x8xf32>
    %41 = arith.subf %37, %40 : vector<8x8xf32>
    %42 = math.exp %41 : vector<8x8xf32>
    %cst_17 = arith.constant dense<0.000000e+00> : vector<8xf32>
    %43 = vector.multi_reduction <add>, %42, %cst_17 [1] : vector<8x8xf32> to vector<8xf32>
    %44 = vector.shape_cast %43 : vector<8xf32> to vector<8x1xf32>
    %45 = tpu.reciprocal %44 {approx = true} : vector<8x1xf32> -> vector<8x1xf32>
    %46 = vector.broadcast %45 : vector<8x1xf32> to vector<8x8xf32>
    %47 = arith.mulf %42, %46 : vector<8x8xf32>
    %cst_18 = arith.constant dense<0.000000e+00> : vector<8x64xf32>
    %48 = tpu.matmul %47, %34, %cst_18 {dimension_numbers = #tpu.dot_dimension_numbers<[1], [0], [0], [1], [0, 0, 1, 1], [], []>} : vector<8x8xf32>, vector<8x64xf32>, vector<8x64xf32> -> vector<8x64xf32>
    %49 = vector.extract_strided_slice %14 {offsets = [0, 128], sizes = [8, 64], strides = [1, 1]} : vector<8x768xf32> to vector<8x64xf32>
    %50 = vector.extract_strided_slice %14 {offsets = [0, 384], sizes = [8, 64], strides = [1, 1]} : vector<8x768xf32> to vector<8x64xf32>
    %51 = vector.extract_strided_slice %14 {offsets = [0, 640], sizes = [8, 64], strides = [1, 1]} : vector<8x768xf32> to vector<8x64xf32>
    %cst_19 = arith.constant dense<0.000000e+00> : vector<8x8xf32>
    %52 = tpu.matmul %49, %50, %cst_19 {dimension_numbers = #tpu.dot_dimension_numbers<[1], [1], [0], [0], [0, 0, 1, 0], [], []>} : vector<8x64xf32>, vector<8x64xf32>, vector<8x8xf32> -> vector<8x8xf32>
    %cst_20 = arith.constant 1.250000e-01 : f32
    %53 = vector.broadcast %cst_20 : f32 to vector<8x8xf32>
    %54 = arith.mulf %52, %53 : vector<8x8xf32>
    %cst_21 = arith.constant dense<0xFF800000> : vector<8xf32>
    %55 = vector.multi_reduction <maximumf>, %54, %cst_21 [1] : vector<8x8xf32> to vector<8xf32>
    %56 = vector.shape_cast %55 : vector<8xf32> to vector<8x1xf32>
    %57 = vector.broadcast %56 : vector<8x1xf32> to vector<8x8xf32>
    %58 = arith.subf %54, %57 : vector<8x8xf32>
    %59 = math.exp %58 : vector<8x8xf32>
    %cst_22 = arith.constant dense<0.000000e+00> : vector<8xf32>
    %60 = vector.multi_reduction <add>, %59, %cst_22 [1] : vector<8x8xf32> to vector<8xf32>
    %61 = vector.shape_cast %60 : vector<8xf32> to vector<8x1xf32>
    %62 = tpu.reciprocal %61 {approx = true} : vector<8x1xf32> -> vector<8x1xf32>
    %63 = vector.broadcast %62 : vector<8x1xf32> to vector<8x8xf32>
    %64 = arith.mulf %59, %63 : vector<8x8xf32>
    %cst_23 = arith.constant dense<0.000000e+00> : vector<8x64xf32>
    %65 = tpu.matmul %64, %51, %cst_23 {dimension_numbers = #tpu.dot_dimension_numbers<[1], [0], [0], [1], [0, 0, 1, 1], [], []>} : vector<8x8xf32>, vector<8x64xf32>, vector<8x64xf32> -> vector<8x64xf32>
    %66 = vector.extract_strided_slice %14 {offsets = [0, 192], sizes = [8, 64], strides = [1, 1]} : vector<8x768xf32> to vector<8x64xf32>
    %67 = vector.extract_strided_slice %14 {offsets = [0, 448], sizes = [8, 64], strides = [1, 1]} : vector<8x768xf32> to vector<8x64xf32>
    %68 = vector.extract_strided_slice %14 {offsets = [0, 704], sizes = [8, 64], strides = [1, 1]} : vector<8x768xf32> to vector<8x64xf32>
    %cst_24 = arith.constant dense<0.000000e+00> : vector<8x8xf32>
    %69 = tpu.matmul %66, %67, %cst_24 {dimension_numbers = #tpu.dot_dimension_numbers<[1], [1], [0], [0], [0, 0, 1, 0], [], []>} : vector<8x64xf32>, vector<8x64xf32>, vector<8x8xf32> -> vector<8x8xf32>
    %cst_25 = arith.constant 1.250000e-01 : f32
    %70 = vector.broadcast %cst_25 : f32 to vector<8x8xf32>
    %71 = arith.mulf %69, %70 : vector<8x8xf32>
    %cst_26 = arith.constant dense<0xFF800000> : vector<8xf32>
    %72 = vector.multi_reduction <maximumf>, %71, %cst_26 [1] : vector<8x8xf32> to vector<8xf32>
    %73 = vector.shape_cast %72 : vector<8xf32> to vector<8x1xf32>
    %74 = vector.broadcast %73 : vector<8x1xf32> to vector<8x8xf32>
    %75 = arith.subf %71, %74 : vector<8x8xf32>
    %76 = math.exp %75 : vector<8x8xf32>
    %cst_27 = arith.constant dense<0.000000e+00> : vector<8xf32>
    %77 = vector.multi_reduction <add>, %76, %cst_27 [1] : vector<8x8xf32> to vector<8xf32>
    %78 = vector.shape_cast %77 : vector<8xf32> to vector<8x1xf32>
    %79 = tpu.reciprocal %78 {approx = true} : vector<8x1xf32> -> vector<8x1xf32>
    %80 = vector.broadcast %79 : vector<8x1xf32> to vector<8x8xf32>
    %81 = arith.mulf %76, %80 : vector<8x8xf32>
    %cst_28 = arith.constant dense<0.000000e+00> : vector<8x64xf32>
    %82 = tpu.matmul %81, %68, %cst_28 {dimension_numbers = #tpu.dot_dimension_numbers<[1], [0], [0], [1], [0, 0, 1, 1], [], []>} : vector<8x8xf32>, vector<8x64xf32>, vector<8x64xf32> -> vector<8x64xf32>
    %83 = tpu.concatenate %31, %48, %65, %82 in 1 : vector<8x64xf32>, vector<8x64xf32>, vector<8x64xf32>, vector<8x64xf32> -> vector<8x256xf32>
    %84 = vector.extract_strided_slice %13 {offsets = [8, 0], sizes = [8, 768], strides = [1, 1]} : vector<16x768xf32> to vector<8x768xf32>
    %85 = vector.extract_strided_slice %84 {offsets = [0, 0], sizes = [8, 64], strides = [1, 1]} : vector<8x768xf32> to vector<8x64xf32>
    %86 = vector.extract_strided_slice %84 {offsets = [0, 256], sizes = [8, 64], strides = [1, 1]} : vector<8x768xf32> to vector<8x64xf32>
    %87 = vector.extract_strided_slice %84 {offsets = [0, 512], sizes = [8, 64], strides = [1, 1]} : vector<8x768xf32> to vector<8x64xf32>
    %cst_29 = arith.constant dense<0.000000e+00> : vector<8x8xf32>
    %88 = tpu.matmul %85, %86, %cst_29 {dimension_numbers = #tpu.dot_dimension_numbers<[1], [1], [0], [0], [0, 0, 1, 0], [], []>} : vector<8x64xf32>, vector<8x64xf32>, vector<8x8xf32> -> vector<8x8xf32>
    %cst_30 = arith.constant 1.250000e-01 : f32
    %89 = vector.broadcast %cst_30 : f32 to vector<8x8xf32>
    %90 = arith.mulf %88, %89 : vector<8x8xf32>
    %cst_31 = arith.constant dense<0xFF800000> : vector<8xf32>
    %91 = vector.multi_reduction <maximumf>, %90, %cst_31 [1] : vector<8x8xf32> to vector<8xf32>
    %92 = vector.shape_cast %91 : vector<8xf32> to vector<8x1xf32>
    %93 = vector.broadcast %92 : vector<8x1xf32> to vector<8x8xf32>
    %94 = arith.subf %90, %93 : vector<8x8xf32>
    %95 = math.exp %94 : vector<8x8xf32>
    %cst_32 = arith.constant dense<0.000000e+00> : vector<8xf32>
    %96 = vector.multi_reduction <add>, %95, %cst_32 [1] : vector<8x8xf32> to vector<8xf32>
    %97 = vector.shape_cast %96 : vector<8xf32> to vector<8x1xf32>
    %98 = tpu.reciprocal %97 {approx = true} : vector<8x1xf32> -> vector<8x1xf32>
    %99 = vector.broadcast %98 : vector<8x1xf32> to vector<8x8xf32>
    %100 = arith.mulf %95, %99 : vector<8x8xf32>
    %cst_33 = arith.constant dense<0.000000e+00> : vector<8x64xf32>
    %101 = tpu.matmul %100, %87, %cst_33 {dimension_numbers = #tpu.dot_dimension_numbers<[1], [0], [0], [1], [0, 0, 1, 1], [], []>} : vector<8x8xf32>, vector<8x64xf32>, vector<8x64xf32> -> vector<8x64xf32>
    %102 = vector.extract_strided_slice %84 {offsets = [0, 64], sizes = [8, 64], strides = [1, 1]} : vector<8x768xf32> to vector<8x64xf32>
    %103 = vector.extract_strided_slice %84 {offsets = [0, 320], sizes = [8, 64], strides = [1, 1]} : vector<8x768xf32> to vector<8x64xf32>
    %104 = vector.extract_strided_slice %84 {offsets = [0, 576], sizes = [8, 64], strides = [1, 1]} : vector<8x768xf32> to vector<8x64xf32>
    %cst_34 = arith.constant dense<0.000000e+00> : vector<8x8xf32>
    %105 = tpu.matmul %102, %103, %cst_34 {dimension_numbers = #tpu.dot_dimension_numbers<[1], [1], [0], [0], [0, 0, 1, 0], [], []>} : vector<8x64xf32>, vector<8x64xf32>, vector<8x8xf32> -> vector<8x8xf32>
    %cst_35 = arith.constant 1.250000e-01 : f32
    %106 = vector.broadcast %cst_35 : f32 to vector<8x8xf32>
    %107 = arith.mulf %105, %106 : vector<8x8xf32>
    %cst_36 = arith.constant dense<0xFF800000> : vector<8xf32>
    %108 = vector.multi_reduction <maximumf>, %107, %cst_36 [1] : vector<8x8xf32> to vector<8xf32>
    %109 = vector.shape_cast %108 : vector<8xf32> to vector<8x1xf32>
    %110 = vector.broadcast %109 : vector<8x1xf32> to vector<8x8xf32>
    %111 = arith.subf %107, %110 : vector<8x8xf32>
    %112 = math.exp %111 : vector<8x8xf32>
    %cst_37 = arith.constant dense<0.000000e+00> : vector<8xf32>
    %113 = vector.multi_reduction <add>, %112, %cst_37 [1] : vector<8x8xf32> to vector<8xf32>
    %114 = vector.shape_cast %113 : vector<8xf32> to vector<8x1xf32>
    %115 = tpu.reciprocal %114 {approx = true} : vector<8x1xf32> -> vector<8x1xf32>
    %116 = vector.broadcast %115 : vector<8x1xf32> to vector<8x8xf32>
    %117 = arith.mulf %112, %116 : vector<8x8xf32>
    %cst_38 = arith.constant dense<0.000000e+00> : vector<8x64xf32>
    %118 = tpu.matmul %117, %104, %cst_38 {dimension_numbers = #tpu.dot_dimension_numbers<[1], [0], [0], [1], [0, 0, 1, 1], [], []>} : vector<8x8xf32>, vector<8x64xf32>, vector<8x64xf32> -> vector<8x64xf32>
    %119 = vector.extract_strided_slice %84 {offsets = [0, 128], sizes = [8, 64], strides = [1, 1]} : vector<8x768xf32> to vector<8x64xf32>
    %120 = vector.extract_strided_slice %84 {offsets = [0, 384], sizes = [8, 64], strides = [1, 1]} : vector<8x768xf32> to vector<8x64xf32>
    %121 = vector.extract_strided_slice %84 {offsets = [0, 640], sizes = [8, 64], strides = [1, 1]} : vector<8x768xf32> to vector<8x64xf32>
    %cst_39 = arith.constant dense<0.000000e+00> : vector<8x8xf32>
    %122 = tpu.matmul %119, %120, %cst_39 {dimension_numbers = #tpu.dot_dimension_numbers<[1], [1], [0], [0], [0, 0, 1, 0], [], []>} : vector<8x64xf32>, vector<8x64xf32>, vector<8x8xf32> -> vector<8x8xf32>
    %cst_40 = arith.constant 1.250000e-01 : f32
    %123 = vector.broadcast %cst_40 : f32 to vector<8x8xf32>
    %124 = arith.mulf %122, %123 : vector<8x8xf32>
    %cst_41 = arith.constant dense<0xFF800000> : vector<8xf32>
    %125 = vector.multi_reduction <maximumf>, %124, %cst_41 [1] : vector<8x8xf32> to vector<8xf32>
    %126 = vector.shape_cast %125 : vector<8xf32> to vector<8x1xf32>
    %127 = vector.broadcast %126 : vector<8x1xf32> to vector<8x8xf32>
    %128 = arith.subf %124, %127 : vector<8x8xf32>
    %129 = math.exp %128 : vector<8x8xf32>
    %cst_42 = arith.constant dense<0.000000e+00> : vector<8xf32>
    %130 = vector.multi_reduction <add>, %129, %cst_42 [1] : vector<8x8xf32> to vector<8xf32>
    %131 = vector.shape_cast %130 : vector<8xf32> to vector<8x1xf32>
    %132 = tpu.reciprocal %131 {approx = true} : vector<8x1xf32> -> vector<8x1xf32>
    %133 = vector.broadcast %132 : vector<8x1xf32> to vector<8x8xf32>
    %134 = arith.mulf %129, %133 : vector<8x8xf32>
    %cst_43 = arith.constant dense<0.000000e+00> : vector<8x64xf32>
    %135 = tpu.matmul %134, %121, %cst_43 {dimension_numbers = #tpu.dot_dimension_numbers<[1], [0], [0], [1], [0, 0, 1, 1], [], []>} : vector<8x8xf32>, vector<8x64xf32>, vector<8x64xf32> -> vector<8x64xf32>
    %136 = vector.extract_strided_slice %84 {offsets = [0, 192], sizes = [8, 64], strides = [1, 1]} : vector<8x768xf32> to vector<8x64xf32>
    %137 = vector.extract_strided_slice %84 {offsets = [0, 448], sizes = [8, 64], strides = [1, 1]} : vector<8x768xf32> to vector<8x64xf32>
    %138 = vector.extract_strided_slice %84 {offsets = [0, 704], sizes = [8, 64], strides = [1, 1]} : vector<8x768xf32> to vector<8x64xf32>
    %cst_44 = arith.constant dense<0.000000e+00> : vector<8x8xf32>
    %139 = tpu.matmul %136, %137, %cst_44 {dimension_numbers = #tpu.dot_dimension_numbers<[1], [1], [0], [0], [0, 0, 1, 0], [], []>} : vector<8x64xf32>, vector<8x64xf32>, vector<8x8xf32> -> vector<8x8xf32>
    %cst_45 = arith.constant 1.250000e-01 : f32
    %140 = vector.broadcast %cst_45 : f32 to vector<8x8xf32>
    %141 = arith.mulf %139, %140 : vector<8x8xf32>
    %cst_46 = arith.constant dense<0xFF800000> : vector<8xf32>
    %142 = vector.multi_reduction <maximumf>, %141, %cst_46 [1] : vector<8x8xf32> to vector<8xf32>
    %143 = vector.shape_cast %142 : vector<8xf32> to vector<8x1xf32>
    %144 = vector.broadcast %143 : vector<8x1xf32> to vector<8x8xf32>
    %145 = arith.subf %141, %144 : vector<8x8xf32>
    %146 = math.exp %145 : vector<8x8xf32>
    %cst_47 = arith.constant dense<0.000000e+00> : vector<8xf32>
    %147 = vector.multi_reduction <add>, %146, %cst_47 [1] : vector<8x8xf32> to vector<8xf32>
    %148 = vector.shape_cast %147 : vector<8xf32> to vector<8x1xf32>
    %149 = tpu.reciprocal %148 {approx = true} : vector<8x1xf32> -> vector<8x1xf32>
    %150 = vector.broadcast %149 : vector<8x1xf32> to vector<8x8xf32>
    %151 = arith.mulf %146, %150 : vector<8x8xf32>
    %cst_48 = arith.constant dense<0.000000e+00> : vector<8x64xf32>
    %152 = tpu.matmul %151, %138, %cst_48 {dimension_numbers = #tpu.dot_dimension_numbers<[1], [0], [0], [1], [0, 0, 1, 1], [], []>} : vector<8x8xf32>, vector<8x64xf32>, vector<8x64xf32> -> vector<8x64xf32>
    %153 = tpu.concatenate %101, %118, %135, %152 in 1 : vector<8x64xf32>, vector<8x64xf32>, vector<8x64xf32>, vector<8x64xf32> -> vector<8x256xf32>
    %154 = tpu.concatenate %83, %153 in 0 : vector<8x256xf32>, vector<8x256xf32> -> vector<16x256xf32>
    %155 = arith.truncf %154 : vector<16x256xf32> to vector<16x256xbf16>
    %c0_49 = arith.constant 0 : index
    %c0_50 = arith.constant 0 : index
    %156 = vector.load %arg5[%c0_49, %c0_50] : memref<256x256xbf16, #tpu.memory_space<vmem>>, vector<256x256xbf16>
    %cst_51 = arith.constant dense<0.000000e+00> : vector<16x256xf32>
    %157 = tpu.matmul %155, %156, %cst_51 {dimension_numbers = #tpu.dot_dimension_numbers<[1], [1], [0], [0], [0, 0, 1, 0], [], []>} : vector<16x256xbf16>, vector<256x256xbf16>, vector<16x256xf32> -> vector<16x256xf32>
    %c0_52 = arith.constant 0 : index
    %c0_53 = arith.constant 0 : index
    %158 = vector.load %arg6[%c0_52, %c0_53] : memref<1x256xf32, #tpu.memory_space<vmem>>, vector<1x256xf32>
    %159 = vector.broadcast %158 : vector<1x256xf32> to vector<16x256xf32>
    %160 = arith.addf %157, %159 : vector<16x256xf32>
    %161 = arith.addf %7, %160 : vector<16x256xf32>
    %cst_54 = arith.constant dense<0.000000e+00> : vector<16xf32>
    %162 = vector.multi_reduction <add>, %161, %cst_54 [1] : vector<16x256xf32> to vector<16xf32>
    %163 = vector.shape_cast %162 : vector<16xf32> to vector<16x1xf32>
    %cst_55 = arith.constant 2.560000e+02 : f32
    %164 = vector.broadcast %cst_55 : f32 to vector<16x1xf32>
    %165 = arith.divf %163, %164 : vector<16x1xf32>
    %166 = vector.broadcast %165 : vector<16x1xf32> to vector<16x256xf32>
    %167 = arith.subf %161, %166 : vector<16x256xf32>
    %168 = arith.mulf %167, %167 : vector<16x256xf32>
    %cst_56 = arith.constant dense<0.000000e+00> : vector<16xf32>
    %169 = vector.multi_reduction <add>, %168, %cst_56 [1] : vector<16x256xf32> to vector<16xf32>
    %170 = vector.shape_cast %169 : vector<16xf32> to vector<16x1xf32>
    %cst_57 = arith.constant 2.560000e+02 : f32
    %171 = vector.broadcast %cst_57 : f32 to vector<16x1xf32>
    %172 = arith.divf %170, %171 : vector<16x1xf32>
    %173 = vector.broadcast %165 : vector<16x1xf32> to vector<16x256xf32>
    %174 = arith.subf %161, %173 : vector<16x256xf32>
    %cst_58 = arith.constant 9.99999974E-6 : f32
    %175 = vector.broadcast %cst_58 : f32 to vector<16x1xf32>
    %176 = arith.addf %172, %175 : vector<16x1xf32>
    %177 = math.rsqrt %176 : vector<16x1xf32>
    %178 = vector.broadcast %177 : vector<16x1xf32> to vector<16x256xf32>
    %179 = arith.mulf %174, %178 : vector<16x256xf32>
    %c0_59 = arith.constant 0 : index
    %c0_60 = arith.constant 0 : index
    %180 = vector.load %arg7[%c0_59, %c0_60] : memref<1x256xf32, #tpu.memory_space<vmem>>, vector<1x256xf32>
    %181 = vector.broadcast %180 : vector<1x256xf32> to vector<16x256xf32>
    %182 = arith.mulf %179, %181 : vector<16x256xf32>
    %c0_61 = arith.constant 0 : index
    %c0_62 = arith.constant 0 : index
    %183 = vector.load %arg8[%c0_61, %c0_62] : memref<1x256xf32, #tpu.memory_space<vmem>>, vector<1x256xf32>
    %184 = vector.broadcast %183 : vector<1x256xf32> to vector<16x256xf32>
    %185 = arith.addf %182, %184 : vector<16x256xf32>
    %186 = arith.truncf %185 : vector<16x256xf32> to vector<16x256xbf16>
    %c0_63 = arith.constant 0 : index
    %c0_64 = arith.constant 0 : index
    %187 = vector.load %arg9[%c0_63, %c0_64] : memref<2048x256xbf16, #tpu.memory_space<vmem>>, vector<2048x256xbf16>
    %cst_65 = arith.constant dense<0.000000e+00> : vector<16x2048xf32>
    %188 = tpu.matmul %186, %187, %cst_65 {dimension_numbers = #tpu.dot_dimension_numbers<[1], [1], [0], [0], [0, 0, 1, 0], [], []>} : vector<16x256xbf16>, vector<2048x256xbf16>, vector<16x2048xf32> -> vector<16x2048xf32>
    %c0_66 = arith.constant 0 : index
    %c0_67 = arith.constant 0 : index
    %189 = vector.load %arg10[%c0_66, %c0_67] : memref<1x2048xf32, #tpu.memory_space<vmem>>, vector<1x2048xf32>
    %190 = vector.broadcast %189 : vector<1x2048xf32> to vector<16x2048xf32>
    %191 = arith.addf %188, %190 : vector<16x2048xf32>
    %cst_68 = arith.constant 0.000000e+00 : f32
    %192 = vector.broadcast %cst_68 : f32 to vector<16x2048xf32>
    %193 = arith.maximumf %191, %192 : vector<16x2048xf32>
    %194 = arith.truncf %193 : vector<16x2048xf32> to vector<16x2048xbf16>
    %c0_69 = arith.constant 0 : index
    %c0_70 = arith.constant 0 : index
    %195 = vector.load %arg11[%c0_69, %c0_70] : memref<256x2048xbf16, #tpu.memory_space<vmem>>, vector<256x2048xbf16>
    %cst_71 = arith.constant dense<0.000000e+00> : vector<16x256xf32>
    %196 = tpu.matmul %194, %195, %cst_71 {dimension_numbers = #tpu.dot_dimension_numbers<[1], [1], [0], [0], [0, 0, 1, 0], [], []>} : vector<16x2048xbf16>, vector<256x2048xbf16>, vector<16x256xf32> -> vector<16x256xf32>
    %c0_72 = arith.constant 0 : index
    %c0_73 = arith.constant 0 : index
    %197 = vector.load %arg12[%c0_72, %c0_73] : memref<1x256xf32, #tpu.memory_space<vmem>>, vector<1x256xf32>
    %198 = vector.broadcast %197 : vector<1x256xf32> to vector<16x256xf32>
    %199 = arith.addf %196, %198 : vector<16x256xf32>
    %200 = arith.addf %185, %199 : vector<16x256xf32>
    %cst_74 = arith.constant dense<0.000000e+00> : vector<16xf32>
    %201 = vector.multi_reduction <add>, %200, %cst_74 [1] : vector<16x256xf32> to vector<16xf32>
    %202 = vector.shape_cast %201 : vector<16xf32> to vector<16x1xf32>
    %cst_75 = arith.constant 2.560000e+02 : f32
    %203 = vector.broadcast %cst_75 : f32 to vector<16x1xf32>
    %204 = arith.divf %202, %203 : vector<16x1xf32>
    %205 = vector.broadcast %204 : vector<16x1xf32> to vector<16x256xf32>
    %206 = arith.subf %200, %205 : vector<16x256xf32>
    %207 = arith.mulf %206, %206 : vector<16x256xf32>
    %cst_76 = arith.constant dense<0.000000e+00> : vector<16xf32>
    %208 = vector.multi_reduction <add>, %207, %cst_76 [1] : vector<16x256xf32> to vector<16xf32>
    %209 = vector.shape_cast %208 : vector<16xf32> to vector<16x1xf32>
    %cst_77 = arith.constant 2.560000e+02 : f32
    %210 = vector.broadcast %cst_77 : f32 to vector<16x1xf32>
    %211 = arith.divf %209, %210 : vector<16x1xf32>
    %212 = vector.broadcast %204 : vector<16x1xf32> to vector<16x256xf32>
    %213 = arith.subf %200, %212 : vector<16x256xf32>
    %cst_78 = arith.constant 9.99999974E-6 : f32
    %214 = vector.broadcast %cst_78 : f32 to vector<16x1xf32>
    %215 = arith.addf %211, %214 : vector<16x1xf32>
    %216 = math.rsqrt %215 : vector<16x1xf32>
    %217 = vector.broadcast %216 : vector<16x1xf32> to vector<16x256xf32>
    %218 = arith.mulf %213, %217 : vector<16x256xf32>
    %c0_79 = arith.constant 0 : index
    %c0_80 = arith.constant 0 : index
    %219 = vector.load %arg13[%c0_79, %c0_80] : memref<1x256xf32, #tpu.memory_space<vmem>>, vector<1x256xf32>
    %220 = vector.broadcast %219 : vector<1x256xf32> to vector<16x256xf32>
    %221 = arith.mulf %218, %220 : vector<16x256xf32>
    %c0_81 = arith.constant 0 : index
    %c0_82 = arith.constant 0 : index
    %222 = vector.load %arg14[%c0_81, %c0_82] : memref<1x256xf32, #tpu.memory_space<vmem>>, vector<1x256xf32>
    %223 = vector.broadcast %222 : vector<1x256xf32> to vector<16x256xf32>
    %224 = arith.addf %221, %223 : vector<16x256xf32>
    %cst_83 = arith.constant 0.000000e+00 : f32
    %225 = vector.broadcast %cst_83 : f32 to vector<8x256xf32>
    %226 = vector.extract_strided_slice %224 {offsets = [0, 0], sizes = [8, 256], strides = [1, 1]} : vector<16x256xf32> to vector<8x256xf32>
    %227 = arith.addf %225, %226 : vector<8x256xf32>
    %228 = vector.extract_strided_slice %224 {offsets = [8, 0], sizes = [8, 256], strides = [1, 1]} : vector<16x256xf32> to vector<8x256xf32>
    %229 = arith.addf %227, %228 : vector<8x256xf32>
    %cst_84 = arith.constant 5.000000e-01 : f32
    %230 = vector.broadcast %cst_84 : f32 to vector<8x256xf32>
    %231 = arith.mulf %229, %230 : vector<8x256xf32>
    %cst_85 = arith.constant 0.000000e+00 : f32
    %232 = vector.broadcast %cst_85 : f32 to vector<8x256xf32>
    %233 = arith.maximumf %231, %232 : vector<8x256xf32>
    %c0_86 = arith.constant 0 : index
    %c0_87 = arith.constant 0 : index
    %234 = vector.load %arg15[%c0_86, %c0_87] : memref<8x256xf32, #tpu.memory_space<vmem>>, vector<8x256xf32>
    tpu.vector_store %arg15[%c0_86, %c0_87], %233 {strides = array<i32>} : memref<8x256xf32, #tpu.memory_space<vmem>>, vector<8x256xf32>,
    return
  }
}

</mosaic_0001>

<llo_original>
// kernel: tpu_custom_call.1
$region0: #{tpu_custom_call.1}
  #allocation0 [shape = 'u32[]', space=smem, size = 0x4, offset = 0x4, fixed_abs, tag = 'smem constant byte address 0x4 - core index']
  #allocation1 [shape = 'u32[72,128]{1,0:T(1,128)}', space=vmem, size = 0x9000, scoped, tag = 'internal scratch']
  %s0 = inlined_call_operand.vmem [shape: f32[16,1], index: 0, kind: input, shape index: {}]
  %s1 = inlined_call_operand.vmem [shape: f32[1,256], index: 1, kind: input, shape index: {}]
  %s2 = inlined_call_operand.vmem [shape: f32[1,256], index: 2, kind: input, shape index: {}]
  %s3 = inlined_call_operand.hbm [shape: bf16[768,256], index: 3, kind: input, shape index: {}]
  %s4 = inlined_call_operand.vmem [shape: f32[1,768], index: 4, kind: input, shape index: {}]
  %s5 = inlined_call_operand.hbm [shape: bf16[256,256], index: 5, kind: input, shape index: {}]
  %s6 = inlined_call_operand.hbm [shape: f32[1,256], index: 6, kind: input, shape index: {}]
  %s7 = inlined_call_operand.hbm [shape: f32[1,256], index: 7, kind: input, shape index: {}]
  %s8 = inlined_call_operand.hbm [shape: f32[1,256], index: 8, kind: input, shape index: {}]
  %s9 = inlined_call_operand.hbm [shape: bf16[2048,256], index: 9, kind: input, shape index: {}]
  %s10 = inlined_call_operand.vmem [shape: f32[1,2048], index: 10, kind: input, shape index: {}]
  %s11 = inlined_call_operand.hbm [shape: bf16[256,2048], index: 11, kind: input, shape index: {}]
  %s12 = inlined_call_operand.vmem [shape: f32[1,256], index: 12, kind: input, shape index: {}]
  %s13 = inlined_call_operand.hbm [shape: f32[1,256], index: 13, kind: input, shape index: {}]
  %s14 = inlined_call_operand.vmem [shape: f32[1,256], index: 14, kind: input, shape index: {}]
  %s15 = inlined_call_operand.hbm [shape: f32[8,256], index: 15, kind: output, shape index: {}]
  %s16 = sld [smem:[#allocation0]]
  $region102: #{tpu_custom_call.1} parent=0
    _
  %s18 = ssub.s32 1, %s16
  %s19 = scalar_select 0, %s18, %s16
  $region1: #{tpu_custom_call.1} parent=0
    #allocation2 [shape = 'u8[393216]{0}', space=vmem, size = 0x60000, scoped, tag = 'input window, operand 3, single buffered']
    #allocation3 [shape = 's32[1]{0}', space=sflag, size = 0x4, scoped, tag = 'scoped memory for tpu_custom_call.1']
    #allocation4 [shape = 's32[1]{0}', space=sflag, size = 0x4, scoped, tag = 'scoped memory for tpu_custom_call.1']
    #allocation5 [shape = 'u8[131072]{0}', space=vmem, size = 0x20000, scoped, tag = 'input window, operand 5, single buffered']
    #allocation6 [shape = 's32[1]{0}', space=sflag, size = 0x4, scoped, tag = 'scoped memory for tpu_custom_call.1']
    #allocation7 [shape = 'u8[1024]{0}', space=vmem, size = 0x400, scoped, tag = 'input window, operand 6, single buffered']
    #allocation8 [shape = 'u8[1024]{0}', space=vmem, size = 0x400, scoped, tag = 'input window, operand 7, single buffered']
    #allocation9 [shape = 's32[1]{0}', space=sflag, size = 0x4, scoped, tag = 'scoped memory for tpu_custom_call.1']
    #allocation10 [shape = 'u8[1024]{0}', space=vmem, size = 0x400, scoped, tag = 'input window, operand 8, single buffered']
    #allocation11 [shape = 'u8[1048576]{0}', space=vmem, size = 0x100000, scoped, tag = 'input window, operand 9, single buffered']
    #allocation12 [shape = 's32[1]{0}', space=sflag, size = 0x4, scoped, tag = 'scoped memory for tpu_custom_call.1']
    #allocation13 [shape = 'u8[1048576]{0}', space=vmem, size = 0x100000, scoped, tag = 'input window, operand 11, single buffered']
    #allocation14 [shape = 'u8[1024]{0}', space=vmem, size = 0x400, scoped, tag = 'input window, operand 13, single buffered']
    #allocation15 [shape = 's32[1]{0}', space=sflag, size = 0x4, scoped, tag = 'scoped memory for tpu_custom_call.1']
    #allocation16 [shape = 'u8[8192]{0}', space=vmem, size = 0x2000, scoped, tag = 'output window, operand 0, single buffered']
    %20 = vsyncpa [#allocation3], 0
    %21 = vsyncpa [#allocation6], 0
    %22 = vsyncpa [#allocation9], 0
    %23 = vsyncpa [#allocation12], 0
    %24 = vsyncpa [#allocation15], 0
    %25 = vsyncpa [#allocation4], 0
    // Predicated region
    $region2: #{tpu_custom_call.1} parent=1 // pred_check
      _
    $region3: #{tpu_custom_call.1} parent=1 // pred_check_branch
      %27 = sbr.rel (0) target = $region5
    $region4: #{tpu_custom_call.1} parent=1 // pred_region
      _
    $region5: #{tpu_custom_call.1} parent=1 // pred_fallthru
      _
    // Predicated region
    $region6: #{tpu_custom_call.1} parent=1 // pred_check
      _
    $region7: #{tpu_custom_call.1} parent=1 // pred_check_branch
      %29 = sbr.rel (0) target = $region9
    $region8: #{tpu_custom_call.1} parent=1 // pred_region
      _
    $region9: #{tpu_custom_call.1} parent=1 // pred_fallthru
      _
    // Predicated region
    $region10: #{tpu_custom_call.1} parent=1 // pred_check
      _
    $region11: #{tpu_custom_call.1} parent=1 // pred_check_branch
      %31 = sbr.rel (0) target = $region13
    $region12: #{tpu_custom_call.1} parent=1 // pred_region
      _
    $region13: #{tpu_custom_call.1} parent=1 // pred_fallthru
      _
    // Predicated region
    $region14: #{tpu_custom_call.1} parent=1 // pred_check
      _
    $region15: #{tpu_custom_call.1} parent=1 // pred_check_branch
      %33 = sbr.rel (0) target = $region17
    $region16: #{tpu_custom_call.1} parent=1 // pred_region
      %35 = vsyncadd [#allocation3], 0
      %s36 = sshll.u32 %s3, 4
      %s37 = int_to_ptr.hbm [resolvable:$true] %s36
      %s38 = sshll.u32 [#allocation2], 4
      %s39 = int_to_ptr.vmem [resolvable:$true] %s38
      %44 = dma.hbm_to_vmem [thread:$0]  %s37, 12288, %s39, [#allocation3], 128, 128, 8
    $region17: #{tpu_custom_call.1} parent=1 // pred_fallthru
      _
    // Predicated region
    $region18: #{tpu_custom_call.1} parent=1 // pred_check
      _
    $region19: #{tpu_custom_call.1} parent=1 // pred_check_branch
      %46 = sbr.rel (0) target = $region21
    $region20: #{tpu_custom_call.1} parent=1 // pred_region
      _
    $region21: #{tpu_custom_call.1} parent=1 // pred_fallthru
      _
    // Predicated region
    $region22: #{tpu_custom_call.1} parent=1 // pred_check
      _
    $region23: #{tpu_custom_call.1} parent=1 // pred_check_branch
      %48 = sbr.rel (0) target = $region25
    $region24: #{tpu_custom_call.1} parent=1 // pred_region
      %50 = vsyncadd [#allocation6], 0
      %s51 = sshll.u32 %s5, 4
      %s52 = int_to_ptr.hbm [resolvable:$true] %s51
      %s53 = sshll.u32 [#allocation5], 4
      %s54 = int_to_ptr.vmem [resolvable:$true] %s53
      %59 = dma.hbm_to_vmem [thread:$0]  %s52, 4096, %s54, [#allocation6], 128, 128, 8
    $region25: #{tpu_custom_call.1} parent=1 // pred_fallthru
      _
    // Predicated region
    $region26: #{tpu_custom_call.1} parent=1 // pred_check
      _
    $region27: #{tpu_custom_call.1} parent=1 // pred_check_branch
      %61 = sbr.rel (0) target = $region29
    $region28: #{tpu_custom_call.1} parent=1 // pred_region
      %63 = vsyncadd [#allocation6], 0
      %s65 = sshll.u32 %s6, 4
      %s66 = int_to_ptr.hbm [resolvable:$true] %s65
      %s67 = sshll.u32 [#allocation7], 4
      %s68 = int_to_ptr.vmem [resolvable:$true] %s67
      %70 = dma.hbm_to_vmem [thread:$0]  %s66, 32, %s68, [#allocation6]
    $region29: #{tpu_custom_call.1} parent=1 // pred_fallthru
      _
    // Predicated region
    $region30: #{tpu_custom_call.1} parent=1 // pred_check
      _
    $region31: #{tpu_custom_call.1} parent=1 // pred_check_branch
      %72 = sbr.rel (0) target = $region33
    $region32: #{tpu_custom_call.1} parent=1 // pred_region
      %74 = vsyncadd [#allocation9], 0
      %s76 = sshll.u32 %s7, 4
      %s77 = int_to_ptr.hbm [resolvable:$true] %s76
      %s78 = sshll.u32 [#allocation8], 4
      %s79 = int_to_ptr.vmem [resolvable:$true] %s78
      %81 = dma.hbm_to_vmem [thread:$0]  %s77, 32, %s79, [#allocation9]
    $region33: #{tpu_custom_call.1} parent=1 // pred_fallthru
      _
    // Predicated region
    $region34: #{tpu_custom_call.1} parent=1 // pred_check
      _
    $region35: #{tpu_custom_call.1} parent=1 // pred_check_branch
      %83 = sbr.rel (0) target = $region37
    $region36: #{tpu_custom_call.1} parent=1 // pred_region
      %85 = vsyncadd [#allocation9], 0
      %s87 = sshll.u32 %s8, 4
      %s88 = int_to_ptr.hbm [resolvable:$true] %s87
      %s89 = sshll.u32 [#allocation10], 4
      %s90 = int_to_ptr.vmem [resolvable:$true] %s89
      %92 = dma.hbm_to_vmem [thread:$0]  %s88, 32, %s90, [#allocation9]
    $region37: #{tpu_custom_call.1} parent=1 // pred_fallthru
      _
    // Predicated region
    $region38: #{tpu_custom_call.1} parent=1 // pred_check
      _
    $region39: #{tpu_custom_call.1} parent=1 // pred_check_branch
      %94 = sbr.rel (0) target = $region41
    $region40: #{tpu_custom_call.1} parent=1 // pred_region
      %96 = vsyncadd [#allocation12], 0
      %s97 = sshll.u32 %s9, 4
      %s98 = int_to_ptr.hbm [resolvable:$true] %s97
      %s99 = sshll.u32 [#allocation11], 4
      %s100 = int_to_ptr.vmem [resolvable:$true] %s99
      %105 = dma.hbm_to_vmem [thread:$0]  %s98, 32768, %s100, [#allocation12], 128, 128, 8
    $region41: #{tpu_custom_call.1} parent=1 // pred_fallthru
      _
    // Predicated region
    $region42: #{tpu_custom_call.1} parent=1 // pred_check
      _
    $region43: #{tpu_custom_call.1} parent=1 // pred_check_branch
      %107 = sbr.rel (0) target = $region45
    $region44: #{tpu_custom_call.1} parent=1 // pred_region
      _
    $region45: #{tpu_custom_call.1} parent=1 // pred_fallthru
      _
    // Predicated region
    $region46: #{tpu_custom_call.1} parent=1 // pred_check
      _
    $region47: #{tpu_custom_call.1} parent=1 // pred_check_branch
      %109 = sbr.rel (0) target = $region49
    $region48: #{tpu_custom_call.1} parent=1 // pred_region
      %111 = vsyncadd [#allocation12], 0
      %s112 = sshll.u32 %s11, 4
      %s113 = int_to_ptr.hbm [resolvable:$true] %s112
      %s114 = sshll.u32 [#allocation13], 4
      %s115 = int_to_ptr.vmem [resolvable:$true] %s114
      %120 = dma.hbm_to_vmem [thread:$0]  %s113, 32768, %s115, [#allocation12], 1024, 1024, 64
    $region49: #{tpu_custom_call.1} parent=1 // pred_fallthru
      _
    // Predicated region
    $region50: #{tpu_custom_call.1} parent=1 // pred_check
      _
    $region51: #{tpu_custom_call.1} parent=1 // pred_check_branch
      %122 = sbr.rel (0) target = $region53
    $region52: #{tpu_custom_call.1} parent=1 // pred_region
      _
    $region53: #{tpu_custom_call.1} parent=1 // pred_fallthru
      _
    // Predicated region
    $region54: #{tpu_custom_call.1} parent=1 // pred_check
      _
    $region55: #{tpu_custom_call.1} parent=1 // pred_check_branch
      %124 = sbr.rel (0) target = $region57
    $region56: #{tpu_custom_call.1} parent=1 // pred_region
      %126 = vsyncadd [#allocation15], 0
      %s128 = sshll.u32 %s13, 4
      %s129 = int_to_ptr.hbm [resolvable:$true] %s128
      %s130 = sshll.u32 [#allocation14], 4
      %s131 = int_to_ptr.vmem [resolvable:$true] %s130
      %133 = dma.hbm_to_vmem [thread:$0]  %s129, 32, %s131, [#allocation15]
    $region57: #{tpu_custom_call.1} parent=1 // pred_fallthru
      _
    // Predicated region
    $region58: #{tpu_custom_call.1} parent=1 // pred_check
      _
    $region59: #{tpu_custom_call.1} parent=1 // pred_check_branch
      %135 = sbr.rel (0) target = $region61
    $region60: #{tpu_custom_call.1} parent=1 // pred_region
      _
    $region61: #{tpu_custom_call.1} parent=1 // pred_fallthru
      _
    // Predicated region
    $region62: #{tpu_custom_call.1} parent=1 // pred_check
      _
    $region63: #{tpu_custom_call.1} parent=1 // pred_check_branch
      %137 = sbr.rel (0) target = $region65
    $region64: #{tpu_custom_call.1} parent=1 // pred_region
      %139 = dma.done [#allocation3], 12288
    $region65: #{tpu_custom_call.1} parent=1 // pred_fallthru
      _
    // Predicated region
    $region66: #{tpu_custom_call.1} parent=1 // pred_check
      _
    $region67: #{tpu_custom_call.1} parent=1 // pred_check_branch
      %141 = sbr.rel (0) target = $region69
    $region68: #{tpu_custom_call.1} parent=1 // pred_region
      %143 = dma.done [#allocation6], 4096
    $region69: #{tpu_custom_call.1} parent=1 // pred_fallthru
      _
    // Predicated region
    $region70: #{tpu_custom_call.1} parent=1 // pred_check
      _
    $region71: #{tpu_custom_call.1} parent=1 // pred_check_branch
      %145 = sbr.rel (0) target = $region73
    $region72: #{tpu_custom_call.1} parent=1 // pred_region
      %147 = dma.done [#allocation6], 32
    $region73: #{tpu_custom_call.1} parent=1 // pred_fallthru
      _
    // Predicated region
    $region74: #{tpu_custom_call.1} parent=1 // pred_check
      _
    $region75: #{tpu_custom_call.1} parent=1 // pred_check_branch
      %149 = sbr.rel (0) target = $region77
    $region76: #{tpu_custom_call.1} parent=1 // pred_region
      %151 = dma.done [#allocation9], 32
    $region77: #{tpu_custom_call.1} parent=1 // pred_fallthru
      _
    // Predicated region
    $region78: #{tpu_custom_call.1} parent=1 // pred_check
      _
    $region79: #{tpu_custom_call.1} parent=1 // pred_check_branch
      %153 = sbr.rel (0) target = $region81
    $region80: #{tpu_custom_call.1} parent=1 // pred_region
      %155 = dma.done [#allocation9], 32
    $region81: #{tpu_custom_call.1} parent=1 // pred_fallthru
      _
    // Predicated region
    $region82: #{tpu_custom_call.1} parent=1 // pred_check
      _
    $region83: #{tpu_custom_call.1} parent=1 // pred_check_branch
      %157 = sbr.rel (0) target = $region85
    $region84: #{tpu_custom_call.1} parent=1 // pred_region
      %159 = dma.done [#allocation12], 32768
    $region85: #{tpu_custom_call.1} parent=1 // pred_fallthru
      _
    // Predicated region
    $region86: #{tpu_custom_call.1} parent=1 // pred_check
      _
    $region87: #{tpu_custom_call.1} parent=1 // pred_check_branch
      %161 = sbr.rel (0) target = $region89
    $region88: #{tpu_custom_call.1} parent=1 // pred_region
      %163 = dma.done [#allocation12], 32768
    $region89: #{tpu_custom_call.1} parent=1 // pred_fallthru
      _
    // Predicated region
    $region90: #{tpu_custom_call.1} parent=1 // pred_check
      _
    $region91: #{tpu_custom_call.1} parent=1 // pred_check_branch
      %165 = sbr.rel (0) target = $region93
    $region92: #{tpu_custom_call.1} parent=1 // pred_region
      %167 = dma.done [#allocation15], 32
    $region93: #{tpu_custom_call.1} parent=1 // pred_fallthru
      _
    %v168 = vld [vmem:[%s0] sm:$0xff]
    %v169 = vld [vmem:[%s0 + $0x8] sm:$0xff]
    %v170 = vld [vmem:[%s1] sm:$0x3]
    %172 = vset.pattern.permute.xlu0 0
    %173 = vperm.xlu0 %172, %v168
    %v174 = vpop.permute.xlu0 %173
    %177 = vset.pattern.permute.xlu0 0
    %178 = vperm.xlu0 %177, %v169
    %v179 = vpop.permute.xlu0 %178
    %v182 = vperm.slane %v170, 0
    %v183 = vperm.slane %v170, 1
    %v186 = vmul.f32 %v174, %v182
    %v187 = vmul.f32 %v174, %v183
    %v188 = vmul.f32 %v179, %v182
    %v189 = vmul.f32 %v179, %v183
    %v190 = vld [vmem:[%s2] sm:$0x3]
    %v192 = vperm.slane %v190, 0
    %v193 = vperm.slane %v190, 1
    %v196 = vadd.f32 %v186, %v192
    %v197 = vadd.f32 %v187, %v193
    %v198 = vadd.f32 %v188, %v192
    %v199 = vadd.f32 %v189, %v193
    %v200 = vpack.c.bf16 %v198, %v196
    %v201 = vpack.c.bf16 %v199, %v197
    %v202 = vld [vmem:[#allocation2] sm:$0xff]
    %v203 = vld [vmem:[#allocation2 + $0x8] sm:$0xff]
    %v204 = vld [vmem:[#allocation2 + $0x10] sm:$0xff]
    %v205 = vld [vmem:[#allocation2 + $0x18] sm:$0xff]
    %v206 = vld [vmem:[#allocation2 + $0x20] sm:$0xff]
    %v207 = vld [vmem:[#allocation2 + $0x28] sm:$0xff]
    %v208 = vld [vmem:[#allocation2 + $0x30] sm:$0xff]
    %v209 = vld [vmem:[#allocation2 + $0x38] sm:$0xff]
    %v210 = vld [vmem:[#allocation2 + $0x40] sm:$0xff]
    %v211 = vld [vmem:[#allocation2 + $0x48] sm:$0xff]
    %v212 = vld [vmem:[#allocation2 + $0x50] sm:$0xff]
    %v213 = vld [vmem:[#allocation2 + $0x58] sm:$0xff]
    %v214 = vld [vmem:[#allocation2 + $0x60] sm:$0xff]
    %v215 = vld [vmem:[#allocation2 + $0x68] sm:$0xff]
    %v216 = vld [vmem:[#allocation2 + $0x70] sm:$0xff]
    %v217 = vld [vmem:[#allocation2 + $0x78] sm:$0xff]
    %v218 = vld [vmem:[#allocation2 + $0x80] sm:$0xff]
    %v219 = vld [vmem:[#allocation2 + $0x88] sm:$0xff]
    %v220 = vld [vmem:[#allocation2 + $0x90] sm:$0xff]
    %v221 = vld [vmem:[#allocation2 + $0x98] sm:$0xff]
    %v222 = vld [vmem:[#allocation2 + $0xa0] sm:$0xff]
    %v223 = vld [vmem:[#allocation2 + $0xa8] sm:$0xff]
    %v224 = vld [vmem:[#allocation2 + $0xb0] sm:$0xff]
    %v225 = vld [vmem:[#allocation2 + $0xb8] sm:$0xff]
    %v226 = vld [vmem:[#allocation2 + $0xc0] sm:$0xff]
    %v227 = vld [vmem:[#allocation2 + $0xc8] sm:$0xff]
    %v228 = vld [vmem:[#allocation2 + $0xd0] sm:$0xff]
    %v229 = vld [vmem:[#allocation2 + $0xd8] sm:$0xff]
    %v230 = vld [vmem:[#allocation2 + $0xe0] sm:$0xff]
    %v231 = vld [vmem:[#allocation2 + $0xe8] sm:$0xff]
    %v232 = vld [vmem:[#allocation2 + $0xf0] sm:$0xff]
    %v233 = vld [vmem:[#allocation2 + $0xf8] sm:$0xff]
    %v234 = vld [vmem:[#allocation2 + $0x100] sm:$0xff]
    %v235 = vld [vmem:[#allocation2 + $0x108] sm:$0xff]
    %v236 = vld [vmem:[#allocation2 + $0x110] sm:$0xff]
    %v237 = vld [vmem:[#allocation2 + $0x118] sm:$0xff]
    %v238 = vld [vmem:[#allocation2 + $0x120] sm:$0xff]
    %v239 = vld [vmem:[#allocation2 + $0x128] sm:$0xff]
    %v240 = vld [vmem:[#allocation2 + $0x130] sm:$0xff]
    %v241 = vld [vmem:[#allocation2 + $0x138] sm:$0xff]
    %v242 = vld [vmem:[#allocation2 + $0x140] sm:$0xff]
    %v243 = vld [vmem:[#allocation2 + $0x148] sm:$0xff]
    %v244 = vld [vmem:[#allocation2 + $0x150] sm:$0xff]
    %v245 = vld [vmem:[#allocation2 + $0x158] sm:$0xff]
    %v246 = vld [vmem:[#allocation2 + $0x160] sm:$0xff]
    %v247 = vld [vmem:[#allocation2 + $0x168] sm:$0xff]
    %v248 = vld [vmem:[#allocation2 + $0x170] sm:$0xff]
    %v249 = vld [vmem:[#allocation2 + $0x178] sm:$0xff]
    %v250 = vld [vmem:[#allocation2 + $0x180] sm:$0xff]
    %v251 = vld [vmem:[#allocation2 + $0x188] sm:$0xff]
    %v252 = vld [vmem:[#allocation2 + $0x190] sm:$0xff]
    %v253 = vld [vmem:[#allocation2 + $0x198] sm:$0xff]
    %v254 = vld [vmem:[#allocation2 + $0x1a0] sm:$0xff]
    %v255 = vld [vmem:[#allocation2 + $0x1a8] sm:$0xff]
    %v256 = vld [vmem:[#allocation2 + $0x1b0] sm:$0xff]
    %v257 = vld [vmem:[#allocation2 + $0x1b8] sm:$0xff]
    %v258 = vld [vmem:[#allocation2 + $0x1c0] sm:$0xff]
    %v259 = vld [vmem:[#allocation2 + $0x1c8] sm:$0xff]
    %v260 = vld [vmem:[#allocation2 + $0x1d0] sm:$0xff]
    %v261 = vld [vmem:[#allocation2 + $0x1d8] sm:$0xff]
    %v262 = vld [vmem:[#allocation2 + $0x1e0] sm:$0xff]
    %v263 = vld [vmem:[#allocation2 + $0x1e8] sm:$0xff]
    %v264 = vld [vmem:[#allocation2 + $0x1f0] sm:$0xff]
    %v265 = vld [vmem:[#allocation2 + $0x1f8] sm:$0xff]
    %v266 = vld [vmem:[#allocation2 + $0x200] sm:$0xff]
    %v267 = vld [vmem:[#allocation2 + $0x208] sm:$0xff]
    %v268 = vld [vmem:[#allocation2 + $0x210] sm:$0xff]
    %v269 = vld [vmem:[#allocation2 + $0x218] sm:$0xff]
    %v270 = vld [vmem:[#allocation2 + $0x220] sm:$0xff]
    %v271 = vld [vmem:[#allocation2 + $0x228] sm:$0xff]
    %v272 = vld [vmem:[#allocation2 + $0x230] sm:$0xff]
    %v273 = vld [vmem:[#allocation2 + $0x238] sm:$0xff]
    %v274 = vld [vmem:[#allocation2 + $0x240] sm:$0xff]
    %v275 = vld [vmem:[#allocation2 + $0x248] sm:$0xff]
    %v276 = vld [vmem:[#allocation2 + $0x250] sm:$0xff]
    %v277 = vld [vmem:[#allocation2 + $0x258] sm:$0xff]
    %v278 = vld [vmem:[#allocation2 + $0x260] sm:$0xff]
    %v279 = vld [vmem:[#allocation2 + $0x268] sm:$0xff]
    %v280 = vld [vmem:[#allocation2 + $0x270] sm:$0xff]
    %v281 = vld [vmem:[#allocation2 + $0x278] sm:$0xff]
    %v282 = vld [vmem:[#allocation2 + $0x280] sm:$0xff]
    %v283 = vld [vmem:[#allocation2 + $0x288] sm:$0xff]
    %v284 = vld [vmem:[#allocation2 + $0x290] sm:$0xff]
    %v285 = vld [vmem:[#allocation2 + $0x298] sm:$0xff]
    %v286 = vld [vmem:[#allocation2 + $0x2a0] sm:$0xff]
    %v287 = vld [vmem:[#allocation2 + $0x2a8] sm:$0xff]
    %v288 = vld [vmem:[#allocation2 + $0x2b0] sm:$0xff]
    %v289 = vld [vmem:[#allocation2 + $0x2b8] sm:$0xff]
    %v290 = vld [vmem:[#allocation2 + $0x2c0] sm:$0xff]
    %v291 = vld [vmem:[#allocation2 + $0x2c8] sm:$0xff]
    %v292 = vld [vmem:[#allocation2 + $0x2d0] sm:$0xff]
    %v293 = vld [vmem:[#allocation2 + $0x2d8] sm:$0xff]
    %v294 = vld [vmem:[#allocation2 + $0x2e0] sm:$0xff]
    %v295 = vld [vmem:[#allocation2 + $0x2e8] sm:$0xff]
    %v296 = vld [vmem:[#allocation2 + $0x2f0] sm:$0xff]
    %v297 = vld [vmem:[#allocation2 + $0x2f8] sm:$0xff]
    %v298 = vld [vmem:[%s4] sm:$0x3f]
    %v300 = vperm.slane %v298, 0
    %v301 = vperm.slane %v298, 1
    %v302 = vperm.slane %v298, 2
    %v303 = vperm.slane %v298, 3
    %v304 = vperm.slane %v298, 4
    %v305 = vperm.slane %v298, 5
    %v408 = vunpack.c.l.b16 %v202
    %v409 = vunpack.c.h.b16 %v202
    %v410 = vunpack.c.l.b16 %v203
    %v411 = vunpack.c.h.b16 %v203
    %v412 = vunpack.c.l.b16 %v204
    %v413 = vunpack.c.h.b16 %v204
    %v414 = vunpack.c.l.b16 %v205
    %v415 = vunpack.c.h.b16 %v205
    %v416 = vunpack.c.l.b16 %v206
    %v417 = vunpack.c.h.b16 %v206
    %v418 = vunpack.c.l.b16 %v207
    %v419 = vunpack.c.h.b16 %v207
    %v420 = vunpack.c.l.b16 %v208
    %v421 = vunpack.c.h.b16 %v208
    %v422 = vunpack.c.l.b16 %v209
    %v423 = vunpack.c.h.b16 %v209
    %v424 = vunpack.c.l.b16 %v210
    %v425 = vunpack.c.h.b16 %v210
    %v426 = vunpack.c.l.b16 %v211
    %v427 = vunpack.c.h.b16 %v211
    %v428 = vunpack.c.l.b16 %v212
    %v429 = vunpack.c.h.b16 %v212
    %v430 = vunpack.c.l.b16 %v213
    %v431 = vunpack.c.h.b16 %v213
    %v432 = vunpack.c.l.b16 %v214
    %v433 = vunpack.c.h.b16 %v214
    %v434 = vunpack.c.l.b16 %v215
    %v435 = vunpack.c.h.b16 %v215
    %v436 = vunpack.c.l.b16 %v216
    %v437 = vunpack.c.h.b16 %v216
    %v438 = vunpack.c.l.b16 %v217
    %v439 = vunpack.c.h.b16 %v217
    %v440 = vunpack.c.l.b16 %v218
    %v441 = vunpack.c.h.b16 %v218
    %v442 = vunpack.c.l.b16 %v219
    %v443 = vunpack.c.h.b16 %v219
    %v444 = vunpack.c.l.b16 %v220
    %v445 = vunpack.c.h.b16 %v220
    %v446 = vunpack.c.l.b16 %v221
    %v447 = vunpack.c.h.b16 %v221
    %v448 = vunpack.c.l.b16 %v222
    %v449 = vunpack.c.h.b16 %v222
    %v450 = vunpack.c.l.b16 %v223
    %v451 = vunpack.c.h.b16 %v223
    %v452 = vunpack.c.l.b16 %v224
    %v453 = vunpack.c.h.b16 %v224
    %v454 = vunpack.c.l.b16 %v225
    %v455 = vunpack.c.h.b16 %v225
    %v456 = vunpack.c.l.b16 %v226
    %v457 = vunpack.c.h.b16 %v226
    %v458 = vunpack.c.l.b16 %v227
    %v459 = vunpack.c.h.b16 %v227
    %v460 = vunpack.c.l.b16 %v228
    %v461 = vunpack.c.h.b16 %v228
    %v462 = vunpack.c.l.b16 %v229
    %v463 = vunpack.c.h.b16 %v229
    %v464 = vunpack.c.l.b16 %v230
    %v465 = vunpack.c.h.b16 %v230
    %v466 = vunpack.c.l.b16 %v231
    %v467 = vunpack.c.h.b16 %v231
    %v468 = vunpack.c.l.b16 %v232
    %v469 = vunpack.c.h.b16 %v232
    %v470 = vunpack.c.l.b16 %v233
    %v471 = vunpack.c.h.b16 %v233
    %v472 = vunpack.c.l.b16 %v234
    %v473 = vunpack.c.h.b16 %v234
    %v474 = vunpack.c.l.b16 %v235
    %v475 = vunpack.c.h.b16 %v235
    %v476 = vunpack.c.l.b16 %v236
    %v477 = vunpack.c.h.b16 %v236
    %v478 = vunpack.c.l.b16 %v237
    %v479 = vunpack.c.h.b16 %v237
    %v480 = vunpack.c.l.b16 %v238
    %v481 = vunpack.c.h.b16 %v238
    %v482 = vunpack.c.l.b16 %v239
    %v483 = vunpack.c.h.b16 %v239
    %v484 = vunpack.c.l.b16 %v240
    %v485 = vunpack.c.h.b16 %v240
    %v486 = vunpack.c.l.b16 %v241
    %v487 = vunpack.c.h.b16 %v241
    %v488 = vunpack.c.l.b16 %v242
    %v489 = vunpack.c.h.b16 %v242
    %v490 = vunpack.c.l.b16 %v243
    %v491 = vunpack.c.h.b16 %v243
    %v492 = vunpack.c.l.b16 %v244
    %v493 = vunpack.c.h.b16 %v244
    %v494 = vunpack.c.l.b16 %v245
    %v495 = vunpack.c.h.b16 %v245
    %v496 = vunpack.c.l.b16 %v246
    %v497 = vunpack.c.h.b16 %v246
    %v498 = vunpack.c.l.b16 %v247
    %v499 = vunpack.c.h.b16 %v247
    %v500 = vunpack.c.l.b16 %v248
    %v501 = vunpack.c.h.b16 %v248
    %v502 = vunpack.c.l.b16 %v249
    %v503 = vunpack.c.h.b16 %v249
    %v504 = vunpack.c.l.b16 %v250
    %v505 = vunpack.c.h.b16 %v250
    %v506 = vunpack.c.l.b16 %v251
    %v507 = vunpack.c.h.b16 %v251
    %v508 = vunpack.c.l.b16 %v252
    %v509 = vunpack.c.h.b16 %v252
    %v510 = vunpack.c.l.b16 %v253
    %v511 = vunpack.c.h.b16 %v253
    %v512 = vunpack.c.l.b16 %v254
    %v513 = vunpack.c.h.b16 %v254
    %v514 = vunpack.c.l.b16 %v255
    %v515 = vunpack.c.h.b16 %v255
    %v516 = vunpack.c.l.b16 %v256
    %v517 = vunpack.c.h.b16 %v256
    %v518 = vunpack.c.l.b16 %v257
    %v519 = vunpack.c.h.b16 %v257
    %v520 = vunpack.c.l.b16 %v258
    %v521 = vunpack.c.h.b16 %v258
    %v522 = vunpack.c.l.b16 %v259
    %v523 = vunpack.c.h.b16 %v259
    %v524 = vunpack.c.l.b16 %v260
    %v525 = vunpack.c.h.b16 %v260
    %v526 = vunpack.c.l.b16 %v261
    %v527 = vunpack.c.h.b16 %v261
    %v528 = vunpack.c.l.b16 %v262
    %v529 = vunpack.c.h.b16 %v262
    %v530 = vunpack.c.l.b16 %v263
    %v531 = vunpack.c.h.b16 %v263
    %v532 = vunpack.c.l.b16 %v264
    %v533 = vunpack.c.h.b16 %v264
    %v534 = vunpack.c.l.b16 %v265
    %v535 = vunpack.c.h.b16 %v265
    %v536 = vunpack.c.l.b16 %v266
    %v537 = vunpack.c.h.b16 %v266
    %v538 = vunpack.c.l.b16 %v267
    %v539 = vunpack.c.h.b16 %v267
    %v540 = vunpack.c.l.b16 %v268
    %v541 = vunpack.c.h.b16 %v268
    %v542 = vunpack.c.l.b16 %v269
    %v543 = vunpack.c.h.b16 %v269
    %v544 = vunpack.c.l.b16 %v270
    %v545 = vunpack.c.h.b16 %v270
    %v546 = vunpack.c.l.b16 %v271
    %v547 = vunpack.c.h.b16 %v271
    %v548 = vunpack.c.l.b16 %v272
    %v549 = vunpack.c.h.b16 %v272
    %v550 = vunpack.c.l.b16 %v273
    %v551 = vunpack.c.h.b16 %v273
    %v552 = vunpack.c.l.b16 %v274
    %v553 = vunpack.c.h.b16 %v274
    %v554 = vunpack.c.l.b16 %v275
    %v555 = vunpack.c.h.b16 %v275
    %v556 = vunpack.c.l.b16 %v276
    %v557 = vunpack.c.h.b16 %v276
    %v558 = vunpack.c.l.b16 %v277
    %v559 = vunpack.c.h.b16 %v277
    %v560 = vunpack.c.l.b16 %v278
    %v561 = vunpack.c.h.b16 %v278
    %v562 = vunpack.c.l.b16 %v279
    %v563 = vunpack.c.h.b16 %v279
    %v564 = vunpack.c.l.b16 %v280
    %v565 = vunpack.c.h.b16 %v280
    %v566 = vunpack.c.l.b16 %v281
    %v567 = vunpack.c.h.b16 %v281
    %v568 = vunpack.c.l.b16 %v282
    %v569 = vunpack.c.h.b16 %v282
    %v570 = vunpack.c.l.b16 %v283
    %v571 = vunpack.c.h.b16 %v283
    %v572 = vunpack.c.l.b16 %v284
    %v573 = vunpack.c.h.b16 %v284
    %v574 = vunpack.c.l.b16 %v285
    %v575 = vunpack.c.h.b16 %v285
    %v576 = vunpack.c.l.b16 %v286
    %v577 = vunpack.c.h.b16 %v286
    %v578 = vunpack.c.l.b16 %v287
    %v579 = vunpack.c.h.b16 %v287
    %v580 = vunpack.c.l.b16 %v288
    %v581 = vunpack.c.h.b16 %v288
    %v582 = vunpack.c.l.b16 %v289
    %v583 = vunpack.c.h.b16 %v289
    %v584 = vunpack.c.l.b16 %v290
    %v585 = vunpack.c.h.b16 %v290
    %v586 = vunpack.c.l.b16 %v291
    %v587 = vunpack.c.h.b16 %v291
    %v588 = vunpack.c.l.b16 %v292
    %v589 = vunpack.c.h.b16 %v292
    %v590 = vunpack.c.l.b16 %v293
    %v591 = vunpack.c.h.b16 %v293
    %v592 = vunpack.c.l.b16 %v294
    %v593 = vunpack.c.h.b16 %v294
    %v594 = vunpack.c.l.b16 %v295
    %v595 = vunpack.c.h.b16 %v295
    %v596 = vunpack.c.l.b16 %v296
    %v597 = vunpack.c.h.b16 %v296
    %v598 = vunpack.c.l.b16 %v297
    %v599 = vunpack.c.h.b16 %v297
    %v600 = vpack.c.b16 %v410, %v408
    %v601 = vpack.c.b16 %v411, %v409
    %v602 = vpack.c.b16 %v414, %v412
    %v603 = vpack.c.b16 %v415, %v413
    %v604 = vpack.c.b16 %v418, %v416
    %v605 = vpack.c.b16 %v419, %v417
    %v606 = vpack.c.b16 %v422, %v420
    %v607 = vpack.c.b16 %v423, %v421
    %v608 = vpack.c.b16 %v426, %v424
    %v609 = vpack.c.b16 %v427, %v425
    %v610 = vpack.c.b16 %v430, %v428
    %v611 = vpack.c.b16 %v431, %v429
    %v612 = vpack.c.b16 %v434, %v432
    %v613 = vpack.c.b16 %v435, %v433
    %v614 = vpack.c.b16 %v438, %v436
    %v615 = vpack.c.b16 %v439, %v437
    %v616 = vpack.c.b16 %v442, %v440
    %v617 = vpack.c.b16 %v443, %v441
    %v618 = vpack.c.b16 %v446, %v444
    %v619 = vpack.c.b16 %v447, %v445
    %v620 = vpack.c.b16 %v450, %v448
    %v621 = vpack.c.b16 %v451, %v449
    %v622 = vpack.c.b16 %v454, %v452
    %v623 = vpack.c.b16 %v455, %v453
    %v624 = vpack.c.b16 %v458, %v456
    %v625 = vpack.c.b16 %v459, %v457
    %v626 = vpack.c.b16 %v462, %v460
    %v627 = vpack.c.b16 %v463, %v461
    %v628 = vpack.c.b16 %v466, %v464
    %v629 = vpack.c.b16 %v467, %v465
    %v630 = vpack.c.b16 %v470, %v468
    %v631 = vpack.c.b16 %v471, %v469
    %v632 = vpack.c.b16 %v474, %v472
    %v633 = vpack.c.b16 %v475, %v473
    %v634 = vpack.c.b16 %v478, %v476
    %v635 = vpack.c.b16 %v479, %v477
    %v636 = vpack.c.b16 %v482, %v480
    %v637 = vpack.c.b16 %v483, %v481
    %v638 = vpack.c.b16 %v486, %v484
    %v639 = vpack.c.b16 %v487, %v485
    %v640 = vpack.c.b16 %v490, %v488
    %v641 = vpack.c.b16 %v491, %v489
    %v642 = vpack.c.b16 %v494, %v492
    %v643 = vpack.c.b16 %v495, %v493
    %v644 = vpack.c.b16 %v498, %v496
    %v645 = vpack.c.b16 %v499, %v497
    %v646 = vpack.c.b16 %v502, %v500
    %v647 = vpack.c.b16 %v503, %v501
    %v648 = vpack.c.b16 %v506, %v504
    %v649 = vpack.c.b16 %v507, %v505
    %v650 = vpack.c.b16 %v510, %v508
    %v651 = vpack.c.b16 %v511, %v509
    %v652 = vpack.c.b16 %v514, %v512
    %v653 = vpack.c.b16 %v515, %v513
    %v654 = vpack.c.b16 %v518, %v516
    %v655 = vpack.c.b16 %v519, %v517
    %v656 = vpack.c.b16 %v522, %v520
    %v657 = vpack.c.b16 %v523, %v521
    %v658 = vpack.c.b16 %v526, %v524
    %v659 = vpack.c.b16 %v527, %v525
    %v660 = vpack.c.b16 %v530, %v528
    %v661 = vpack.c.b16 %v531, %v529
    %v662 = vpack.c.b16 %v534, %v532
    %v663 = vpack.c.b16 %v535, %v533
    %v664 = vpack.c.b16 %v538, %v536
    %v665 = vpack.c.b16 %v539, %v537
    %v666 = vpack.c.b16 %v542, %v540
    %v667 = vpack.c.b16 %v543, %v541
    %v668 = vpack.c.b16 %v546, %v544
    %v669 = vpack.c.b16 %v547, %v545
    %v670 = vpack.c.b16 %v550, %v548
    %v671 = vpack.c.b16 %v551, %v549
    %v672 = vpack.c.b16 %v554, %v552
    %v673 = vpack.c.b16 %v555, %v553
    %v674 = vpack.c.b16 %v558, %v556
    %v675 = vpack.c.b16 %v559, %v557
    %v676 = vpack.c.b16 %v562, %v560
    %v677 = vpack.c.b16 %v563, %v561
    %v678 = vpack.c.b16 %v566, %v564
    %v679 = vpack.c.b16 %v567, %v565
    %v680 = vpack.c.b16 %v570, %v568
    %v681 = vpack.c.b16 %v571, %v569
    %v682 = vpack.c.b16 %v574, %v572
    %v683 = vpack.c.b16 %v575, %v573
    %v684 = vpack.c.b16 %v578, %v576
    %v685 = vpack.c.b16 %v579, %v577
    %v686 = vpack.c.b16 %v582, %v580
    %v687 = vpack.c.b16 %v583, %v581
    %v688 = vpack.c.b16 %v586, %v584
    %v689 = vpack.c.b16 %v587, %v585
    %v690 = vpack.c.b16 %v590, %v588
    %v691 = vpack.c.b16 %v591, %v589
    %v692 = vpack.c.b16 %v594, %v592
    %v693 = vpack.c.b16 %v595, %v593
    %v694 = vpack.c.b16 %v598, %v596
    %v695 = vpack.c.b16 %v599, %v597
    %792 = vmatpush.bf16.xpose.msra.mxu0 %v614
    %793 = vmatpush.bf16.xpose.msra.mxu0 %v612
    %794 = vmatpush.bf16.xpose.msra.mxu0 %v610
    %795 = vmatpush.bf16.xpose.msra.mxu0 %v608
    %796 = vmatpush.bf16.xpose.msra.mxu0 %v606
    %797 = vmatpush.bf16.xpose.msra.mxu0 %v604
    %798 = vmatpush.bf16.xpose.msra.mxu0 %v602
    %799 = vmatpush.bf16.xpose.msra.mxu0 %v600
    %800 = vmatmul.bf16.gmra.mxu0 %v200
    %v801 = vpop.f32.mrf.mxu0
    %v802 = vadd.f32 %v300, %v801
    %v803 = vpop.f32.mrf.mxu0
    %v804 = vadd.f32 %v300, %v803
    %805 = vdwg.mxu0
    %806 = vmatpush.bf16.xpose.msra.mxu0 %v615
    %807 = vmatpush.bf16.xpose.msra.mxu0 %v613
    %808 = vmatpush.bf16.xpose.msra.mxu0 %v611
    %809 = vmatpush.bf16.xpose.msra.mxu0 %v609
    %810 = vmatpush.bf16.xpose.msra.mxu0 %v607
    %811 = vmatpush.bf16.xpose.msra.mxu0 %v605
    %812 = vmatpush.bf16.xpose.msra.mxu0 %v603
    %813 = vmatpush.bf16.xpose.msra.mxu0 %v601
    %814 = vmatmul.bf16.gmra.mxu0 %v201
    %v815 = vpop.f32.mrf.mxu0
    %v816 = vadd.f32 %v802, %v815
    %v817 = vpop.f32.mrf.mxu0
    %v818 = vadd.f32 %v804, %v817
    %819 = vdwg.mxu0
    %820 = vmatpush.bf16.xpose.msra.mxu0 %v630
    %821 = vmatpush.bf16.xpose.msra.mxu0 %v628
    %822 = vmatpush.bf16.xpose.msra.mxu0 %v626
    %823 = vmatpush.bf16.xpose.msra.mxu0 %v624
    %824 = vmatpush.bf16.xpose.msra.mxu0 %v622
    %825 = vmatpush.bf16.xpose.msra.mxu0 %v620
    %826 = vmatpush.bf16.xpose.msra.mxu0 %v618
    %827 = vmatpush.bf16.xpose.msra.mxu0 %v616
    %828 = vmatmul.bf16.gmra.mxu0 %v200
    %v829 = vpop.f32.mrf.mxu0
    %v830 = vadd.f32 %v301, %v829
    %v831 = vpop.f32.mrf.mxu0
    %v832 = vadd.f32 %v301, %v831
    %833 = vdwg.mxu0
    %834 = vmatpush.bf16.xpose.msra.mxu0 %v631
    %835 = vmatpush.bf16.xpose.msra.mxu0 %v629
    %836 = vmatpush.bf16.xpose.msra.mxu0 %v627
    %837 = vmatpush.bf16.xpose.msra.mxu0 %v625
    %838 = vmatpush.bf16.xpose.msra.mxu0 %v623
    %839 = vmatpush.bf16.xpose.msra.mxu0 %v621
    %840 = vmatpush.bf16.xpose.msra.mxu0 %v619
    %841 = vmatpush.bf16.xpose.msra.mxu0 %v617
    %842 = vmatmul.bf16.gmra.mxu0 %v201
    %v843 = vpop.f32.mrf.mxu0
    %v844 = vadd.f32 %v830, %v843
    %v845 = vpop.f32.mrf.mxu0
    %v846 = vadd.f32 %v832, %v845
    %847 = vdwg.mxu0
    %848 = vmatpush.bf16.xpose.msra.mxu0 %v646
    %849 = vmatpush.bf16.xpose.msra.mxu0 %v644
    %850 = vmatpush.bf16.xpose.msra.mxu0 %v642
    %851 = vmatpush.bf16.xpose.msra.mxu0 %v640
    %852 = vmatpush.bf16.xpose.msra.mxu0 %v638
    %853 = vmatpush.bf16.xpose.msra.mxu0 %v636
    %854 = vmatpush.bf16.xpose.msra.mxu0 %v634
    %855 = vmatpush.bf16.xpose.msra.mxu0 %v632
    %856 = vmatmul.bf16.gmra.mxu0 %v200
    %v857 = vpop.f32.mrf.mxu0
    %v858 = vadd.f32 %v302, %v857
    %v859 = vpop.f32.mrf.mxu0
    %v860 = vadd.f32 %v302, %v859
    %861 = vdwg.mxu0
    %862 = vmatpush.bf16.xpose.msra.mxu0 %v647
    %863 = vmatpush.bf16.xpose.msra.mxu0 %v645
    %864 = vmatpush.bf16.xpose.msra.mxu0 %v643
    %865 = vmatpush.bf16.xpose.msra.mxu0 %v641
    %866 = vmatpush.bf16.xpose.msra.mxu0 %v639
    %867 = vmatpush.bf16.xpose.msra.mxu0 %v637
    %868 = vmatpush.bf16.xpose.msra.mxu0 %v635
    %869 = vmatpush.bf16.xpose.msra.mxu0 %v633
    %870 = vmatmul.bf16.gmra.mxu0 %v201
    %v871 = vpop.f32.mrf.mxu0
    %v872 = vadd.f32 %v858, %v871
    %v873 = vpop.f32.mrf.mxu0
    %v874 = vadd.f32 %v860, %v873
    %875 = vdwg.mxu0
    %876 = vmatpush.bf16.xpose.msra.mxu0 %v662
    %877 = vmatpush.bf16.xpose.msra.mxu0 %v660
    %878 = vmatpush.bf16.xpose.msra.mxu0 %v658
    %879 = vmatpush.bf16.xpose.msra.mxu0 %v656
    %880 = vmatpush.bf16.xpose.msra.mxu0 %v654
    %881 = vmatpush.bf16.xpose.msra.mxu0 %v652
    %882 = vmatpush.bf16.xpose.msra.mxu0 %v650
    %883 = vmatpush.bf16.xpose.msra.mxu0 %v648
    %884 = vmatmul.bf16.gmra.mxu0 %v200
    %v885 = vpop.f32.mrf.mxu0
    %v886 = vadd.f32 %v303, %v885
    %v887 = vpop.f32.mrf.mxu0
    %v888 = vadd.f32 %v303, %v887
    %889 = vdwg.mxu0
    %890 = vmatpush.bf16.xpose.msra.mxu0 %v663
    %891 = vmatpush.bf16.xpose.msra.mxu0 %v661
    %892 = vmatpush.bf16.xpose.msra.mxu0 %v659
    %893 = vmatpush.bf16.xpose.msra.mxu0 %v657
    %894 = vmatpush.bf16.xpose.msra.mxu0 %v655
    %895 = vmatpush.bf16.xpose.msra.mxu0 %v653
    %896 = vmatpush.bf16.xpose.msra.mxu0 %v651
    %897 = vmatpush.bf16.xpose.msra.mxu0 %v649
    %898 = vmatmul.bf16.gmra.mxu0 %v201
    %v899 = vpop.f32.mrf.mxu0
    %v900 = vadd.f32 %v886, %v899
    %v901 = vpop.f32.mrf.mxu0
    %v902 = vadd.f32 %v888, %v901
    %903 = vdwg.mxu0
    %904 = vmatpush.bf16.xpose.msra.mxu0 %v678
    %905 = vmatpush.bf16.xpose.msra.mxu0 %v676
    %906 = vmatpush.bf16.xpose.msra.mxu0 %v674
    %907 = vmatpush.bf16.xpose.msra.mxu0 %v672
    %908 = vmatpush.bf16.xpose.msra.mxu0 %v670
    %909 = vmatpush.bf16.xpose.msra.mxu0 %v668
    %910 = vmatpush.bf16.xpose.msra.mxu0 %v666
    %911 = vmatpush.bf16.xpose.msra.mxu0 %v664
    %912 = vmatmul.bf16.gmra.mxu0 %v200
    %v913 = vpop.f32.mrf.mxu0
    %v914 = vadd.f32 %v304, %v913
    %v915 = vpop.f32.mrf.mxu0
    %v916 = vadd.f32 %v304, %v915
    %917 = vdwg.mxu0
    %918 = vmatpush.bf16.xpose.msra.mxu0 %v679
    %919 = vmatpush.bf16.xpose.msra.mxu0 %v677
    %920 = vmatpush.bf16.xpose.msra.mxu0 %v675
    %921 = vmatpush.bf16.xpose.msra.mxu0 %v673
    %922 = vmatpush.bf16.xpose.msra.mxu0 %v671
    %923 = vmatpush.bf16.xpose.msra.mxu0 %v669
    %924 = vmatpush.bf16.xpose.msra.mxu0 %v667
    %925 = vmatpush.bf16.xpose.msra.mxu0 %v665
    %926 = vmatmul.bf16.gmra.mxu0 %v201
    %v927 = vpop.f32.mrf.mxu0
    %v928 = vadd.f32 %v914, %v927
    %v929 = vpop.f32.mrf.mxu0
    %v930 = vadd.f32 %v916, %v929
    %931 = vdwg.mxu0
    %932 = vmatpush.bf16.xpose.msra.mxu0 %v694
    %933 = vmatpush.bf16.xpose.msra.mxu0 %v692
    %934 = vmatpush.bf16.xpose.msra.mxu0 %v690
    %935 = vmatpush.bf16.xpose.msra.mxu0 %v688
    %936 = vmatpush.bf16.xpose.msra.mxu0 %v686
    %937 = vmatpush.bf16.xpose.msra.mxu0 %v684
    %938 = vmatpush.bf16.xpose.msra.mxu0 %v682
    %939 = vmatpush.bf16.xpose.msra.mxu0 %v680
    %940 = vmatmul.bf16.gmra.mxu0 %v200
    %v941 = vpop.f32.mrf.mxu0
    %v942 = vadd.f32 %v305, %v941
    %v943 = vpop.f32.mrf.mxu0
    %v944 = vadd.f32 %v305, %v943
    %945 = vdwg.mxu0
    %946 = vmatpush.bf16.xpose.msra.mxu0 %v695
    %947 = vmatpush.bf16.xpose.msra.mxu0 %v693
    %948 = vmatpush.bf16.xpose.msra.mxu0 %v691
    %949 = vmatpush.bf16.xpose.msra.mxu0 %v689
    %950 = vmatpush.bf16.xpose.msra.mxu0 %v687
    %951 = vmatpush.bf16.xpose.msra.mxu0 %v685
    %952 = vmatpush.bf16.xpose.msra.mxu0 %v683
    %953 = vmatpush.bf16.xpose.msra.mxu0 %v681
    %954 = vmatmul.bf16.gmra.mxu0 %v201
    %v955 = vpop.f32.mrf.mxu0
    %v956 = vadd.f32 %v942, %v955
    %v957 = vpop.f32.mrf.mxu0
    %v958 = vadd.f32 %v944, %v957
    %959 = vdwg.mxu0
    %vm960 = vcmask 523264
    %v962 = vsel %vm960, %v816, 0
    %v965 = vsel %vm960, %v872, 0
    %967 = vmatpush.xpose.msra.mxu0 0.0
    %968 = vmatpush.xpose.msra.mxu0 0.0
    %969 = vmatpush.xpose.msra.mxu0 0.0
    %970 = vmatpush.xpose.msra.mxu0 0.0
    %971 = vmatpush.xpose.msra.mxu0 0.0
    %972 = vmatpush.xpose.msra.mxu0 0.0
    %973 = vmatpush.xpose.msra.mxu0 0.0
    %974 = vmatpush.xpose.msra.mxu0 0.0
    %975 = vmatpush.xpose.msra.mxu0 0.0
    %976 = vmatpush.xpose.msra.mxu0 0.0
    %977 = vmatpush.xpose.msra.mxu0 0.0
    %978 = vmatpush.xpose.msra.mxu0 0.0
    %979 = vmatpush.xpose.msra.mxu0 0.0
    %980 = vmatpush.xpose.msra.mxu0 0.0
    %981 = vmatpush.xpose.msra.mxu0 0.0
    %982 = vmatpush.xpose.msra.mxu0 %v965
    %983 = vmatmul.f32.gmra.mxu0 %v962
    %v984 = vpop.f32.mrf.mxu0
    %v985 = vadd.f32 0.0, %v984
    %986 = vdwg.mxu0
    %v987 = vmul.f32 %v985, 0.125
    %vm988 = vcmask 64512
    %v989 = vsel %vm988, %v987, -inf
    %990 = vmax.xlane.f32.xlu0 %v989
    %v991 = vpop.xlane.xlu0 %990
    %v992 = vsub.f32 %v987, %v991
    %v993 = vmul.f32 %v992, 1.442695
    %v994 = vpow.pop %v993
    %v995 = vsel %vm988, %v994, 0.0
    %996 = vadd.xlane.f32.xlu0 %v995
    %v997 = vpop.xlane.xlu0 %996
    %v998 = vrcp.pop %v997
    %v999 = vmul.f32 %v994, %v998
    %v1001 = vsel %vm988, %v999, 0
    %1003 = vmatpush.msra.mxu0 0.0
    %1004 = vmatpush.msra.mxu0 0.0
    %1005 = vmatpush.msra.mxu0 0.0
    %1006 = vmatpush.msra.mxu0 0.0
    %1007 = vmatpush.msra.mxu0 0.0
    %1008 = vmatpush.msra.mxu0 0.0
    %1009 = vmatpush.msra.mxu0 0.0
    %1010 = vmatpush.msra.mxu0 0.0
    %1011 = vmatpush.msra.mxu0 0.0
    %1012 = vmatpush.msra.mxu0 0.0
    %1013 = vmatpush.msra.mxu0 0.0
    %1014 = vmatpush.msra.mxu0 0.0
    %1015 = vmatpush.msra.mxu0 0.0
    %1016 = vmatpush.msra.mxu0 0.0
    %1017 = vmatpush.msra.mxu0 0.0
    %1018 = vmatpush.msra.mxu0 %v928
    %1019 = vmatmul.f32.gmra.mxu0 %v1001
    %v1020 = vpop.f32.mrf.mxu0
    %v1021 = vadd.f32 0.0, %v1020
    %1022 = vdwg.mxu0
    %1023 = vrot.lane.b32.xlu0 %v816, 64
    %v1024 = vpop.permute.xlu0 %1023
    %1025 = vrot.lane.b32.xlu0 %v872, 64
    %v1026 = vpop.permute.xlu0 %1025
    %v1027 = vsel %vm960, %v1024, 0
    %v1029 = vsel %vm960, %v1026, 0
    %1031 = vmatpush.xpose.msra.mxu0 0.0
    %1032 = vmatpush.xpose.msra.mxu0 0.0
    %1033 = vmatpush.xpose.msra.mxu0 0.0
    %1034 = vmatpush.xpose.msra.mxu0 0.0
    %1035 = vmatpush.xpose.msra.mxu0 0.0
    %1036 = vmatpush.xpose.msra.mxu0 0.0
    %1037 = vmatpush.xpose.msra.mxu0 0.0
    %1038 = vmatpush.xpose.msra.mxu0 0.0
    %1039 = vmatpush.xpose.msra.mxu0 0.0
    %1040 = vmatpush.xpose.msra.mxu0 0.0
    %1041 = vmatpush.xpose.msra.mxu0 0.0
    %1042 = vmatpush.xpose.msra.mxu0 0.0
    %1043 = vmatpush.xpose.msra.mxu0 0.0
    %1044 = vmatpush.xpose.msra.mxu0 0.0
    %1045 = vmatpush.xpose.msra.mxu0 0.0
    %1046 = vmatpush.xpose.msra.mxu0 %v1029
    %1047 = vmatmul.f32.gmra.mxu0 %v1027
    %v1048 = vpop.f32.mrf.mxu0
    %v1049 = vadd.f32 0.0, %v1048
    %1050 = vdwg.mxu0
    %v1051 = vmul.f32 %v1049, 0.125
    %v1052 = vsel %vm988, %v1051, -inf
    %1053 = vmax.xlane.f32.xlu0 %v1052
    %v1054 = vpop.xlane.xlu0 %1053
    %v1055 = vsub.f32 %v1051, %v1054
    %v1056 = vmul.f32 %v1055, 1.442695
    %v1057 = vpow.pop %v1056
    %v1058 = vsel %vm988, %v1057, 0.0
    %1059 = vadd.xlane.f32.xlu0 %v1058
    %v1060 = vpop.xlane.xlu0 %1059
    %v1061 = vrcp.pop %v1060
    %v1062 = vmul.f32 %v1057, %v1061
    %1064 = vrot.lane.b32.xlu0 %v928, 64
    %v1065 = vpop.permute.xlu0 %1064
    %v1068 = vsel %vm988, %v1062, 0
    %1070 = vmatpush.msra.mxu0 0.0
    %1071 = vmatpush.msra.mxu0 0.0
    %1072 = vmatpush.msra.mxu0 0.0
    %1073 = vmatpush.msra.mxu0 0.0
    %1074 = vmatpush.msra.mxu0 0.0
    %1075 = vmatpush.msra.mxu0 0.0
    %1076 = vmatpush.msra.mxu0 0.0
    %1077 = vmatpush.msra.mxu0 0.0
    %1078 = vmatpush.msra.mxu0 0.0
    %1079 = vmatpush.msra.mxu0 0.0
    %1080 = vmatpush.msra.mxu0 0.0
    %1081 = vmatpush.msra.mxu0 0.0
    %1082 = vmatpush.msra.mxu0 0.0
    %1083 = vmatpush.msra.mxu0 0.0
    %1084 = vmatpush.msra.mxu0 0.0
    %1085 = vmatpush.msra.mxu0 %v1065
    %1086 = vmatmul.f32.gmra.mxu0 %v1068
    %v1087 = vpop.f32.mrf.mxu0
    %v1088 = vadd.f32 0.0, %v1087
    %1089 = vdwg.mxu0
    %v1091 = vsel %vm960, %v844, 0
    %v1094 = vsel %vm960, %v900, 0
    %1096 = vmatpush.xpose.msra.mxu0 0.0
    %1097 = vmatpush.xpose.msra.mxu0 0.0
    %1098 = vmatpush.xpose.msra.mxu0 0.0
    %1099 = vmatpush.xpose.msra.mxu0 0.0
    %1100 = vmatpush.xpose.msra.mxu0 0.0
    %1101 = vmatpush.xpose.msra.mxu0 0.0
    %1102 = vmatpush.xpose.msra.mxu0 0.0
    %1103 = vmatpush.xpose.msra.mxu0 0.0
    %1104 = vmatpush.xpose.msra.mxu0 0.0
    %1105 = vmatpush.xpose.msra.mxu0 0.0
    %1106 = vmatpush.xpose.msra.mxu0 0.0
    %1107 = vmatpush.xpose.msra.mxu0 0.0
    %1108 = vmatpush.xpose.msra.mxu0 0.0
    %1109 = vmatpush.xpose.msra.mxu0 0.0
    %1110 = vmatpush.xpose.msra.mxu0 0.0
    %1111 = vmatpush.xpose.msra.mxu0 %v1094
    %1112 = vmatmul.f32.gmra.mxu0 %v1091
    %v1113 = vpop.f32.mrf.mxu0
    %v1114 = vadd.f32 0.0, %v1113
    %1115 = vdwg.mxu0
    %v1116 = vmul.f32 %v1114, 0.125
    %v1117 = vsel %vm988, %v1116, -inf
    %1118 = vmax.xlane.f32.xlu0 %v1117
    %v1119 = vpop.xlane.xlu0 %1118
    %v1120 = vsub.f32 %v1116, %v1119
    %v1121 = vmul.f32 %v1120, 1.442695
    %v1122 = vpow.pop %v1121
    %v1123 = vsel %vm988, %v1122, 0.0
    %1124 = vadd.xlane.f32.xlu0 %v1123
    %v1125 = vpop.xlane.xlu0 %1124
    %v1126 = vrcp.pop %v1125
    %v1127 = vmul.f32 %v1122, %v1126
    %v1129 = vsel %vm988, %v1127, 0
    %1131 = vmatpush.msra.mxu0 0.0
    %1132 = vmatpush.msra.mxu0 0.0
    %1133 = vmatpush.msra.mxu0 0.0
    %1134 = vmatpush.msra.mxu0 0.0
    %1135 = vmatpush.msra.mxu0 0.0
    %1136 = vmatpush.msra.mxu0 0.0
    %1137 = vmatpush.msra.mxu0 0.0
    %1138 = vmatpush.msra.mxu0 0.0
    %1139 = vmatpush.msra.mxu0 0.0
    %1140 = vmatpush.msra.mxu0 0.0
    %1141 = vmatpush.msra.mxu0 0.0
    %1142 = vmatpush.msra.mxu0 0.0
    %1143 = vmatpush.msra.mxu0 0.0
    %1144 = vmatpush.msra.mxu0 0.0
    %1145 = vmatpush.msra.mxu0 0.0
    %1146 = vmatpush.msra.mxu0 %v956
    %1147 = vmatmul.f32.gmra.mxu0 %v1129
    %v1148 = vpop.f32.mrf.mxu0
    %v1149 = vadd.f32 0.0, %v1148
    %1150 = vdwg.mxu0
    %1151 = vrot.lane.b32.xlu0 %v844, 64
    %v1152 = vpop.permute.xlu0 %1151
    %1153 = vrot.lane.b32.xlu0 %v900, 64
    %v1154 = vpop.permute.xlu0 %1153
    %v1155 = vsel %vm960, %v1152, 0
    %v1157 = vsel %vm960, %v1154, 0
    %1159 = vmatpush.xpose.msra.mxu0 0.0
    %1160 = vmatpush.xpose.msra.mxu0 0.0
    %1161 = vmatpush.xpose.msra.mxu0 0.0
    %1162 = vmatpush.xpose.msra.mxu0 0.0
    %1163 = vmatpush.xpose.msra.mxu0 0.0
    %1164 = vmatpush.xpose.msra.mxu0 0.0
    %1165 = vmatpush.xpose.msra.mxu0 0.0
    %1166 = vmatpush.xpose.msra.mxu0 0.0
    %1167 = vmatpush.xpose.msra.mxu0 0.0
    %1168 = vmatpush.xpose.msra.mxu0 0.0
    %1169 = vmatpush.xpose.msra.mxu0 0.0
    %1170 = vmatpush.xpose.msra.mxu0 0.0
    %1171 = vmatpush.xpose.msra.mxu0 0.0
    %1172 = vmatpush.xpose.msra.mxu0 0.0
    %1173 = vmatpush.xpose.msra.mxu0 0.0
    %1174 = vmatpush.xpose.msra.mxu0 %v1157
    %1175 = vmatmul.f32.gmra.mxu0 %v1155
    %v1176 = vpop.f32.mrf.mxu0
    %v1177 = vadd.f32 0.0, %v1176
    %1178 = vdwg.mxu0
    %v1179 = vmul.f32 %v1177, 0.125
    %v1180 = vsel %vm988, %v1179, -inf
    %1181 = vmax.xlane.f32.xlu0 %v1180
    %v1182 = vpop.xlane.xlu0 %1181
    %v1183 = vsub.f32 %v1179, %v1182
    %v1184 = vmul.f32 %v1183, 1.442695
    %v1185 = vpow.pop %v1184
    %v1186 = vsel %vm988, %v1185, 0.0
    %1187 = vadd.xlane.f32.xlu0 %v1186
    %v1188 = vpop.xlane.xlu0 %1187
    %v1189 = vrcp.pop %v1188
    %v1190 = vmul.f32 %v1185, %v1189
    %1192 = vrot.lane.b32.xlu0 %v956, 64
    %v1193 = vpop.permute.xlu0 %1192
    %v1196 = vsel %vm988, %v1190, 0
    %1198 = vmatpush.msra.mxu0 0.0
    %1199 = vmatpush.msra.mxu0 0.0
    %1200 = vmatpush.msra.mxu0 0.0
    %1201 = vmatpush.msra.mxu0 0.0
    %1202 = vmatpush.msra.mxu0 0.0
    %1203 = vmatpush.msra.mxu0 0.0
    %1204 = vmatpush.msra.mxu0 0.0
    %1205 = vmatpush.msra.mxu0 0.0
    %1206 = vmatpush.msra.mxu0 0.0
    %1207 = vmatpush.msra.mxu0 0.0
    %1208 = vmatpush.msra.mxu0 0.0
    %1209 = vmatpush.msra.mxu0 0.0
    %1210 = vmatpush.msra.mxu0 0.0
    %1211 = vmatpush.msra.mxu0 0.0
    %1212 = vmatpush.msra.mxu0 0.0
    %1213 = vmatpush.msra.mxu0 %v1193
    %1214 = vmatmul.f32.gmra.mxu0 %v1196
    %v1215 = vpop.f32.mrf.mxu0
    %v1216 = vadd.f32 0.0, %v1215
    %1217 = vdwg.mxu0
    %1219 = vrot.lane.b32.xlu0 %v1088, 64
    %v1220 = vpop.permute.xlu0 %1219
    %1223 = vrot.lane.b32.xlu0 %v1216, 64
    %v1224 = vpop.permute.xlu0 %1223
    %v1226 = vsel %vm960, %v1021, %v1220
    %v1227 = vsel %vm960, %v1149, %v1224
    %v1229 = vsel %vm960, %v818, 0
    %v1232 = vsel %vm960, %v874, 0
    %1234 = vmatpush.xpose.msra.mxu0 0.0
    %1235 = vmatpush.xpose.msra.mxu0 0.0
    %1236 = vmatpush.xpose.msra.mxu0 0.0
    %1237 = vmatpush.xpose.msra.mxu0 0.0
    %1238 = vmatpush.xpose.msra.mxu0 0.0
    %1239 = vmatpush.xpose.msra.mxu0 0.0
    %1240 = vmatpush.xpose.msra.mxu0 0.0
    %1241 = vmatpush.xpose.msra.mxu0 0.0
    %1242 = vmatpush.xpose.msra.mxu0 0.0
    %1243 = vmatpush.xpose.msra.mxu0 0.0
    %1244 = vmatpush.xpose.msra.mxu0 0.0
    %1245 = vmatpush.xpose.msra.mxu0 0.0
    %1246 = vmatpush.xpose.msra.mxu0 0.0
    %1247 = vmatpush.xpose.msra.mxu0 0.0
    %1248 = vmatpush.xpose.msra.mxu0 0.0
    %1249 = vmatpush.xpose.msra.mxu0 %v1232
    %1250 = vmatmul.f32.gmra.mxu0 %v1229
    %v1251 = vpop.f32.mrf.mxu0
    %v1252 = vadd.f32 0.0, %v1251
    %1253 = vdwg.mxu0
    %v1254 = vmul.f32 %v1252, 0.125
    %v1255 = vsel %vm988, %v1254, -inf
    %1256 = vmax.xlane.f32.xlu0 %v1255
    %v1257 = vpop.xlane.xlu0 %1256
    %v1258 = vsub.f32 %v1254, %v1257
    %v1259 = vmul.f32 %v1258, 1.442695
    %v1260 = vpow.pop %v1259
    %v1261 = vsel %vm988, %v1260, 0.0
    %1262 = vadd.xlane.f32.xlu0 %v1261
    %v1263 = vpop.xlane.xlu0 %1262
    %v1264 = vrcp.pop %v1263
    %v1265 = vmul.f32 %v1260, %v1264
    %v1267 = vsel %vm988, %v1265, 0
    %1269 = vmatpush.msra.mxu0 0.0
    %1270 = vmatpush.msra.mxu0 0.0
    %1271 = vmatpush.msra.mxu0 0.0
    %1272 = vmatpush.msra.mxu0 0.0
    %1273 = vmatpush.msra.mxu0 0.0
    %1274 = vmatpush.msra.mxu0 0.0
    %1275 = vmatpush.msra.mxu0 0.0
    %1276 = vmatpush.msra.mxu0 0.0
    %1277 = vmatpush.msra.mxu0 0.0
    %1278 = vmatpush.msra.mxu0 0.0
    %1279 = vmatpush.msra.mxu0 0.0
    %1280 = vmatpush.msra.mxu0 0.0
    %1281 = vmatpush.msra.mxu0 0.0
    %1282 = vmatpush.msra.mxu0 0.0
    %1283 = vmatpush.msra.mxu0 0.0
    %1284 = vmatpush.msra.mxu0 %v930
    %1285 = vmatmul.f32.gmra.mxu0 %v1267
    %v1286 = vpop.f32.mrf.mxu0
    %v1287 = vadd.f32 0.0, %v1286
    %1288 = vdwg.mxu0
    %1289 = vrot.lane.b32.xlu0 %v818, 64
    %v1290 = vpop.permute.xlu0 %1289
    %1291 = vrot.lane.b32.xlu0 %v874, 64
    %v1292 = vpop.permute.xlu0 %1291
    %v1293 = vsel %vm960, %v1290, 0
    %v1295 = vsel %vm960, %v1292, 0
    %1297 = vmatpush.xpose.msra.mxu0 0.0
    %1298 = vmatpush.xpose.msra.mxu0 0.0
    %1299 = vmatpush.xpose.msra.mxu0 0.0
    %1300 = vmatpush.xpose.msra.mxu0 0.0
    %1301 = vmatpush.xpose.msra.mxu0 0.0
    %1302 = vmatpush.xpose.msra.mxu0 0.0
    %1303 = vmatpush.xpose.msra.mxu0 0.0
    %1304 = vmatpush.xpose.msra.mxu0 0.0
    %1305 = vmatpush.xpose.msra.mxu0 0.0
    %1306 = vmatpush.xpose.msra.mxu0 0.0
    %1307 = vmatpush.xpose.msra.mxu0 0.0
    %1308 = vmatpush.xpose.msra.mxu0 0.0
    %1309 = vmatpush.xpose.msra.mxu0 0.0
    %1310 = vmatpush.xpose.msra.mxu0 0.0
    %1311 = vmatpush.xpose.msra.mxu0 0.0
    %1312 = vmatpush.xpose.msra.mxu0 %v1295
    %1313 = vmatmul.f32.gmra.mxu0 %v1293
    %v1314 = vpop.f32.mrf.mxu0
    %v1315 = vadd.f32 0.0, %v1314
    %1316 = vdwg.mxu0
    %v1317 = vmul.f32 %v1315, 0.125
    %v1318 = vsel %vm988, %v1317, -inf
    %1319 = vmax.xlane.f32.xlu0 %v1318
    %v1320 = vpop.xlane.xlu0 %1319
    %v1321 = vsub.f32 %v1317, %v1320
    %v1322 = vmul.f32 %v1321, 1.442695
    %v1323 = vpow.pop %v1322
    %v1324 = vsel %vm988, %v1323, 0.0
    %1325 = vadd.xlane.f32.xlu0 %v1324
    %v1326 = vpop.xlane.xlu0 %1325
    %v1327 = vrcp.pop %v1326
    %v1328 = vmul.f32 %v1323, %v1327
    %1330 = vrot.lane.b32.xlu0 %v930, 64
    %v1331 = vpop.permute.xlu0 %1330
    %v1334 = vsel %vm988, %v1328, 0
    %1336 = vmatpush.msra.mxu0 0.0
    %1337 = vmatpush.msra.mxu0 0.0
    %1338 = vmatpush.msra.mxu0 0.0
    %1339 = vmatpush.msra.mxu0 0.0
    %1340 = vmatpush.msra.mxu0 0.0
    %1341 = vmatpush.msra.mxu0 0.0
    %1342 = vmatpush.msra.mxu0 0.0
    %1343 = vmatpush.msra.mxu0 0.0
    %1344 = vmatpush.msra.mxu0 0.0
    %1345 = vmatpush.msra.mxu0 0.0
    %1346 = vmatpush.msra.mxu0 0.0
    %1347 = vmatpush.msra.mxu0 0.0
    %1348 = vmatpush.msra.mxu0 0.0
    %1349 = vmatpush.msra.mxu0 0.0
    %1350 = vmatpush.msra.mxu0 0.0
    %1351 = vmatpush.msra.mxu0 %v1331
    %1352 = vmatmul.f32.gmra.mxu0 %v1334
    %v1353 = vpop.f32.mrf.mxu0
    %v1354 = vadd.f32 0.0, %v1353
    %1355 = vdwg.mxu0
    %v1357 = vsel %vm960, %v846, 0
    %v1360 = vsel %vm960, %v902, 0
    %1362 = vmatpush.xpose.msra.mxu0 0.0
    %1363 = vmatpush.xpose.msra.mxu0 0.0
    %1364 = vmatpush.xpose.msra.mxu0 0.0
    %1365 = vmatpush.xpose.msra.mxu0 0.0
    %1366 = vmatpush.xpose.msra.mxu0 0.0
    %1367 = vmatpush.xpose.msra.mxu0 0.0
    %1368 = vmatpush.xpose.msra.mxu0 0.0
    %1369 = vmatpush.xpose.msra.mxu0 0.0
    %1370 = vmatpush.xpose.msra.mxu0 0.0
    %1371 = vmatpush.xpose.msra.mxu0 0.0
    %1372 = vmatpush.xpose.msra.mxu0 0.0
    %1373 = vmatpush.xpose.msra.mxu0 0.0
    %1374 = vmatpush.xpose.msra.mxu0 0.0
    %1375 = vmatpush.xpose.msra.mxu0 0.0
    %1376 = vmatpush.xpose.msra.mxu0 0.0
    %1377 = vmatpush.xpose.msra.mxu0 %v1360
    %1378 = vmatmul.f32.gmra.mxu0 %v1357
    %v1379 = vpop.f32.mrf.mxu0
    %v1380 = vadd.f32 0.0, %v1379
    %1381 = vdwg.mxu0
    %v1382 = vmul.f32 %v1380, 0.125
    %v1383 = vsel %vm988, %v1382, -inf
    %1384 = vmax.xlane.f32.xlu0 %v1383
    %v1385 = vpop.xlane.xlu0 %1384
    %v1386 = vsub.f32 %v1382, %v1385
    %v1387 = vmul.f32 %v1386, 1.442695
    %v1388 = vpow.pop %v1387
    %v1389 = vsel %vm988, %v1388, 0.0
    %1390 = vadd.xlane.f32.xlu0 %v1389
    %v1391 = vpop.xlane.xlu0 %1390
    %v1392 = vrcp.pop %v1391
    %v1393 = vmul.f32 %v1388, %v1392
    %v1395 = vsel %vm988, %v1393, 0
    %1397 = vmatpush.msra.mxu0 0.0
    %1398 = vmatpush.msra.mxu0 0.0
    %1399 = vmatpush.msra.mxu0 0.0
    %1400 = vmatpush.msra.mxu0 0.0
    %1401 = vmatpush.msra.mxu0 0.0
    %1402 = vmatpush.msra.mxu0 0.0
    %1403 = vmatpush.msra.mxu0 0.0
    %1404 = vmatpush.msra.mxu0 0.0
    %1405 = vmatpush.msra.mxu0 0.0
    %1406 = vmatpush.msra.mxu0 0.0
    %1407 = vmatpush.msra.mxu0 0.0
    %1408 = vmatpush.msra.mxu0 0.0
    %1409 = vmatpush.msra.mxu0 0.0
    %1410 = vmatpush.msra.mxu0 0.0
    %1411 = vmatpush.msra.mxu0 0.0
    %1412 = vmatpush.msra.mxu0 %v958
    %1413 = vmatmul.f32.gmra.mxu0 %v1395
    %v1414 = vpop.f32.mrf.mxu0
    %v1415 = vadd.f32 0.0, %v1414
    %1416 = vdwg.mxu0
    %1417 = vrot.lane.b32.xlu0 %v846, 64
    %v1418 = vpop.permute.xlu0 %1417
    %1419 = vrot.lane.b32.xlu0 %v902, 64
    %v1420 = vpop.permute.xlu0 %1419
    %v1421 = vsel %vm960, %v1418, 0
    %v1423 = vsel %vm960, %v1420, 0
    %1425 = vmatpush.xpose.msra.mxu0 0.0
    %1426 = vmatpush.xpose.msra.mxu0 0.0
    %1427 = vmatpush.xpose.msra.mxu0 0.0
    %1428 = vmatpush.xpose.msra.mxu0 0.0
    %1429 = vmatpush.xpose.msra.mxu0 0.0
    %1430 = vmatpush.xpose.msra.mxu0 0.0
    %1431 = vmatpush.xpose.msra.mxu0 0.0
    %1432 = vmatpush.xpose.msra.mxu0 0.0
    %1433 = vmatpush.xpose.msra.mxu0 0.0
    %1434 = vmatpush.xpose.msra.mxu0 0.0
    %1435 = vmatpush.xpose.msra.mxu0 0.0
    %1436 = vmatpush.xpose.msra.mxu0 0.0
    %1437 = vmatpush.xpose.msra.mxu0 0.0
    %1438 = vmatpush.xpose.msra.mxu0 0.0
    %1439 = vmatpush.xpose.msra.mxu0 0.0
    %1440 = vmatpush.xpose.msra.mxu0 %v1423
    %1441 = vmatmul.f32.gmra.mxu0 %v1421
    %v1442 = vpop.f32.mrf.mxu0
    %v1443 = vadd.f32 0.0, %v1442
    %1444 = vdwg.mxu0
    %v1445 = vmul.f32 %v1443, 0.125
    %v1446 = vsel %vm988, %v1445, -inf
    %1447 = vmax.xlane.f32.xlu0 %v1446
    %v1448 = vpop.xlane.xlu0 %1447
    %v1449 = vsub.f32 %v1445, %v1448
    %v1450 = vmul.f32 %v1449, 1.442695
    %v1451 = vpow.pop %v1450
    %v1452 = vsel %vm988, %v1451, 0.0
    %1453 = vadd.xlane.f32.xlu0 %v1452
    %v1454 = vpop.xlane.xlu0 %1453
    %v1455 = vrcp.pop %v1454
    %v1456 = vmul.f32 %v1451, %v1455
    %1458 = vrot.lane.b32.xlu0 %v958, 64
    %v1459 = vpop.permute.xlu0 %1458
    %v1462 = vsel %vm988, %v1456, 0
    %1464 = vmatpush.msra.mxu0 0.0
    %1465 = vmatpush.msra.mxu0 0.0
    %1466 = vmatpush.msra.mxu0 0.0
    %1467 = vmatpush.msra.mxu0 0.0
    %1468 = vmatpush.msra.mxu0 0.0
    %1469 = vmatpush.msra.mxu0 0.0
    %1470 = vmatpush.msra.mxu0 0.0
    %1471 = vmatpush.msra.mxu0 0.0
    %1472 = vmatpush.msra.mxu0 0.0
    %1473 = vmatpush.msra.mxu0 0.0
    %1474 = vmatpush.msra.mxu0 0.0
    %1475 = vmatpush.msra.mxu0 0.0
    %1476 = vmatpush.msra.mxu0 0.0
    %1477 = vmatpush.msra.mxu0 0.0
    %1478 = vmatpush.msra.mxu0 0.0
    %1479 = vmatpush.msra.mxu0 %v1459
    %1480 = vmatmul.f32.gmra.mxu0 %v1462
    %v1481 = vpop.f32.mrf.mxu0
    %v1482 = vadd.f32 0.0, %v1481
    %1483 = vdwg.mxu0
    %1485 = vrot.lane.b32.xlu0 %v1354, 64
    %v1486 = vpop.permute.xlu0 %1485
    %1489 = vrot.lane.b32.xlu0 %v1482, 64
    %v1490 = vpop.permute.xlu0 %1489
    %v1492 = vsel %vm960, %v1287, %v1486
    %v1493 = vsel %vm960, %v1415, %v1490
    %v1494 = vpack.c.bf16 %v1492, %v1226
    %v1495 = vpack.c.bf16 %v1493, %v1227
    %v1496 = vld [vmem:[#allocation5] sm:$0xff]
    %v1497 = vld [vmem:[#allocation5 + $0x8] sm:$0xff]
    %v1498 = vld [vmem:[#allocation5 + $0x10] sm:$0xff]
    %v1499 = vld [vmem:[#allocation5 + $0x18] sm:$0xff]
    %v1500 = vld [vmem:[#allocation5 + $0x20] sm:$0xff]
    %v1501 = vld [vmem:[#allocation5 + $0x28] sm:$0xff]
    %v1502 = vld [vmem:[#allocation5 + $0x30] sm:$0xff]
    %v1503 = vld [vmem:[#allocation5 + $0x38] sm:$0xff]
    %v1504 = vld [vmem:[#allocation5 + $0x40] sm:$0xff]
    %v1505 = vld [vmem:[#allocation5 + $0x48] sm:$0xff]
    %v1506 = vld [vmem:[#allocation5 + $0x50] sm:$0xff]
    %v1507 = vld [vmem:[#allocation5 + $0x58] sm:$0xff]
    %v1508 = vld [vmem:[#allocation5 + $0x60] sm:$0xff]
    %v1509 = vld [vmem:[#allocation5 + $0x68] sm:$0xff]
    %v1510 = vld [vmem:[#allocation5 + $0x70] sm:$0xff]
    %v1511 = vld [vmem:[#allocation5 + $0x78] sm:$0xff]
    %v1512 = vld [vmem:[#allocation5 + $0x80] sm:$0xff]
    %v1513 = vld [vmem:[#allocation5 + $0x88] sm:$0xff]
    %v1514 = vld [vmem:[#allocation5 + $0x90] sm:$0xff]
    %v1515 = vld [vmem:[#allocation5 + $0x98] sm:$0xff]
    %v1516 = vld [vmem:[#allocation5 + $0xa0] sm:$0xff]
    %v1517 = vld [vmem:[#allocation5 + $0xa8] sm:$0xff]
    %v1518 = vld [vmem:[#allocation5 + $0xb0] sm:$0xff]
    %v1519 = vld [vmem:[#allocation5 + $0xb8] sm:$0xff]
    %v1520 = vld [vmem:[#allocation5 + $0xc0] sm:$0xff]
    %v1521 = vld [vmem:[#allocation5 + $0xc8] sm:$0xff]
    %v1522 = vld [vmem:[#allocation5 + $0xd0] sm:$0xff]
    %v1523 = vld [vmem:[#allocation5 + $0xd8] sm:$0xff]
    %v1524 = vld [vmem:[#allocation5 + $0xe0] sm:$0xff]
    %v1525 = vld [vmem:[#allocation5 + $0xe8] sm:$0xff]
    %v1526 = vld [vmem:[#allocation5 + $0xf0] sm:$0xff]
    %v1527 = vld [vmem:[#allocation5 + $0xf8] sm:$0xff]
    %v1528 = vld [vmem:[#allocation7] sm:$0x3]
    %v1530 = vperm.slane %v1528, 0
    %v1531 = vperm.slane %v1528, 1
    %v1566 = vunpack.c.l.b16 %v1496
    %v1567 = vunpack.c.h.b16 %v1496
    %v1568 = vunpack.c.l.b16 %v1497
    %v1569 = vunpack.c.h.b16 %v1497
    %v1570 = vunpack.c.l.b16 %v1498
    %v1571 = vunpack.c.h.b16 %v1498
    %v1572 = vunpack.c.l.b16 %v1499
    %v1573 = vunpack.c.h.b16 %v1499
    %v1574 = vunpack.c.l.b16 %v1500
    %v1575 = vunpack.c.h.b16 %v1500
    %v1576 = vunpack.c.l.b16 %v1501
    %v1577 = vunpack.c.h.b16 %v1501
    %v1578 = vunpack.c.l.b16 %v1502
    %v1579 = vunpack.c.h.b16 %v1502
    %v1580 = vunpack.c.l.b16 %v1503
    %v1581 = vunpack.c.h.b16 %v1503
    %v1582 = vunpack.c.l.b16 %v1504
    %v1583 = vunpack.c.h.b16 %v1504
    %v1584 = vunpack.c.l.b16 %v1505
    %v1585 = vunpack.c.h.b16 %v1505
    %v1586 = vunpack.c.l.b16 %v1506
    %v1587 = vunpack.c.h.b16 %v1506
    %v1588 = vunpack.c.l.b16 %v1507
    %v1589 = vunpack.c.h.b16 %v1507
    %v1590 = vunpack.c.l.b16 %v1508
    %v1591 = vunpack.c.h.b16 %v1508
    %v1592 = vunpack.c.l.b16 %v1509
    %v1593 = vunpack.c.h.b16 %v1509
    %v1594 = vunpack.c.l.b16 %v1510
    %v1595 = vunpack.c.h.b16 %v1510
    %v1596 = vunpack.c.l.b16 %v1511
    %v1597 = vunpack.c.h.b16 %v1511
    %v1598 = vunpack.c.l.b16 %v1512
    %v1599 = vunpack.c.h.b16 %v1512
    %v1600 = vunpack.c.l.b16 %v1513
    %v1601 = vunpack.c.h.b16 %v1513
    %v1602 = vunpack.c.l.b16 %v1514
    %v1603 = vunpack.c.h.b16 %v1514
    %v1604 = vunpack.c.l.b16 %v1515
    %v1605 = vunpack.c.h.b16 %v1515
    %v1606 = vunpack.c.l.b16 %v1516
    %v1607 = vunpack.c.h.b16 %v1516
    %v1608 = vunpack.c.l.b16 %v1517
    %v1609 = vunpack.c.h.b16 %v1517
    %v1610 = vunpack.c.l.b16 %v1518
    %v1611 = vunpack.c.h.b16 %v1518
    %v1612 = vunpack.c.l.b16 %v1519
    %v1613 = vunpack.c.h.b16 %v1519
    %v1614 = vunpack.c.l.b16 %v1520
    %v1615 = vunpack.c.h.b16 %v1520
    %v1616 = vunpack.c.l.b16 %v1521
    %v1617 = vunpack.c.h.b16 %v1521
    %v1618 = vunpack.c.l.b16 %v1522
    %v1619 = vunpack.c.h.b16 %v1522
    %v1620 = vunpack.c.l.b16 %v1523
    %v1621 = vunpack.c.h.b16 %v1523
    %v1622 = vunpack.c.l.b16 %v1524
    %v1623 = vunpack.c.h.b16 %v1524
    %v1624 = vunpack.c.l.b16 %v1525
    %v1625 = vunpack.c.h.b16 %v1525
    %v1626 = vunpack.c.l.b16 %v1526
    %v1627 = vunpack.c.h.b16 %v1526
    %v1628 = vunpack.c.l.b16 %v1527
    %v1629 = vunpack.c.h.b16 %v1527
    %v1630 = vpack.c.b16 %v1568, %v1566
    %v1631 = vpack.c.b16 %v1569, %v1567
    %v1632 = vpack.c.b16 %v1572, %v1570
    %v1633 = vpack.c.b16 %v1573, %v1571
    %v1634 = vpack.c.b16 %v1576, %v1574
    %v1635 = vpack.c.b16 %v1577, %v1575
    %v1636 = vpack.c.b16 %v1580, %v1578
    %v1637 = vpack.c.b16 %v1581, %v1579
    %v1638 = vpack.c.b16 %v1584, %v1582
    %v1639 = vpack.c.b16 %v1585, %v1583
    %v1640 = vpack.c.b16 %v1588, %v1586
    %v1641 = vpack.c.b16 %v1589, %v1587
    %v1642 = vpack.c.b16 %v1592, %v1590
    %v1643 = vpack.c.b16 %v1593, %v1591
    %v1644 = vpack.c.b16 %v1596, %v1594
    %v1645 = vpack.c.b16 %v1597, %v1595
    %v1646 = vpack.c.b16 %v1600, %v1598
    %v1647 = vpack.c.b16 %v1601, %v1599
    %v1648 = vpack.c.b16 %v1604, %v1602
    %v1649 = vpack.c.b16 %v1605, %v1603
    %v1650 = vpack.c.b16 %v1608, %v1606
    %v1651 = vpack.c.b16 %v1609, %v1607
    %v1652 = vpack.c.b16 %v1612, %v1610
    %v1653 = vpack.c.b16 %v1613, %v1611
    %v1654 = vpack.c.b16 %v1616, %v1614
    %v1655 = vpack.c.b16 %v1617, %v1615
    %v1656 = vpack.c.b16 %v1620, %v1618
    %v1657 = vpack.c.b16 %v1621, %v1619
    %v1658 = vpack.c.b16 %v1624, %v1622
    %v1659 = vpack.c.b16 %v1625, %v1623
    %v1660 = vpack.c.b16 %v1628, %v1626
    %v1661 = vpack.c.b16 %v1629, %v1627
    %1694 = vmatpush.bf16.xpose.msra.mxu0 %v1644
    %1695 = vmatpush.bf16.xpose.msra.mxu0 %v1642
    %1696 = vmatpush.bf16.xpose.msra.mxu0 %v1640
    %1697 = vmatpush.bf16.xpose.msra.mxu0 %v1638
    %1698 = vmatpush.bf16.xpose.msra.mxu0 %v1636
    %1699 = vmatpush.bf16.xpose.msra.mxu0 %v1634
    %1700 = vmatpush.bf16.xpose.msra.mxu0 %v1632
    %1701 = vmatpush.bf16.xpose.msra.mxu0 %v1630
    %1702 = vmatmul.bf16.gmra.mxu0 %v1494
    %v1703 = vpop.f32.mrf.mxu0
    %v1704 = vadd.f32 %v1530, %v1703
    %v1705 = vpop.f32.mrf.mxu0
    %v1706 = vadd.f32 %v1530, %v1705
    %1707 = vdwg.mxu0
    %1708 = vmatpush.bf16.xpose.msra.mxu0 %v1645
    %1709 = vmatpush.bf16.xpose.msra.mxu0 %v1643
    %1710 = vmatpush.bf16.xpose.msra.mxu0 %v1641
    %1711 = vmatpush.bf16.xpose.msra.mxu0 %v1639
    %1712 = vmatpush.bf16.xpose.msra.mxu0 %v1637
    %1713 = vmatpush.bf16.xpose.msra.mxu0 %v1635
    %1714 = vmatpush.bf16.xpose.msra.mxu0 %v1633
    %1715 = vmatpush.bf16.xpose.msra.mxu0 %v1631
    %1716 = vmatmul.bf16.gmra.mxu0 %v1495
    %v1717 = vpop.f32.mrf.mxu0
    %v1718 = vadd.f32 %v1704, %v1717
    %v1719 = vpop.f32.mrf.mxu0
    %v1720 = vadd.f32 %v1706, %v1719
    %1721 = vdwg.mxu0
    %1722 = vmatpush.bf16.xpose.msra.mxu0 %v1660
    %1723 = vmatpush.bf16.xpose.msra.mxu0 %v1658
    %1724 = vmatpush.bf16.xpose.msra.mxu0 %v1656
    %1725 = vmatpush.bf16.xpose.msra.mxu0 %v1654
    %1726 = vmatpush.bf16.xpose.msra.mxu0 %v1652
    %1727 = vmatpush.bf16.xpose.msra.mxu0 %v1650
    %1728 = vmatpush.bf16.xpose.msra.mxu0 %v1648
    %1729 = vmatpush.bf16.xpose.msra.mxu0 %v1646
    %1730 = vmatmul.bf16.gmra.mxu0 %v1494
    %v1731 = vpop.f32.mrf.mxu0
    %v1732 = vadd.f32 %v1531, %v1731
    %v1733 = vpop.f32.mrf.mxu0
    %v1734 = vadd.f32 %v1531, %v1733
    %1735 = vdwg.mxu0
    %1736 = vmatpush.bf16.xpose.msra.mxu0 %v1661
    %1737 = vmatpush.bf16.xpose.msra.mxu0 %v1659
    %1738 = vmatpush.bf16.xpose.msra.mxu0 %v1657
    %1739 = vmatpush.bf16.xpose.msra.mxu0 %v1655
    %1740 = vmatpush.bf16.xpose.msra.mxu0 %v1653
    %1741 = vmatpush.bf16.xpose.msra.mxu0 %v1651
    %1742 = vmatpush.bf16.xpose.msra.mxu0 %v1649
    %1743 = vmatpush.bf16.xpose.msra.mxu0 %v1647
    %1744 = vmatmul.bf16.gmra.mxu0 %v1495
    %v1745 = vpop.f32.mrf.mxu0
    %v1746 = vadd.f32 %v1732, %v1745
    %v1747 = vpop.f32.mrf.mxu0
    %v1748 = vadd.f32 %v1734, %v1747
    %1749 = vdwg.mxu0
    %v1750 = vadd.f32 %v196, %v1718
    %v1751 = vadd.f32 %v197, %v1746
    %v1752 = vadd.f32 %v198, %v1720
    %v1753 = vadd.f32 %v199, %v1748
    %v1754 = vadd.f32 %v1750, %v1751
    %1755 = vadd.xlane.f32.xlu0 %v1754
    %v1756 = vpop.xlane.xlu0 %1755
    %v1757 = vadd.f32 %v1752, %v1753
    %1758 = vadd.xlane.f32.xlu0 %v1757
    %v1759 = vpop.xlane.xlu0 %1758
    %v1760 = vrcp.pop 256.0
    %v1761 = vmul.f32 256.0, %v1760
    %v1762 = vsub.f32 1.0, %v1761
    %v1763 = vmul.f32 %v1760, %v1762
    %v1764 = vadd.f32 %v1760, %v1763
    %vm1765 = vweird.f32 %v1760
    %v1766 = vsel %vm1765, %v1760, %v1764
    %v1767 = vmul.f32 %v1756, %v1766
    %v1768 = vmul.f32 %v1759, %v1766
    %v1769 = vsub.f32 %v1750, %v1767
    %v1770 = vsub.f32 %v1751, %v1767
    %v1771 = vsub.f32 %v1752, %v1768
    %v1772 = vsub.f32 %v1753, %v1768
    %v1773 = vmul.f32 %v1769, %v1769
    %v1774 = vmul.f32 %v1770, %v1770
    %v1775 = vmul.f32 %v1771, %v1771
    %v1776 = vmul.f32 %v1772, %v1772
    %v1777 = vadd.f32 %v1773, %v1774
    %1778 = vadd.xlane.f32.xlu0 %v1777
    %v1779 = vpop.xlane.xlu0 %1778
    %v1780 = vadd.f32 %v1775, %v1776
    %1781 = vadd.xlane.f32.xlu0 %v1780
    %v1782 = vpop.xlane.xlu0 %1781
    %v1783 = vmul.f32 %v1779, %v1766
    %v1784 = vmul.f32 %v1782, %v1766
    %v1785 = vadd.f32 %v1783, 1e-05
    %v1786 = vadd.f32 %v1784, 1e-05
    %v1787 = vrsqrt.pop %v1785
    %v1788 = vmul.f32 %v1787, %v1785
    %v1789 = vmul.f32 %v1788, %v1787
    %v1790 = vmul.f32 0.5, %v1789
    %v1791 = vsub.f32 1.5, %v1790
    %v1792 = vmul.f32 %v1787, %v1791
    %vm1793 = vweird.f32 %v1785
    %vm1794 = vweird.f32 %v1787
    %vm1795 = vmor %vm1793, %vm1794
    %v1796 = vsel %vm1795, %v1787, %v1792
    %v1797 = vrsqrt.pop %v1786
    %v1798 = vmul.f32 %v1797, %v1786
    %v1799 = vmul.f32 %v1798, %v1797
    %v1800 = vmul.f32 0.5, %v1799
    %v1801 = vsub.f32 1.5, %v1800
    %v1802 = vmul.f32 %v1797, %v1801
    %vm1803 = vweird.f32 %v1786
    %vm1804 = vweird.f32 %v1797
    %vm1805 = vmor %vm1803, %vm1804
    %v1806 = vsel %vm1805, %v1797, %v1802
    %v1807 = vmul.f32 %v1769, %v1796
    %v1808 = vmul.f32 %v1770, %v1796
    %v1809 = vmul.f32 %v1771, %v1806
    %v1810 = vmul.f32 %v1772, %v1806
    %v1811 = vld [vmem:[#allocation8] sm:$0x3]
    %v1813 = vperm.slane %v1811, 0
    %v1814 = vperm.slane %v1811, 1
    %v1817 = vmul.f32 %v1807, %v1813
    %v1818 = vmul.f32 %v1808, %v1814
    %v1819 = vmul.f32 %v1809, %v1813
    %v1820 = vmul.f32 %v1810, %v1814
    %v1821 = vld [vmem:[#allocation10] sm:$0x3]
    %v1823 = vperm.slane %v1821, 0
    %v1824 = vperm.slane %v1821, 1
    %v1827 = vadd.f32 %v1817, %v1823
    %v1828 = vadd.f32 %v1818, %v1824
    %v1829 = vadd.f32 %v1819, %v1823
    %v1830 = vadd.f32 %v1820, %v1824
    %v1831 = vpack.c.bf16 %v1829, %v1827
    %v1832 = vpack.c.bf16 %v1830, %v1828
    %v1833 = vld [vmem:[#allocation11] sm:$0xff]
    %v1834 = vld [vmem:[#allocation11 + $0x8] sm:$0xff]
    %v1835 = vld [vmem:[#allocation11 + $0x10] sm:$0xff]
    %v1836 = vld [vmem:[#allocation11 + $0x18] sm:$0xff]
    %v1837 = vld [vmem:[#allocation11 + $0x20] sm:$0xff]
    %v1838 = vld [vmem:[#allocation11 + $0x28] sm:$0xff]
    %v1839 = vld [vmem:[#allocation11 + $0x30] sm:$0xff]
    %v1840 = vld [vmem:[#allocation11 + $0x38] sm:$0xff]
    %v1841 = vld [vmem:[#allocation11 + $0x40] sm:$0xff]
    %v1842 = vld [vmem:[#allocation11 + $0x48] sm:$0xff]
    %v1843 = vld [vmem:[#allocation11 + $0x50] sm:$0xff]
    %v1844 = vld [vmem:[#allocation11 + $0x58] sm:$0xff]
    %v1845 = vld [vmem:[#allocation11 + $0x60] sm:$0xff]
    %v1846 = vld [vmem:[#allocation11 + $0x68] sm:$0xff]
    %v1847 = vld [vmem:[#allocation11 + $0x70] sm:$0xff]
    %v1848 = vld [vmem:[#allocation11 + $0x78] sm:$0xff]
    %v1849 = vld [vmem:[#allocation11 + $0x80] sm:$0xff]
    %v1850 = vld [vmem:[#allocation11 + $0x88] sm:$0xff]
    %v1851 = vld [vmem:[#allocation11 + $0x90] sm:$0xff]
    %v1852 = vld [vmem:[#allocation11 + $0x98] sm:$0xff]
    %v1853 = vld [vmem:[#allocation11 + $0xa0] sm:$0xff]
    %v1854 = vld [vmem:[#allocation11 + $0xa8] sm:$0xff]
    %v1855 = vld [vmem:[#allocation11 + $0xb0] sm:$0xff]
    %v1856 = vld [vmem:[#allocation11 + $0xb8] sm:$0xff]
    %v1857 = vld [vmem:[#allocation11 + $0xc0] sm:$0xff]
    %v1858 = vld [vmem:[#allocation11 + $0xc8] sm:$0xff]
    %v1859 = vld [vmem:[#allocation11 + $0xd0] sm:$0xff]
    %v1860 = vld [vmem:[#allocation11 + $0xd8] sm:$0xff]
    %v1861 = vld [vmem:[#allocation11 + $0xe0] sm:$0xff]
    %v1862 = vld [vmem:[#allocation11 + $0xe8] sm:$0xff]
    %v1863 = vld [vmem:[#allocation11 + $0xf0] sm:$0xff]
    %v1864 = vld [vmem:[#allocation11 + $0xf8] sm:$0xff]
    %v1865 = vld [vmem:[#allocation11 + $0x100] sm:$0xff]
    %v1866 = vld [vmem:[#allocation11 + $0x108] sm:$0xff]
    %v1867 = vld [vmem:[#allocation11 + $0x110] sm:$0xff]
    %v1868 = vld [vmem:[#allocation11 + $0x118] sm:$0xff]
    %v1869 = vld [vmem:[#allocation11 + $0x120] sm:$0xff]
    %v1870 = vld [vmem:[#allocation11 + $0x128] sm:$0xff]
    %v1871 = vld [vmem:[#allocation11 + $0x130] sm:$0xff]
    %v1872 = vld [vmem:[#allocation11 + $0x138] sm:$0xff]
    %v1873 = vld [vmem:[#allocation11 + $0x140] sm:$0xff]
    %v1874 = vld [vmem:[#allocation11 + $0x148] sm:$0xff]
    %v1875 = vld [vmem:[#allocation11 + $0x150] sm:$0xff]
    %v1876 = vld [vmem:[#allocation11 + $0x158] sm:$0xff]
    %v1877 = vld [vmem:[#allocation11 + $0x160] sm:$0xff]
    %v1878 = vld [vmem:[#allocation11 + $0x168] sm:$0xff]
    %v1879 = vld [vmem:[#allocation11 + $0x170] sm:$0xff]
    %v1880 = vld [vmem:[#allocation11 + $0x178] sm:$0xff]
    %v1881 = vld [vmem:[#allocation11 + $0x180] sm:$0xff]
    %v1882 = vld [vmem:[#allocation11 + $0x188] sm:$0xff]
    %v1883 = vld [vmem:[#allocation11 + $0x190] sm:$0xff]
    %v1884 = vld [vmem:[#allocation11 + $0x198] sm:$0xff]
    %v1885 = vld [vmem:[#allocation11 + $0x1a0] sm:$0xff]
    %v1886 = vld [vmem:[#allocation11 + $0x1a8] sm:$0xff]
    %v1887 = vld [vmem:[#allocation11 + $0x1b0] sm:$0xff]
    %v1888 = vld [vmem:[#allocation11 + $0x1b8] sm:$0xff]
    %v1889 = vld [vmem:[#allocation11 + $0x1c0] sm:$0xff]
    %v1890 = vld [vmem:[#allocation11 + $0x1c8] sm:$0xff]
    %v1891 = vld [vmem:[#allocation11 + $0x1d0] sm:$0xff]
    %v1892 = vld [vmem:[#allocation11 + $0x1d8] sm:$0xff]
    %v1893 = vld [vmem:[#allocation11 + $0x1e0] sm:$0xff]
    %v1894 = vld [vmem:[#allocation11 + $0x1e8] sm:$0xff]
    %v1895 = vld [vmem:[#allocation11 + $0x1f0] sm:$0xff]
    %v1896 = vld [vmem:[#allocation11 + $0x1f8] sm:$0xff]
    %v1897 = vld [vmem:[#allocation11 + $0x200] sm:$0xff]
    %v1898 = vld [vmem:[#allocation11 + $0x208] sm:$0xff]
    %v1899 = vld [vmem:[#allocation11 + $0x210] sm:$0xff]
    %v1900 = vld [vmem:[#allocation11 + $0x218] sm:$0xff]
    %v1901 = vld [vmem:[#allocation11 + $0x220] sm:$0xff]
    %v1902 = vld [vmem:[#allocation11 + $0x228] sm:$0xff]
    %v1903 = vld [vmem:[#allocation11 + $0x230] sm:$0xff]
    %v1904 = vld [vmem:[#allocation11 + $0x238] sm:$0xff]
    %v1905 = vld [vmem:[#allocation11 + $0x240] sm:$0xff]
    %v1906 = vld [vmem:[#allocation11 + $0x248] sm:$0xff]
    %v1907 = vld [vmem:[#allocation11 + $0x250] sm:$0xff]
    %v1908 = vld [vmem:[#allocation11 + $0x258] sm:$0xff]
    %v1909 = vld [vmem:[#allocation11 + $0x260] sm:$0xff]
    %v1910 = vld [vmem:[#allocation11 + $0x268] sm:$0xff]
    %v1911 = vld [vmem:[#allocation11 + $0x270] sm:$0xff]
    %v1912 = vld [vmem:[#allocation11 + $0x278] sm:$0xff]
    %v1913 = vld [vmem:[#allocation11 + $0x280] sm:$0xff]
    %v1914 = vld [vmem:[#allocation11 + $0x288] sm:$0xff]
    %v1915 = vld [vmem:[#allocation11 + $0x290] sm:$0xff]
    %v1916 = vld [vmem:[#allocation11 + $0x298] sm:$0xff]
    %v1917 = vld [vmem:[#allocation11 + $0x2a0] sm:$0xff]
    %v1918 = vld [vmem:[#allocation11 + $0x2a8] sm:$0xff]
    %v1919 = vld [vmem:[#allocation11 + $0x2b0] sm:$0xff]
    %v1920 = vld [vmem:[#allocation11 + $0x2b8] sm:$0xff]
    %v1921 = vld [vmem:[#allocation11 + $0x2c0] sm:$0xff]
    %v1922 = vld [vmem:[#allocation11 + $0x2c8] sm:$0xff]
    %v1923 = vld [vmem:[#allocation11 + $0x2d0] sm:$0xff]
    %v1924 = vld [vmem:[#allocation11 + $0x2d8] sm:$0xff]
    %v1925 = vld [vmem:[#allocation11 + $0x2e0] sm:$0xff]
    %v1926 = vld [vmem:[#allocation11 + $0x2e8] sm:$0xff]
    %v1927 = vld [vmem:[#allocation11 + $0x2f0] sm:$0xff]
    %v1928 = vld [vmem:[#allocation11 + $0x2f8] sm:$0xff]
    %v1929 = vld [vmem:[#allocation11 + $0x300] sm:$0xff]
    %v1930 = vld [vmem:[#allocation11 + $0x308] sm:$0xff]
    %v1931 = vld [vmem:[#allocation11 + $0x310] sm:$0xff]
    %v1932 = vld [vmem:[#allocation11 + $0x318] sm:$0xff]
    %v1933 = vld [vmem:[#allocation11 + $0x320] sm:$0xff]
    %v1934 = vld [vmem:[#allocation11 + $0x328] sm:$0xff]
    %v1935 = vld [vmem:[#allocation11 + $0x330] sm:$0xff]
    %v1936 = vld [vmem:[#allocation11 + $0x338] sm:$0xff]
    %v1937 = vld [vmem:[#allocation11 + $0x340] sm:$0xff]
    %v1938 = vld [vmem:[#allocation11 + $0x348] sm:$0xff]
    %v1939 = vld [vmem:[#allocation11 + $0x350] sm:$0xff]
    %v1940 = vld [vmem:[#allocation11 + $0x358] sm:$0xff]
    %v1941 = vld [vmem:[#allocation11 + $0x360] sm:$0xff]
    %v1942 = vld [vmem:[#allocation11 + $0x368] sm:$0xff]
    %v1943 = vld [vmem:[#allocation11 + $0x370] sm:$0xff]
    %v1944 = vld [vmem:[#allocation11 + $0x378] sm:$0xff]
    %v1945 = vld [vmem:[#allocation11 + $0x380] sm:$0xff]
    %v1946 = vld [vmem:[#allocation11 + $0x388] sm:$0xff]
    %v1947 = vld [vmem:[#allocation11 + $0x390] sm:$0xff]
    %v1948 = vld [vmem:[#allocation11 + $0x398] sm:$0xff]
    %v1949 = vld [vmem:[#allocation11 + $0x3a0] sm:$0xff]
    %v1950 = vld [vmem:[#allocation11 + $0x3a8] sm:$0xff]
    %v1951 = vld [vmem:[#allocation11 + $0x3b0] sm:$0xff]
    %v1952 = vld [vmem:[#allocation11 + $0x3b8] sm:$0xff]
    %v1953 = vld [vmem:[#allocation11 + $0x3c0] sm:$0xff]
    %v1954 = vld [vmem:[#allocation11 + $0x3c8] sm:$0xff]
    %v1955 = vld [vmem:[#allocation11 + $0x3d0] sm:$0xff]
    %v1956 = vld [vmem:[#allocation11 + $0x3d8] sm:$0xff]
    %v1957 = vld [vmem:[#allocation11 + $0x3e0] sm:$0xff]
    %v1958 = vld [vmem:[#allocation11 + $0x3e8] sm:$0xff]
    %v1959 = vld [vmem:[#allocation11 + $0x3f0] sm:$0xff]
    %v1960 = vld [vmem:[#allocation11 + $0x3f8] sm:$0xff]
    %v1961 = vld [vmem:[#allocation11 + $0x400] sm:$0xff]
    %v1962 = vld [vmem:[#allocation11 + $0x408] sm:$0xff]
    %v1963 = vld [vmem:[#allocation11 + $0x410] sm:$0xff]
    %v1964 = vld [vmem:[#allocation11 + $0x418] sm:$0xff]
    %v1965 = vld [vmem:[#allocation11 + $0x420] sm:$0xff]
    %v1966 = vld [vmem:[#allocation11 + $0x428] sm:$0xff]
    %v1967 = vld [vmem:[#allocation11 + $0x430] sm:$0xff]
    %v1968 = vld [vmem:[#allocation11 + $0x438] sm:$0xff]
    %v1969 = vld [vmem:[#allocation11 + $0x440] sm:$0xff]
    %v1970 = vld [vmem:[#allocation11 + $0x448] sm:$0xff]
    %v1971 = vld [vmem:[#allocation11 + $0x450] sm:$0xff]
    %v1972 = vld [vmem:[#allocation11 + $0x458] sm:$0xff]
    %v1973 = vld [vmem:[#allocation11 + $0x460] sm:$0xff]
    %v1974 = vld [vmem:[#allocation11 + $0x468] sm:$0xff]
    %v1975 = vld [vmem:[#allocation11 + $0x470] sm:$0xff]
    %v1976 = vld [vmem:[#allocation11 + $0x478] sm:$0xff]
    %v1977 = vld [vmem:[#allocation11 + $0x480] sm:$0xff]
    %v1978 = vld [vmem:[#allocation11 + $0x488] sm:$0xff]
    %v1979 = vld [vmem:[#allocation11 + $0x490] sm:$0xff]
    %v1980 = vld [vmem:[#allocation11 + $0x498] sm:$0xff]
    %v1981 = vld [vmem:[#allocation11 + $0x4a0] sm:$0xff]
    %v1982 = vld [vmem:[#allocation11 + $0x4a8] sm:$0xff]
    %v1983 = vld [vmem:[#allocation11 + $0x4b0] sm:$0xff]
    %v1984 = vld [vmem:[#allocation11 + $0x4b8] sm:$0xff]
    %v1985 = vld [vmem:[#allocation11 + $0x4c0] sm:$0xff]
    %v1986 = vld [vmem:[#allocation11 + $0x4c8] sm:$0xff]
    %v1987 = vld [vmem:[#allocation11 + $0x4d0] sm:$0xff]
    %v1988 = vld [vmem:[#allocation11 + $0x4d8] sm:$0xff]
    %v1989 = vld [vmem:[#allocation11 + $0x4e0] sm:$0xff]
    %v1990 = vld [vmem:[#allocation11 + $0x4e8] sm:$0xff]
    %v1991 = vld [vmem:[#allocation11 + $0x4f0] sm:$0xff]
    %v1992 = vld [vmem:[#allocation11 + $0x4f8] sm:$0xff]
    %v1993 = vld [vmem:[#allocation11 + $0x500] sm:$0xff]
    %v1994 = vld [vmem:[#allocation11 + $0x508] sm:$0xff]
    %v1995 = vld [vmem:[#allocation11 + $0x510] sm:$0xff]
    %v1996 = vld [vmem:[#allocation11 + $0x518] sm:$0xff]
    %v1997 = vld [vmem:[#allocation11 + $0x520] sm:$0xff]
    %v1998 = vld [vmem:[#allocation11 + $0x528] sm:$0xff]
    %v1999 = vld [vmem:[#allocation11 + $0x530] sm:$0xff]
    %v2000 = vld [vmem:[#allocation11 + $0x538] sm:$0xff]
    %v2001 = vld [vmem:[#allocation11 + $0x540] sm:$0xff]
    %v2002 = vld [vmem:[#allocation11 + $0x548] sm:$0xff]
    %v2003 = vld [vmem:[#allocation11 + $0x550] sm:$0xff]
    %v2004 = vld [vmem:[#allocation11 + $0x558] sm:$0xff]
    %v2005 = vld [vmem:[#allocation11 + $0x560] sm:$0xff]
    %v2006 = vld [vmem:[#allocation11 + $0x568] sm:$0xff]
    %v2007 = vld [vmem:[#allocation11 + $0x570] sm:$0xff]
    %v2008 = vld [vmem:[#allocation11 + $0x578] sm:$0xff]
    %v2009 = vld [vmem:[#allocation11 + $0x580] sm:$0xff]
    %v2010 = vld [vmem:[#allocation11 + $0x588] sm:$0xff]
    %v2011 = vld [vmem:[#allocation11 + $0x590] sm:$0xff]
    %v2012 = vld [vmem:[#allocation11 + $0x598] sm:$0xff]
    %v2013 = vld [vmem:[#allocation11 + $0x5a0] sm:$0xff]
    %v2014 = vld [vmem:[#allocation11 + $0x5a8] sm:$0xff]
    %v2015 = vld [vmem:[#allocation11 + $0x5b0] sm:$0xff]
    %v2016 = vld [vmem:[#allocation11 + $0x5b8] sm:$0xff]
    %v2017 = vld [vmem:[#allocation11 + $0x5c0] sm:$0xff]
    %v2018 = vld [vmem:[#allocation11 + $0x5c8] sm:$0xff]
    %v2019 = vld [vmem:[#allocation11 + $0x5d0] sm:$0xff]
    %v2020 = vld [vmem:[#allocation11 + $0x5d8] sm:$0xff]
    %v2021 = vld [vmem:[#allocation11 + $0x5e0] sm:$0xff]
    %v2022 = vld [vmem:[#allocation11 + $0x5e8] sm:$0xff]
    %v2023 = vld [vmem:[#allocation11 + $0x5f0] sm:$0xff]
    %v2024 = vld [vmem:[#allocation11 + $0x5f8] sm:$0xff]
    %v2025 = vld [vmem:[#allocation11 + $0x600] sm:$0xff]
    %v2026 = vld [vmem:[#allocation11 + $0x608] sm:$0xff]
    %v2027 = vld [vmem:[#allocation11 + $0x610] sm:$0xff]
    %v2028 = vld [vmem:[#allocation11 + $0x618] sm:$0xff]
    %v2029 = vld [vmem:[#allocation11 + $0x620] sm:$0xff]
    %v2030 = vld [vmem:[#allocation11 + $0x628] sm:$0xff]
    %v2031 = vld [vmem:[#allocation11 + $0x630] sm:$0xff]
    %v2032 = vld [vmem:[#allocation11 + $0x638] sm:$0xff]
    %v2033 = vld [vmem:[#allocation11 + $0x640] sm:$0xff]
    %v2034 = vld [vmem:[#allocation11 + $0x648] sm:$0xff]
    %v2035 = vld [vmem:[#allocation11 + $0x650] sm:$0xff]
    %v2036 = vld [vmem:[#allocation11 + $0x658] sm:$0xff]
    %v2037 = vld [vmem:[#allocation11 + $0x660] sm:$0xff]
    %v2038 = vld [vmem:[#allocation11 + $0x668] sm:$0xff]
    %v2039 = vld [vmem:[#allocation11 + $0x670] sm:$0xff]
    %v2040 = vld [vmem:[#allocation11 + $0x678] sm:$0xff]
    %v2041 = vld [vmem:[#allocation11 + $0x680] sm:$0xff]
    %v2042 = vld [vmem:[#allocation11 + $0x688] sm:$0xff]
    %v2043 = vld [vmem:[#allocation11 + $0x690] sm:$0xff]
    %v2044 = vld [vmem:[#allocation11 + $0x698] sm:$0xff]
    %v2045 = vld [vmem:[#allocation11 + $0x6a0] sm:$0xff]
    %v2046 = vld [vmem:[#allocation11 + $0x6a8] sm:$0xff]
    %v2047 = vld [vmem:[#allocation11 + $0x6b0] sm:$0xff]
    %v2048 = vld [vmem:[#allocation11 + $0x6b8] sm:$0xff]
    %v2049 = vld [vmem:[#allocation11 + $0x6c0] sm:$0xff]
    %v2050 = vld [vmem:[#allocation11 + $0x6c8] sm:$0xff]
    %v2051 = vld [vmem:[#allocation11 + $0x6d0] sm:$0xff]
    %v2052 = vld [vmem:[#allocation11 + $0x6d8] sm:$0xff]
    %v2053 = vld [vmem:[#allocation11 + $0x6e0] sm:$0xff]
    %v2054 = vld [vmem:[#allocation11 + $0x6e8] sm:$0xff]
    %v2055 = vld [vmem:[#allocation11 + $0x6f0] sm:$0xff]
    %v2056 = vld [vmem:[#allocation11 + $0x6f8] sm:$0xff]
    %v2057 = vld [vmem:[#allocation11 + $0x700] sm:$0xff]
    %v2058 = vld [vmem:[#allocation11 + $0x708] sm:$0xff]
    %v2059 = vld [vmem:[#allocation11 + $0x710] sm:$0xff]
    %v2060 = vld [vmem:[#allocation11 + $0x718] sm:$0xff]
    %v2061 = vld [vmem:[#allocation11 + $0x720] sm:$0xff]
    %v2062 = vld [vmem:[#allocation11 + $0x728] sm:$0xff]
    %v2063 = vld [vmem:[#allocation11 + $0x730] sm:$0xff]
    %v2064 = vld [vmem:[#allocation11 + $0x738] sm:$0xff]
    %v2065 = vld [vmem:[#allocation11 + $0x740] sm:$0xff]
    %v2066 = vld [vmem:[#allocation11 + $0x748] sm:$0xff]
    %v2067 = vld [vmem:[#allocation11 + $0x750] sm:$0xff]
    %v2068 = vld [vmem:[#allocation11 + $0x758] sm:$0xff]
    %v2069 = vld [vmem:[#allocation11 + $0x760] sm:$0xff]
    %v2070 = vld [vmem:[#allocation11 + $0x768] sm:$0xff]
    %v2071 = vld [vmem:[#allocation11 + $0x770] sm:$0xff]
    %v2072 = vld [vmem:[#allocation11 + $0x778] sm:$0xff]
    %v2073 = vld [vmem:[#allocation11 + $0x780] sm:$0xff]
    %v2074 = vld [vmem:[#allocation11 + $0x788] sm:$0xff]
    %v2075 = vld [vmem:[#allocation11 + $0x790] sm:$0xff]
    %v2076 = vld [vmem:[#allocation11 + $0x798] sm:$0xff]
    %v2077 = vld [vmem:[#allocation11 + $0x7a0] sm:$0xff]
    %v2078 = vld [vmem:[#allocation11 + $0x7a8] sm:$0xff]
    %v2079 = vld [vmem:[#allocation11 + $0x7b0] sm:$0xff]
    %v2080 = vld [vmem:[#allocation11 + $0x7b8] sm:$0xff]
    %v2081 = vld [vmem:[#allocation11 + $0x7c0] sm:$0xff]
    %v2082 = vld [vmem:[#allocation11 + $0x7c8] sm:$0xff]
    %v2083 = vld [vmem:[#allocation11 + $0x7d0] sm:$0xff]
    %v2084 = vld [vmem:[#allocation11 + $0x7d8] sm:$0xff]
    %v2085 = vld [vmem:[#allocation11 + $0x7e0] sm:$0xff]
    %v2086 = vld [vmem:[#allocation11 + $0x7e8] sm:$0xff]
    %v2087 = vld [vmem:[#allocation11 + $0x7f0] sm:$0xff]
    %v2088 = vld [vmem:[#allocation11 + $0x7f8] sm:$0xff]
    %v2089 = vld [vmem:[%s10] sm:$0xff]
    %v2090 = vld [vmem:[%s10 + $0x8] sm:$0xff]
    %v2093 = vperm.slane %v2089, 0
    %v2094 = vperm.slane %v2089, 1
    %v2095 = vperm.slane %v2089, 2
    %v2096 = vperm.slane %v2089, 3
    %v2097 = vperm.slane %v2089, 4
    %v2098 = vperm.slane %v2089, 5
    %v2099 = vperm.slane %v2089, 6
    %v2100 = vperm.slane %v2089, 7
    %v2101 = vperm.slane %v2090, 0
    %v2102 = vperm.slane %v2090, 1
    %v2103 = vperm.slane %v2090, 2
    %v2104 = vperm.slane %v2090, 3
    %v2105 = vperm.slane %v2090, 4
    %v2106 = vperm.slane %v2090, 5
    %v2107 = vperm.slane %v2090, 6
    %v2108 = vperm.slane %v2090, 7
    %v2381 = vunpack.c.l.b16 %v1833
    %v2382 = vunpack.c.h.b16 %v1833
    %v2383 = vunpack.c.l.b16 %v1834
    %v2384 = vunpack.c.h.b16 %v1834
    %v2385 = vunpack.c.l.b16 %v1835
    %v2386 = vunpack.c.h.b16 %v1835
    %v2387 = vunpack.c.l.b16 %v1836
    %v2388 = vunpack.c.h.b16 %v1836
    %v2389 = vunpack.c.l.b16 %v1837
    %v2390 = vunpack.c.h.b16 %v1837
    %v2391 = vunpack.c.l.b16 %v1838
    %v2392 = vunpack.c.h.b16 %v1838
    %v2393 = vunpack.c.l.b16 %v1839
    %v2394 = vunpack.c.h.b16 %v1839
    %v2395 = vunpack.c.l.b16 %v1840
    %v2396 = vunpack.c.h.b16 %v1840
    %v2397 = vunpack.c.l.b16 %v1841
    %v2398 = vunpack.c.h.b16 %v1841
    %v2399 = vunpack.c.l.b16 %v1842
    %v2400 = vunpack.c.h.b16 %v1842
    %v2401 = vunpack.c.l.b16 %v1843
    %v2402 = vunpack.c.h.b16 %v1843
    %v2403 = vunpack.c.l.b16 %v1844
    %v2404 = vunpack.c.h.b16 %v1844
    %v2405 = vunpack.c.l.b16 %v1845
    %v2406 = vunpack.c.h.b16 %v1845
    %v2407 = vunpack.c.l.b16 %v1846
    %v2408 = vunpack.c.h.b16 %v1846
    %v2409 = vunpack.c.l.b16 %v1847
    %v2410 = vunpack.c.h.b16 %v1847
    %v2411 = vunpack.c.l.b16 %v1848
    %v2412 = vunpack.c.h.b16 %v1848
    %v2413 = vunpack.c.l.b16 %v1849
    %v2414 = vunpack.c.h.b16 %v1849
    %v2415 = vunpack.c.l.b16 %v1850
    %v2416 = vunpack.c.h.b16 %v1850
    %v2417 = vunpack.c.l.b16 %v1851
    %v2418 = vunpack.c.h.b16 %v1851
    %v2419 = vunpack.c.l.b16 %v1852
    %v2420 = vunpack.c.h.b16 %v1852
    %v2421 = vunpack.c.l.b16 %v1853
    %v2422 = vunpack.c.h.b16 %v1853
    %v2423 = vunpack.c.l.b16 %v1854
    %v2424 = vunpack.c.h.b16 %v1854
    %v2425 = vunpack.c.l.b16 %v1855
    %v2426 = vunpack.c.h.b16 %v1855
    %v2427 = vunpack.c.l.b16 %v1856
    %v2428 = vunpack.c.h.b16 %v1856
    %v2429 = vunpack.c.l.b16 %v1857
    %v2430 = vunpack.c.h.b16 %v1857
    %v2431 = vunpack.c.l.b16 %v1858
    %v2432 = vunpack.c.h.b16 %v1858
    %v2433 = vunpack.c.l.b16 %v1859
    %v2434 = vunpack.c.h.b16 %v1859
    %v2435 = vunpack.c.l.b16 %v1860
    %v2436 = vunpack.c.h.b16 %v1860
    %v2437 = vunpack.c.l.b16 %v1861
    %v2438 = vunpack.c.h.b16 %v1861
    %v2439 = vunpack.c.l.b16 %v1862
    %v2440 = vunpack.c.h.b16 %v1862
    %v2441 = vunpack.c.l.b16 %v1863
    %v2442 = vunpack.c.h.b16 %v1863
    %v2443 = vunpack.c.l.b16 %v1864
    %v2444 = vunpack.c.h.b16 %v1864
    %v2445 = vunpack.c.l.b16 %v1865
    %v2446 = vunpack.c.h.b16 %v1865
    %v2447 = vunpack.c.l.b16 %v1866
    %v2448 = vunpack.c.h.b16 %v1866
    %v2449 = vunpack.c.l.b16 %v1867
    %v2450 = vunpack.c.h.b16 %v1867
    %v2451 = vunpack.c.l.b16 %v1868
    %v2452 = vunpack.c.h.b16 %v1868
    %v2453 = vunpack.c.l.b16 %v1869
    %v2454 = vunpack.c.h.b16 %v1869
    %v2455 = vunpack.c.l.b16 %v1870
    %v2456 = vunpack.c.h.b16 %v1870
    %v2457 = vunpack.c.l.b16 %v1871
    %v2458 = vunpack.c.h.b16 %v1871
    %v2459 = vunpack.c.l.b16 %v1872
    %v2460 = vunpack.c.h.b16 %v1872
    %v2461 = vunpack.c.l.b16 %v1873
    %v2462 = vunpack.c.h.b16 %v1873
    %v2463 = vunpack.c.l.b16 %v1874
    %v2464 = vunpack.c.h.b16 %v1874
    %v2465 = vunpack.c.l.b16 %v1875
    %v2466 = vunpack.c.h.b16 %v1875
    %v2467 = vunpack.c.l.b16 %v1876
    %v2468 = vunpack.c.h.b16 %v1876
    %v2469 = vunpack.c.l.b16 %v1877
    %v2470 = vunpack.c.h.b16 %v1877
    %v2471 = vunpack.c.l.b16 %v1878
    %v2472 = vunpack.c.h.b16 %v1878
    %v2473 = vunpack.c.l.b16 %v1879
    %v2474 = vunpack.c.h.b16 %v1879
    %v2475 = vunpack.c.l.b16 %v1880
    %v2476 = vunpack.c.h.b16 %v1880
    %v2477 = vunpack.c.l.b16 %v1881
    %v2478 = vunpack.c.h.b16 %v1881
    %v2479 = vunpack.c.l.b16 %v1882
    %v2480 = vunpack.c.h.b16 %v1882
    %v2481 = vunpack.c.l.b16 %v1883
    %v2482 = vunpack.c.h.b16 %v1883
    %v2483 = vunpack.c.l.b16 %v1884
    %v2484 = vunpack.c.h.b16 %v1884
    %v2485 = vunpack.c.l.b16 %v1885
    %v2486 = vunpack.c.h.b16 %v1885
    %v2487 = vunpack.c.l.b16 %v1886
    %v2488 = vunpack.c.h.b16 %v1886
    %v2489 = vunpack.c.l.b16 %v1887
    %v2490 = vunpack.c.h.b16 %v1887
    %v2491 = vunpack.c.l.b16 %v1888
    %v2492 = vunpack.c.h.b16 %v1888
    %v2493 = vunpack.c.l.b16 %v1889
    %v2494 = vunpack.c.h.b16 %v1889
    %v2495 = vunpack.c.l.b16 %v1890
    %v2496 = vunpack.c.h.b16 %v1890
    %v2497 = vunpack.c.l.b16 %v1891
    %v2498 = vunpack.c.h.b16 %v1891
    %v2499 = vunpack.c.l.b16 %v1892
    %v2500 = vunpack.c.h.b16 %v1892
    %v2501 = vunpack.c.l.b16 %v1893
    %v2502 = vunpack.c.h.b16 %v1893
    %v2503 = vunpack.c.l.b16 %v1894
    %v2504 = vunpack.c.h.b16 %v1894
    %v2505 = vunpack.c.l.b16 %v1895
    %v2506 = vunpack.c.h.b16 %v1895
    %v2507 = vunpack.c.l.b16 %v1896
    %v2508 = vunpack.c.h.b16 %v1896
    %v2509 = vunpack.c.l.b16 %v1897
    %v2510 = vunpack.c.h.b16 %v1897
    %v2511 = vunpack.c.l.b16 %v1898
    %v2512 = vunpack.c.h.b16 %v1898
    %v2513 = vunpack.c.l.b16 %v1899
    %v2514 = vunpack.c.h.b16 %v1899
    %v2515 = vunpack.c.l.b16 %v1900
    %v2516 = vunpack.c.h.b16 %v1900
    %v2517 = vunpack.c.l.b16 %v1901
    %v2518 = vunpack.c.h.b16 %v1901
    %v2519 = vunpack.c.l.b16 %v1902
    %v2520 = vunpack.c.h.b16 %v1902
    %v2521 = vunpack.c.l.b16 %v1903
    %v2522 = vunpack.c.h.b16 %v1903
    %v2523 = vunpack.c.l.b16 %v1904
    %v2524 = vunpack.c.h.b16 %v1904
    %v2525 = vunpack.c.l.b16 %v1905
    %v2526 = vunpack.c.h.b16 %v1905
    %v2527 = vunpack.c.l.b16 %v1906
    %v2528 = vunpack.c.h.b16 %v1906
    %v2529 = vunpack.c.l.b16 %v1907
    %v2530 = vunpack.c.h.b16 %v1907
    %v2531 = vunpack.c.l.b16 %v1908
    %v2532 = vunpack.c.h.b16 %v1908
    %v2533 = vunpack.c.l.b16 %v1909
    %v2534 = vunpack.c.h.b16 %v1909
    %v2535 = vunpack.c.l.b16 %v1910
    %v2536 = vunpack.c.h.b16 %v1910
    %v2537 = vunpack.c.l.b16 %v1911
    %v2538 = vunpack.c.h.b16 %v1911
    %v2539 = vunpack.c.l.b16 %v1912
    %v2540 = vunpack.c.h.b16 %v1912
    %v2541 = vunpack.c.l.b16 %v1913
    %v2542 = vunpack.c.h.b16 %v1913
    %v2543 = vunpack.c.l.b16 %v1914
    %v2544 = vunpack.c.h.b16 %v1914
    %v2545 = vunpack.c.l.b16 %v1915
    %v2546 = vunpack.c.h.b16 %v1915
    %v2547 = vunpack.c.l.b16 %v1916
    %v2548 = vunpack.c.h.b16 %v1916
    %v2549 = vunpack.c.l.b16 %v1917
    %v2550 = vunpack.c.h.b16 %v1917
    %v2551 = vunpack.c.l.b16 %v1918
    %v2552 = vunpack.c.h.b16 %v1918
    %v2553 = vunpack.c.l.b16 %v1919
    %v2554 = vunpack.c.h.b16 %v1919
    %v2555 = vunpack.c.l.b16 %v1920
    %v2556 = vunpack.c.h.b16 %v1920
    %v2557 = vunpack.c.l.b16 %v1921
    %v2558 = vunpack.c.h.b16 %v1921
    %v2559 = vunpack.c.l.b16 %v1922
    %v2560 = vunpack.c.h.b16 %v1922
    %v2561 = vunpack.c.l.b16 %v1923
    %v2562 = vunpack.c.h.b16 %v1923
    %v2563 = vunpack.c.l.b16 %v1924
    %v2564 = vunpack.c.h.b16 %v1924
    %v2565 = vunpack.c.l.b16 %v1925
    %v2566 = vunpack.c.h.b16 %v1925
    %v2567 = vunpack.c.l.b16 %v1926
    %v2568 = vunpack.c.h.b16 %v1926
    %v2569 = vunpack.c.l.b16 %v1927
    %v2570 = vunpack.c.h.b16 %v1927
    %v2571 = vunpack.c.l.b16 %v1928
    %v2572 = vunpack.c.h.b16 %v1928
    %v2573 = vunpack.c.l.b16 %v1929
    %v2574 = vunpack.c.h.b16 %v1929
    %v2575 = vunpack.c.l.b16 %v1930
    %v2576 = vunpack.c.h.b16 %v1930
    %v2577 = vunpack.c.l.b16 %v1931
    %v2578 = vunpack.c.h.b16 %v1931
    %v2579 = vunpack.c.l.b16 %v1932
    %v2580 = vunpack.c.h.b16 %v1932
    %v2581 = vunpack.c.l.b16 %v1933
    %v2582 = vunpack.c.h.b16 %v1933
    %v2583 = vunpack.c.l.b16 %v1934
    %v2584 = vunpack.c.h.b16 %v1934
    %v2585 = vunpack.c.l.b16 %v1935
    %v2586 = vunpack.c.h.b16 %v1935
    %v2587 = vunpack.c.l.b16 %v1936
    %v2588 = vunpack.c.h.b16 %v1936
    %v2589 = vunpack.c.l.b16 %v1937
    %v2590 = vunpack.c.h.b16 %v1937
    %v2591 = vunpack.c.l.b16 %v1938
    %v2592 = vunpack.c.h.b16 %v1938
    %v2593 = vunpack.c.l.b16 %v1939
    %v2594 = vunpack.c.h.b16 %v1939
    %v2595 = vunpack.c.l.b16 %v1940
    %v2596 = vunpack.c.h.b16 %v1940
    %v2597 = vunpack.c.l.b16 %v1941
    %v2598 = vunpack.c.h.b16 %v1941
    %v2599 = vunpack.c.l.b16 %v1942
    %v2600 = vunpack.c.h.b16 %v1942
    %v2601 = vunpack.c.l.b16 %v1943
    %v2602 = vunpack.c.h.b16 %v1943
    %v2603 = vunpack.c.l.b16 %v1944
    %v2604 = vunpack.c.h.b16 %v1944
    %v2605 = vunpack.c.l.b16 %v1945
    %v2606 = vunpack.c.h.b16 %v1945
    %v2607 = vunpack.c.l.b16 %v1946
    %v2608 = vunpack.c.h.b16 %v1946
    %v2609 = vunpack.c.l.b16 %v1947
    %v2610 = vunpack.c.h.b16 %v1947
    %v2611 = vunpack.c.l.b16 %v1948
    %v2612 = vunpack.c.h.b16 %v1948
    %v2613 = vunpack.c.l.b16 %v1949
    %v2614 = vunpack.c.h.b16 %v1949
    %v2615 = vunpack.c.l.b16 %v1950
    %v2616 = vunpack.c.h.b16 %v1950
    %v2617 = vunpack.c.l.b16 %v1951
    %v2618 = vunpack.c.h.b16 %v1951
    %v2619 = vunpack.c.l.b16 %v1952
    %v2620 = vunpack.c.h.b16 %v1952
    %v2621 = vunpack.c.l.b16 %v1953
    %v2622 = vunpack.c.h.b16 %v1953
    %v2623 = vunpack.c.l.b16 %v1954
    %v2624 = vunpack.c.h.b16 %v1954
    %v2625 = vunpack.c.l.b16 %v1955
    %v2626 = vunpack.c.h.b16 %v1955
    %v2627 = vunpack.c.l.b16 %v1956
    %v2628 = vunpack.c.h.b16 %v1956
    %v2629 = vunpack.c.l.b16 %v1957
    %v2630 = vunpack.c.h.b16 %v1957
    %v2631 = vunpack.c.l.b16 %v1958
    %v2632 = vunpack.c.h.b16 %v1958
    %v2633 = vunpack.c.l.b16 %v1959
    %v2634 = vunpack.c.h.b16 %v1959
    %v2635 = vunpack.c.l.b16 %v1960
    %v2636 = vunpack.c.h.b16 %v1960
    %v2637 = vunpack.c.l.b16 %v1961
    %v2638 = vunpack.c.h.b16 %v1961
    %v2639 = vunpack.c.l.b16 %v1962
    %v2640 = vunpack.c.h.b16 %v1962
    %v2641 = vunpack.c.l.b16 %v1963
    %v2642 = vunpack.c.h.b16 %v1963
    %v2643 = vunpack.c.l.b16 %v1964
    %v2644 = vunpack.c.h.b16 %v1964
    %v2645 = vunpack.c.l.b16 %v1965
    %v2646 = vunpack.c.h.b16 %v1965
    %v2647 = vunpack.c.l.b16 %v1966
    %v2648 = vunpack.c.h.b16 %v1966
    %v2649 = vunpack.c.l.b16 %v1967
    %v2650 = vunpack.c.h.b16 %v1967
    %v2651 = vunpack.c.l.b16 %v1968
    %v2652 = vunpack.c.h.b16 %v1968
    %v2653 = vunpack.c.l.b16 %v1969
    %v2654 = vunpack.c.h.b16 %v1969
    %v2655 = vunpack.c.l.b16 %v1970
    %v2656 = vunpack.c.h.b16 %v1970
    %v2657 = vunpack.c.l.b16 %v1971
    %v2658 = vunpack.c.h.b16 %v1971
    %v2659 = vunpack.c.l.b16 %v1972
    %v2660 = vunpack.c.h.b16 %v1972
    %v2661 = vunpack.c.l.b16 %v1973
    %v2662 = vunpack.c.h.b16 %v1973
    %v2663 = vunpack.c.l.b16 %v1974
    %v2664 = vunpack.c.h.b16 %v1974
    %v2665 = vunpack.c.l.b16 %v1975
    %v2666 = vunpack.c.h.b16 %v1975
    %v2667 = vunpack.c.l.b16 %v1976
    %v2668 = vunpack.c.h.b16 %v1976
    %v2669 = vunpack.c.l.b16 %v1977
    %v2670 = vunpack.c.h.b16 %v1977
    %v2671 = vunpack.c.l.b16 %v1978
    %v2672 = vunpack.c.h.b16 %v1978
    %v2673 = vunpack.c.l.b16 %v1979
    %v2674 = vunpack.c.h.b16 %v1979
    %v2675 = vunpack.c.l.b16 %v1980
    %v2676 = vunpack.c.h.b16 %v1980
    %v2677 = vunpack.c.l.b16 %v1981
    %v2678 = vunpack.c.h.b16 %v1981
    %v2679 = vunpack.c.l.b16 %v1982
    %v2680 = vunpack.c.h.b16 %v1982
    %v2681 = vunpack.c.l.b16 %v1983
    %v2682 = vunpack.c.h.b16 %v1983
    %v2683 = vunpack.c.l.b16 %v1984
    %v2684 = vunpack.c.h.b16 %v1984
    %v2685 = vunpack.c.l.b16 %v1985
    %v2686 = vunpack.c.h.b16 %v1985
    %v2687 = vunpack.c.l.b16 %v1986
    %v2688 = vunpack.c.h.b16 %v1986
    %v2689 = vunpack.c.l.b16 %v1987
    %v2690 = vunpack.c.h.b16 %v1987
    %v2691 = vunpack.c.l.b16 %v1988
    %v2692 = vunpack.c.h.b16 %v1988
    %v2693 = vunpack.c.l.b16 %v1989
    %v2694 = vunpack.c.h.b16 %v1989
    %v2695 = vunpack.c.l.b16 %v1990
    %v2696 = vunpack.c.h.b16 %v1990
    %v2697 = vunpack.c.l.b16 %v1991
    %v2698 = vunpack.c.h.b16 %v1991
    %v2699 = vunpack.c.l.b16 %v1992
    %v2700 = vunpack.c.h.b16 %v1992
    %v2701 = vunpack.c.l.b16 %v1993
    %v2702 = vunpack.c.h.b16 %v1993
    %v2703 = vunpack.c.l.b16 %v1994
    %v2704 = vunpack.c.h.b16 %v1994
    %v2705 = vunpack.c.l.b16 %v1995
    %v2706 = vunpack.c.h.b16 %v1995
    %v2707 = vunpack.c.l.b16 %v1996
    %v2708 = vunpack.c.h.b16 %v1996
    %v2709 = vunpack.c.l.b16 %v1997
    %v2710 = vunpack.c.h.b16 %v1997
    %v2711 = vunpack.c.l.b16 %v1998
    %v2712 = vunpack.c.h.b16 %v1998
    %v2713 = vunpack.c.l.b16 %v1999
    %v2714 = vunpack.c.h.b16 %v1999
    %v2715 = vunpack.c.l.b16 %v2000
    %v2716 = vunpack.c.h.b16 %v2000
    %v2717 = vunpack.c.l.b16 %v2001
    %v2718 = vunpack.c.h.b16 %v2001
    %v2719 = vunpack.c.l.b16 %v2002
    %v2720 = vunpack.c.h.b16 %v2002
    %v2721 = vunpack.c.l.b16 %v2003
    %v2722 = vunpack.c.h.b16 %v2003
    %v2723 = vunpack.c.l.b16 %v2004
    %v2724 = vunpack.c.h.b16 %v2004
    %v2725 = vunpack.c.l.b16 %v2005
    %v2726 = vunpack.c.h.b16 %v2005
    %v2727 = vunpack.c.l.b16 %v2006
    %v2728 = vunpack.c.h.b16 %v2006
    %v2729 = vunpack.c.l.b16 %v2007
    %v2730 = vunpack.c.h.b16 %v2007
    %v2731 = vunpack.c.l.b16 %v2008
    %v2732 = vunpack.c.h.b16 %v2008
    %v2733 = vunpack.c.l.b16 %v2009
    %v2734 = vunpack.c.h.b16 %v2009
    %v2735 = vunpack.c.l.b16 %v2010
    %v2736 = vunpack.c.h.b16 %v2010
    %v2737 = vunpack.c.l.b16 %v2011
    %v2738 = vunpack.c.h.b16 %v2011
    %v2739 = vunpack.c.l.b16 %v2012
    %v2740 = vunpack.c.h.b16 %v2012
    %v2741 = vunpack.c.l.b16 %v2013
    %v2742 = vunpack.c.h.b16 %v2013
    %v2743 = vunpack.c.l.b16 %v2014
    %v2744 = vunpack.c.h.b16 %v2014
    %v2745 = vunpack.c.l.b16 %v2015
    %v2746 = vunpack.c.h.b16 %v2015
    %v2747 = vunpack.c.l.b16 %v2016
    %v2748 = vunpack.c.h.b16 %v2016
    %v2749 = vunpack.c.l.b16 %v2017
    %v2750 = vunpack.c.h.b16 %v2017
    %v2751 = vunpack.c.l.b16 %v2018
    %v2752 = vunpack.c.h.b16 %v2018
    %v2753 = vunpack.c.l.b16 %v2019
    %v2754 = vunpack.c.h.b16 %v2019
    %v2755 = vunpack.c.l.b16 %v2020
    %v2756 = vunpack.c.h.b16 %v2020
    %v2757 = vunpack.c.l.b16 %v2021
    %v2758 = vunpack.c.h.b16 %v2021
    %v2759 = vunpack.c.l.b16 %v2022
    %v2760 = vunpack.c.h.b16 %v2022
    %v2761 = vunpack.c.l.b16 %v2023
    %v2762 = vunpack.c.h.b16 %v2023
    %v2763 = vunpack.c.l.b16 %v2024
    %v2764 = vunpack.c.h.b16 %v2024
    %v2765 = vunpack.c.l.b16 %v2025
    %v2766 = vunpack.c.h.b16 %v2025
    %v2767 = vunpack.c.l.b16 %v2026
    %v2768 = vunpack.c.h.b16 %v2026
    %v2769 = vunpack.c.l.b16 %v2027
    %v2770 = vunpack.c.h.b16 %v2027
    %v2771 = vunpack.c.l.b16 %v2028
    %v2772 = vunpack.c.h.b16 %v2028
    %v2773 = vunpack.c.l.b16 %v2029
    %v2774 = vunpack.c.h.b16 %v2029
    %v2775 = vunpack.c.l.b16 %v2030
    %v2776 = vunpack.c.h.b16 %v2030
    %v2777 = vunpack.c.l.b16 %v2031
    %v2778 = vunpack.c.h.b16 %v2031
    %v2779 = vunpack.c.l.b16 %v2032
    %v2780 = vunpack.c.h.b16 %v2032
    %v2781 = vunpack.c.l.b16 %v2033
    %v2782 = vunpack.c.h.b16 %v2033
    %v2783 = vunpack.c.l.b16 %v2034
    %v2784 = vunpack.c.h.b16 %v2034
    %v2785 = vunpack.c.l.b16 %v2035
    %v2786 = vunpack.c.h.b16 %v2035
    %v2787 = vunpack.c.l.b16 %v2036
    %v2788 = vunpack.c.h.b16 %v2036
    %v2789 = vunpack.c.l.b16 %v2037
    %v2790 = vunpack.c.h.b16 %v2037
    %v2791 = vunpack.c.l.b16 %v2038
    %v2792 = vunpack.c.h.b16 %v2038
    %v2793 = vunpack.c.l.b16 %v2039
    %v2794 = vunpack.c.h.b16 %v2039
    %v2795 = vunpack.c.l.b16 %v2040
    %v2796 = vunpack.c.h.b16 %v2040
    %v2797 = vunpack.c.l.b16 %v2041
    %v2798 = vunpack.c.h.b16 %v2041
    %v2799 = vunpack.c.l.b16 %v2042
    %v2800 = vunpack.c.h.b16 %v2042
    %v2801 = vunpack.c.l.b16 %v2043
    %v2802 = vunpack.c.h.b16 %v2043
    %v2803 = vunpack.c.l.b16 %v2044
    %v2804 = vunpack.c.h.b16 %v2044
    %v2805 = vunpack.c.l.b16 %v2045
    %v2806 = vunpack.c.h.b16 %v2045
    %v2807 = vunpack.c.l.b16 %v2046
    %v2808 = vunpack.c.h.b16 %v2046
    %v2809 = vunpack.c.l.b16 %v2047
    %v2810 = vunpack.c.h.b16 %v2047
    %v2811 = vunpack.c.l.b16 %v2048
    %v2812 = vunpack.c.h.b16 %v2048
    %v2813 = vunpack.c.l.b16 %v2049
    %v2814 = vunpack.c.h.b16 %v2049
    %v2815 = vunpack.c.l.b16 %v2050
    %v2816 = vunpack.c.h.b16 %v2050
    %v2817 = vunpack.c.l.b16 %v2051
    %v2818 = vunpack.c.h.b16 %v2051
    %v2819 = vunpack.c.l.b16 %v2052
    %v2820 = vunpack.c.h.b16 %v2052
    %v2821 = vunpack.c.l.b16 %v2053
    %v2822 = vunpack.c.h.b16 %v2053
    %v2823 = vunpack.c.l.b16 %v2054
    %v2824 = vunpack.c.h.b16 %v2054
    %v2825 = vunpack.c.l.b16 %v2055
    %v2826 = vunpack.c.h.b16 %v2055
    %v2827 = vunpack.c.l.b16 %v2056
    %v2828 = vunpack.c.h.b16 %v2056
    %v2829 = vunpack.c.l.b16 %v2057
    %v2830 = vunpack.c.h.b16 %v2057
    %v2831 = vunpack.c.l.b16 %v2058
    %v2832 = vunpack.c.h.b16 %v2058
    %v2833 = vunpack.c.l.b16 %v2059
    %v2834 = vunpack.c.h.b16 %v2059
    %v2835 = vunpack.c.l.b16 %v2060
    %v2836 = vunpack.c.h.b16 %v2060
    %v2837 = vunpack.c.l.b16 %v2061
    %v2838 = vunpack.c.h.b16 %v2061
    %v2839 = vunpack.c.l.b16 %v2062
    %v2840 = vunpack.c.h.b16 %v2062
    %v2841 = vunpack.c.l.b16 %v2063
    %v2842 = vunpack.c.h.b16 %v2063
    %v2843 = vunpack.c.l.b16 %v2064
    %v2844 = vunpack.c.h.b16 %v2064
    %v2845 = vunpack.c.l.b16 %v2065
    %v2846 = vunpack.c.h.b16 %v2065
    %v2847 = vunpack.c.l.b16 %v2066
    %v2848 = vunpack.c.h.b16 %v2066
    %v2849 = vunpack.c.l.b16 %v2067
    %v2850 = vunpack.c.h.b16 %v2067
    %v2851 = vunpack.c.l.b16 %v2068
    %v2852 = vunpack.c.h.b16 %v2068
    %v2853 = vunpack.c.l.b16 %v2069
    %v2854 = vunpack.c.h.b16 %v2069
    %v2855 = vunpack.c.l.b16 %v2070
    %v2856 = vunpack.c.h.b16 %v2070
    %v2857 = vunpack.c.l.b16 %v2071
    %v2858 = vunpack.c.h.b16 %v2071
    %v2859 = vunpack.c.l.b16 %v2072
    %v2860 = vunpack.c.h.b16 %v2072
    %v2861 = vunpack.c.l.b16 %v2073
    %v2862 = vunpack.c.h.b16 %v2073
    %v2863 = vunpack.c.l.b16 %v2074
    %v2864 = vunpack.c.h.b16 %v2074
    %v2865 = vunpack.c.l.b16 %v2075
    %v2866 = vunpack.c.h.b16 %v2075
    %v2867 = vunpack.c.l.b16 %v2076
    %v2868 = vunpack.c.h.b16 %v2076
    %v2869 = vunpack.c.l.b16 %v2077
    %v2870 = vunpack.c.h.b16 %v2077
    %v2871 = vunpack.c.l.b16 %v2078
    %v2872 = vunpack.c.h.b16 %v2078
    %v2873 = vunpack.c.l.b16 %v2079
    %v2874 = vunpack.c.h.b16 %v2079
    %v2875 = vunpack.c.l.b16 %v2080
    %v2876 = vunpack.c.h.b16 %v2080
    %v2877 = vunpack.c.l.b16 %v2081
    %v2878 = vunpack.c.h.b16 %v2081
    %v2879 = vunpack.c.l.b16 %v2082
    %v2880 = vunpack.c.h.b16 %v2082
    %v2881 = vunpack.c.l.b16 %v2083
    %v2882 = vunpack.c.h.b16 %v2083
    %v2883 = vunpack.c.l.b16 %v2084
    %v2884 = vunpack.c.h.b16 %v2084
    %v2885 = vunpack.c.l.b16 %v2085
    %v2886 = vunpack.c.h.b16 %v2085
    %v2887 = vunpack.c.l.b16 %v2086
    %v2888 = vunpack.c.h.b16 %v2086
    %v2889 = vunpack.c.l.b16 %v2087
    %v2890 = vunpack.c.h.b16 %v2087
    %v2891 = vunpack.c.l.b16 %v2088
    %v2892 = vunpack.c.h.b16 %v2088
    %v2893 = vpack.c.b16 %v2383, %v2381
    %v2894 = vpack.c.b16 %v2384, %v2382
    %v2895 = vpack.c.b16 %v2387, %v2385
    %v2896 = vpack.c.b16 %v2388, %v2386
    %v2897 = vpack.c.b16 %v2391, %v2389
    %v2898 = vpack.c.b16 %v2392, %v2390
    %v2899 = vpack.c.b16 %v2395, %v2393
    %v2900 = vpack.c.b16 %v2396, %v2394
    %v2901 = vpack.c.b16 %v2399, %v2397
    %v2902 = vpack.c.b16 %v2400, %v2398
    %v2903 = vpack.c.b16 %v2403, %v2401
    %v2904 = vpack.c.b16 %v2404, %v2402
    %v2905 = vpack.c.b16 %v2407, %v2405
    %v2906 = vpack.c.b16 %v2408, %v2406
    %v2907 = vpack.c.b16 %v2411, %v2409
    %v2908 = vpack.c.b16 %v2412, %v2410
    %v2909 = vpack.c.b16 %v2415, %v2413
    %v2910 = vpack.c.b16 %v2416, %v2414
    %v2911 = vpack.c.b16 %v2419, %v2417
    %v2912 = vpack.c.b16 %v2420, %v2418
    %v2913 = vpack.c.b16 %v2423, %v2421
    %v2914 = vpack.c.b16 %v2424, %v2422
    %v2915 = vpack.c.b16 %v2427, %v2425
    %v2916 = vpack.c.b16 %v2428, %v2426
    %v2917 = vpack.c.b16 %v2431, %v2429
    %v2918 = vpack.c.b16 %v2432, %v2430
    %v2919 = vpack.c.b16 %v2435, %v2433
    %v2920 = vpack.c.b16 %v2436, %v2434
    %v2921 = vpack.c.b16 %v2439, %v2437
    %v2922 = vpack.c.b16 %v2440, %v2438
    %v2923 = vpack.c.b16 %v2443, %v2441
    %v2924 = vpack.c.b16 %v2444, %v2442
    %v2925 = vpack.c.b16 %v2447, %v2445
    %v2926 = vpack.c.b16 %v2448, %v2446
    %v2927 = vpack.c.b16 %v2451, %v2449
    %v2928 = vpack.c.b16 %v2452, %v2450
    %v2929 = vpack.c.b16 %v2455, %v2453
    %v2930 = vpack.c.b16 %v2456, %v2454
    %v2931 = vpack.c.b16 %v2459, %v2457
    %v2932 = vpack.c.b16 %v2460, %v2458
    %v2933 = vpack.c.b16 %v2463, %v2461
    %v2934 = vpack.c.b16 %v2464, %v2462
    %v2935 = vpack.c.b16 %v2467, %v2465
    %v2936 = vpack.c.b16 %v2468, %v2466
    %v2937 = vpack.c.b16 %v2471, %v2469
    %v2938 = vpack.c.b16 %v2472, %v2470
    %v2939 = vpack.c.b16 %v2475, %v2473
    %v2940 = vpack.c.b16 %v2476, %v2474
    %v2941 = vpack.c.b16 %v2479, %v2477
    %v2942 = vpack.c.b16 %v2480, %v2478
    %v2943 = vpack.c.b16 %v2483, %v2481
    %v2944 = vpack.c.b16 %v2484, %v2482
    %v2945 = vpack.c.b16 %v2487, %v2485
    %v2946 = vpack.c.b16 %v2488, %v2486
    %v2947 = vpack.c.b16 %v2491, %v2489
    %v2948 = vpack.c.b16 %v2492, %v2490
    %v2949 = vpack.c.b16 %v2495, %v2493
    %v2950 = vpack.c.b16 %v2496, %v2494
    %v2951 = vpack.c.b16 %v2499, %v2497
    %v2952 = vpack.c.b16 %v2500, %v2498
    %v2953 = vpack.c.b16 %v2503, %v2501
    %v2954 = vpack.c.b16 %v2504, %v2502
    %v2955 = vpack.c.b16 %v2507, %v2505
    %v2956 = vpack.c.b16 %v2508, %v2506
    %v2957 = vpack.c.b16 %v2511, %v2509
    %v2958 = vpack.c.b16 %v2512, %v2510
    %v2959 = vpack.c.b16 %v2515, %v2513
    %v2960 = vpack.c.b16 %v2516, %v2514
    %v2961 = vpack.c.b16 %v2519, %v2517
    %v2962 = vpack.c.b16 %v2520, %v2518
    %v2963 = vpack.c.b16 %v2523, %v2521
    %v2964 = vpack.c.b16 %v2524, %v2522
    %v2965 = vpack.c.b16 %v2527, %v2525
    %v2966 = vpack.c.b16 %v2528, %v2526
    %v2967 = vpack.c.b16 %v2531, %v2529
    %v2968 = vpack.c.b16 %v2532, %v2530
    %v2969 = vpack.c.b16 %v2535, %v2533
    %v2970 = vpack.c.b16 %v2536, %v2534
    %v2971 = vpack.c.b16 %v2539, %v2537
    %v2972 = vpack.c.b16 %v2540, %v2538
    %v2973 = vpack.c.b16 %v2543, %v2541
    %v2974 = vpack.c.b16 %v2544, %v2542
    %v2975 = vpack.c.b16 %v2547, %v2545
    %v2976 = vpack.c.b16 %v2548, %v2546
    %v2977 = vpack.c.b16 %v2551, %v2549
    %v2978 = vpack.c.b16 %v2552, %v2550
    %v2979 = vpack.c.b16 %v2555, %v2553
    %v2980 = vpack.c.b16 %v2556, %v2554
    %v2981 = vpack.c.b16 %v2559, %v2557
    %v2982 = vpack.c.b16 %v2560, %v2558
    %v2983 = vpack.c.b16 %v2563, %v2561
    %v2984 = vpack.c.b16 %v2564, %v2562
    %v2985 = vpack.c.b16 %v2567, %v2565
    %v2986 = vpack.c.b16 %v2568, %v2566
    %v2987 = vpack.c.b16 %v2571, %v2569
    %v2988 = vpack.c.b16 %v2572, %v2570
    %v2989 = vpack.c.b16 %v2575, %v2573
    %v2990 = vpack.c.b16 %v2576, %v2574
    %v2991 = vpack.c.b16 %v2579, %v2577
    %v2992 = vpack.c.b16 %v2580, %v2578
    %v2993 = vpack.c.b16 %v2583, %v2581
    %v2994 = vpack.c.b16 %v2584, %v2582
    %v2995 = vpack.c.b16 %v2587, %v2585
    %v2996 = vpack.c.b16 %v2588, %v2586
    %v2997 = vpack.c.b16 %v2591, %v2589
    %v2998 = vpack.c.b16 %v2592, %v2590
    %v2999 = vpack.c.b16 %v2595, %v2593
    %v3000 = vpack.c.b16 %v2596, %v2594
    %v3001 = vpack.c.b16 %v2599, %v2597
    %v3002 = vpack.c.b16 %v2600, %v2598
    %v3003 = vpack.c.b16 %v2603, %v2601
    %v3004 = vpack.c.b16 %v2604, %v2602
    %v3005 = vpack.c.b16 %v2607, %v2605
    %v3006 = vpack.c.b16 %v2608, %v2606
    %v3007 = vpack.c.b16 %v2611, %v2609
    %v3008 = vpack.c.b16 %v2612, %v2610
    %v3009 = vpack.c.b16 %v2615, %v2613
    %v3010 = vpack.c.b16 %v2616, %v2614
    %v3011 = vpack.c.b16 %v2619, %v2617
    %v3012 = vpack.c.b16 %v2620, %v2618
    %v3013 = vpack.c.b16 %v2623, %v2621
    %v3014 = vpack.c.b16 %v2624, %v2622
    %v3015 = vpack.c.b16 %v2627, %v2625
    %v3016 = vpack.c.b16 %v2628, %v2626
    %v3017 = vpack.c.b16 %v2631, %v2629
    %v3018 = vpack.c.b16 %v2632, %v2630
    %v3019 = vpack.c.b16 %v2635, %v2633
    %v3020 = vpack.c.b16 %v2636, %v2634
    %v3021 = vpack.c.b16 %v2639, %v2637
    %v3022 = vpack.c.b16 %v2640, %v2638
    %v3023 = vpack.c.b16 %v2643, %v2641
    %v3024 = vpack.c.b16 %v2644, %v2642
    %v3025 = vpack.c.b16 %v2647, %v2645
    %v3026 = vpack.c.b16 %v2648, %v2646
    %v3027 = vpack.c.b16 %v2651, %v2649
    %v3028 = vpack.c.b16 %v2652, %v2650
    %v3029 = vpack.c.b16 %v2655, %v2653
    %v3030 = vpack.c.b16 %v2656, %v2654
    %v3031 = vpack.c.b16 %v2659, %v2657
    %v3032 = vpack.c.b16 %v2660, %v2658
    %v3033 = vpack.c.b16 %v2663, %v2661
    %v3034 = vpack.c.b16 %v2664, %v2662
    %v3035 = vpack.c.b16 %v2667, %v2665
    %v3036 = vpack.c.b16 %v2668, %v2666
    %v3037 = vpack.c.b16 %v2671, %v2669
    %v3038 = vpack.c.b16 %v2672, %v2670
    %v3039 = vpack.c.b16 %v2675, %v2673
    %v3040 = vpack.c.b16 %v2676, %v2674
    %v3041 = vpack.c.b16 %v2679, %v2677
    %v3042 = vpack.c.b16 %v2680, %v2678
    %v3043 = vpack.c.b16 %v2683, %v2681
    %v3044 = vpack.c.b16 %v2684, %v2682
    %v3045 = vpack.c.b16 %v2687, %v2685
    %v3046 = vpack.c.b16 %v2688, %v2686
    %v3047 = vpack.c.b16 %v2691, %v2689
    %v3048 = vpack.c.b16 %v2692, %v2690
    %v3049 = vpack.c.b16 %v2695, %v2693
    %v3050 = vpack.c.b16 %v2696, %v2694
    %v3051 = vpack.c.b16 %v2699, %v2697
    %v3052 = vpack.c.b16 %v2700, %v2698
    %v3053 = vpack.c.b16 %v2703, %v2701
    %v3054 = vpack.c.b16 %v2704, %v2702
    %v3055 = vpack.c.b16 %v2707, %v2705
    %v3056 = vpack.c.b16 %v2708, %v2706
    %v3057 = vpack.c.b16 %v2711, %v2709
    %v3058 = vpack.c.b16 %v2712, %v2710
    %v3059 = vpack.c.b16 %v2715, %v2713
    %v3060 = vpack.c.b16 %v2716, %v2714
    %v3061 = vpack.c.b16 %v2719, %v2717
    %v3062 = vpack.c.b16 %v2720, %v2718
    %v3063 = vpack.c.b16 %v2723, %v2721
    %v3064 = vpack.c.b16 %v2724, %v2722
    %v3065 = vpack.c.b16 %v2727, %v2725
    %v3066 = vpack.c.b16 %v2728, %v2726
    %v3067 = vpack.c.b16 %v2731, %v2729
    %v3068 = vpack.c.b16 %v2732, %v2730
    %v3069 = vpack.c.b16 %v2735, %v2733
    %v3070 = vpack.c.b16 %v2736, %v2734
    %v3071 = vpack.c.b16 %v2739, %v2737
    %v3072 = vpack.c.b16 %v2740, %v2738
    %v3073 = vpack.c.b16 %v2743, %v2741
    %v3074 = vpack.c.b16 %v2744, %v2742
    %v3075 = vpack.c.b16 %v2747, %v2745
    %v3076 = vpack.c.b16 %v2748, %v2746
    %v3077 = vpack.c.b16 %v2751, %v2749
    %v3078 = vpack.c.b16 %v2752, %v2750
    %v3079 = vpack.c.b16 %v2755, %v2753
    %v3080 = vpack.c.b16 %v2756, %v2754
    %v3081 = vpack.c.b16 %v2759, %v2757
    %v3082 = vpack.c.b16 %v2760, %v2758
    %v3083 = vpack.c.b16 %v2763, %v2761
    %v3084 = vpack.c.b16 %v2764, %v2762
    %v3085 = vpack.c.b16 %v2767, %v2765
    %v3086 = vpack.c.b16 %v2768, %v2766
    %v3087 = vpack.c.b16 %v2771, %v2769
    %v3088 = vpack.c.b16 %v2772, %v2770
    %v3089 = vpack.c.b16 %v2775, %v2773
    %v3090 = vpack.c.b16 %v2776, %v2774
    %v3091 = vpack.c.b16 %v2779, %v2777
    %v3092 = vpack.c.b16 %v2780, %v2778
    %v3093 = vpack.c.b16 %v2783, %v2781
    %v3094 = vpack.c.b16 %v2784, %v2782
    %v3095 = vpack.c.b16 %v2787, %v2785
    %v3096 = vpack.c.b16 %v2788, %v2786
    %v3097 = vpack.c.b16 %v2791, %v2789
    %v3098 = vpack.c.b16 %v2792, %v2790
    %v3099 = vpack.c.b16 %v2795, %v2793
    %v3100 = vpack.c.b16 %v2796, %v2794
    %v3101 = vpack.c.b16 %v2799, %v2797
    %v3102 = vpack.c.b16 %v2800, %v2798
    %v3103 = vpack.c.b16 %v2803, %v2801
    %v3104 = vpack.c.b16 %v2804, %v2802
    %v3105 = vpack.c.b16 %v2807, %v2805
    %v3106 = vpack.c.b16 %v2808, %v2806
    %v3107 = vpack.c.b16 %v2811, %v2809
    %v3108 = vpack.c.b16 %v2812, %v2810
    %v3109 = vpack.c.b16 %v2815, %v2813
    %v3110 = vpack.c.b16 %v2816, %v2814
    %v3111 = vpack.c.b16 %v2819, %v2817
    %v3112 = vpack.c.b16 %v2820, %v2818
    %v3113 = vpack.c.b16 %v2823, %v2821
    %v3114 = vpack.c.b16 %v2824, %v2822
    %v3115 = vpack.c.b16 %v2827, %v2825
    %v3116 = vpack.c.b16 %v2828, %v2826
    %v3117 = vpack.c.b16 %v2831, %v2829
    %v3118 = vpack.c.b16 %v2832, %v2830
    %v3119 = vpack.c.b16 %v2835, %v2833
    %v3120 = vpack.c.b16 %v2836, %v2834
    %v3121 = vpack.c.b16 %v2839, %v2837
    %v3122 = vpack.c.b16 %v2840, %v2838
    %v3123 = vpack.c.b16 %v2843, %v2841
    %v3124 = vpack.c.b16 %v2844, %v2842
    %v3125 = vpack.c.b16 %v2847, %v2845
    %v3126 = vpack.c.b16 %v2848, %v2846
    %v3127 = vpack.c.b16 %v2851, %v2849
    %v3128 = vpack.c.b16 %v2852, %v2850
    %v3129 = vpack.c.b16 %v2855, %v2853
    %v3130 = vpack.c.b16 %v2856, %v2854
    %v3131 = vpack.c.b16 %v2859, %v2857
    %v3132 = vpack.c.b16 %v2860, %v2858
    %v3133 = vpack.c.b16 %v2863, %v2861
    %v3134 = vpack.c.b16 %v2864, %v2862
    %v3135 = vpack.c.b16 %v2867, %v2865
    %v3136 = vpack.c.b16 %v2868, %v2866
    %v3137 = vpack.c.b16 %v2871, %v2869
    %v3138 = vpack.c.b16 %v2872, %v2870
    %v3139 = vpack.c.b16 %v2875, %v2873
    %v3140 = vpack.c.b16 %v2876, %v2874
    %v3141 = vpack.c.b16 %v2879, %v2877
    %v3142 = vpack.c.b16 %v2880, %v2878
    %v3143 = vpack.c.b16 %v2883, %v2881
    %v3144 = vpack.c.b16 %v2884, %v2882
    %v3145 = vpack.c.b16 %v2887, %v2885
    %v3146 = vpack.c.b16 %v2888, %v2886
    %v3147 = vpack.c.b16 %v2891, %v2889
    %v3148 = vpack.c.b16 %v2892, %v2890
    %3405 = vmatpush.bf16.xpose.msra.mxu0 %v2907
    %3406 = vmatpush.bf16.xpose.msra.mxu0 %v2905
    %3407 = vmatpush.bf16.xpose.msra.mxu0 %v2903
    %3408 = vmatpush.bf16.xpose.msra.mxu0 %v2901
    %3409 = vmatpush.bf16.xpose.msra.mxu0 %v2899
    %3410 = vmatpush.bf16.xpose.msra.mxu0 %v2897
    %3411 = vmatpush.bf16.xpose.msra.mxu0 %v2895
    %3412 = vmatpush.bf16.xpose.msra.mxu0 %v2893
    %3413 = vmatmul.bf16.gmra.mxu0 %v1831
    %v3414 = vpop.f32.mrf.mxu0
    %v3415 = vadd.f32 %v2093, %v3414
    %v3416 = vpop.f32.mrf.mxu0
    %v3417 = vadd.f32 %v2093, %v3416
    %3418 = vdwg.mxu0
    %3419 = vmatpush.bf16.xpose.msra.mxu0 %v2908
    %3420 = vmatpush.bf16.xpose.msra.mxu0 %v2906
    %3421 = vmatpush.bf16.xpose.msra.mxu0 %v2904
    %3422 = vmatpush.bf16.xpose.msra.mxu0 %v2902
    %3423 = vmatpush.bf16.xpose.msra.mxu0 %v2900
    %3424 = vmatpush.bf16.xpose.msra.mxu0 %v2898
    %3425 = vmatpush.bf16.xpose.msra.mxu0 %v2896
    %3426 = vmatpush.bf16.xpose.msra.mxu0 %v2894
    %3427 = vmatmul.bf16.gmra.mxu0 %v1832
    %v3428 = vpop.f32.mrf.mxu0
    %v3429 = vadd.f32 %v3415, %v3428
    %v3430 = vpop.f32.mrf.mxu0
    %v3431 = vadd.f32 %v3417, %v3430
    %3432 = vdwg.mxu0
    %3433 = vmatpush.bf16.xpose.msra.mxu0 %v2923
    %3434 = vmatpush.bf16.xpose.msra.mxu0 %v2921
    %3435 = vmatpush.bf16.xpose.msra.mxu0 %v2919
    %3436 = vmatpush.bf16.xpose.msra.mxu0 %v2917
    %3437 = vmatpush.bf16.xpose.msra.mxu0 %v2915
    %3438 = vmatpush.bf16.xpose.msra.mxu0 %v2913
    %3439 = vmatpush.bf16.xpose.msra.mxu0 %v2911
    %3440 = vmatpush.bf16.xpose.msra.mxu0 %v2909
    %3441 = vmatmul.bf16.gmra.mxu0 %v1831
    %v3442 = vpop.f32.mrf.mxu0
    %v3443 = vadd.f32 %v2094, %v3442
    %v3444 = vpop.f32.mrf.mxu0
    %v3445 = vadd.f32 %v2094, %v3444
    %3446 = vdwg.mxu0
    %3447 = vmatpush.bf16.xpose.msra.mxu0 %v2924
    %3448 = vmatpush.bf16.xpose.msra.mxu0 %v2922
    %3449 = vmatpush.bf16.xpose.msra.mxu0 %v2920
    %3450 = vmatpush.bf16.xpose.msra.mxu0 %v2918
    %3451 = vmatpush.bf16.xpose.msra.mxu0 %v2916
    %3452 = vmatpush.bf16.xpose.msra.mxu0 %v2914
    %3453 = vmatpush.bf16.xpose.msra.mxu0 %v2912
    %3454 = vmatpush.bf16.xpose.msra.mxu0 %v2910
    %3455 = vmatmul.bf16.gmra.mxu0 %v1832
    %v3456 = vpop.f32.mrf.mxu0
    %v3457 = vadd.f32 %v3443, %v3456
    %v3458 = vpop.f32.mrf.mxu0
    %v3459 = vadd.f32 %v3445, %v3458
    %3460 = vdwg.mxu0
    %3461 = vmatpush.bf16.xpose.msra.mxu0 %v2939
    %3462 = vmatpush.bf16.xpose.msra.mxu0 %v2937
    %3463 = vmatpush.bf16.xpose.msra.mxu0 %v2935
    %3464 = vmatpush.bf16.xpose.msra.mxu0 %v2933
    %3465 = vmatpush.bf16.xpose.msra.mxu0 %v2931
    %3466 = vmatpush.bf16.xpose.msra.mxu0 %v2929
    %3467 = vmatpush.bf16.xpose.msra.mxu0 %v2927
    %3468 = vmatpush.bf16.xpose.msra.mxu0 %v2925
    %3469 = vmatmul.bf16.gmra.mxu0 %v1831
    %v3470 = vpop.f32.mrf.mxu0
    %v3471 = vadd.f32 %v2095, %v3470
    %v3472 = vpop.f32.mrf.mxu0
    %v3473 = vadd.f32 %v2095, %v3472
    %3474 = vdwg.mxu0
    %3475 = vmatpush.bf16.xpose.msra.mxu0 %v2940
    %3476 = vmatpush.bf16.xpose.msra.mxu0 %v2938
    %3477 = vmatpush.bf16.xpose.msra.mxu0 %v2936
    %3478 = vmatpush.bf16.xpose.msra.mxu0 %v2934
    %3479 = vmatpush.bf16.xpose.msra.mxu0 %v2932
    %3480 = vmatpush.bf16.xpose.msra.mxu0 %v2930
    %3481 = vmatpush.bf16.xpose.msra.mxu0 %v2928
    %3482 = vmatpush.bf16.xpose.msra.mxu0 %v2926
    %3483 = vmatmul.bf16.gmra.mxu0 %v1832
    %v3484 = vpop.f32.mrf.mxu0
    %v3485 = vadd.f32 %v3471, %v3484
    %v3486 = vpop.f32.mrf.mxu0
    %v3487 = vadd.f32 %v3473, %v3486
    %3488 = vdwg.mxu0
    %3489 = vmatpush.bf16.xpose.msra.mxu0 %v2955
    %3490 = vmatpush.bf16.xpose.msra.mxu0 %v2953
    %3491 = vmatpush.bf16.xpose.msra.mxu0 %v2951
    %3492 = vmatpush.bf16.xpose.msra.mxu0 %v2949
    %3493 = vmatpush.bf16.xpose.msra.mxu0 %v2947
    %3494 = vmatpush.bf16.xpose.msra.mxu0 %v2945
    %3495 = vmatpush.bf16.xpose.msra.mxu0 %v2943
    %3496 = vmatpush.bf16.xpose.msra.mxu0 %v2941
    %3497 = vmatmul.bf16.gmra.mxu0 %v1831
    %v3498 = vpop.f32.mrf.mxu0
    %v3499 = vadd.f32 %v2096, %v3498
    %v3500 = vpop.f32.mrf.mxu0
    %v3501 = vadd.f32 %v2096, %v3500
    %3502 = vdwg.mxu0
    %3503 = vmatpush.bf16.xpose.msra.mxu0 %v2956
    %3504 = vmatpush.bf16.xpose.msra.mxu0 %v2954
    %3505 = vmatpush.bf16.xpose.msra.mxu0 %v2952
    %3506 = vmatpush.bf16.xpose.msra.mxu0 %v2950
    %3507 = vmatpush.bf16.xpose.msra.mxu0 %v2948
    %3508 = vmatpush.bf16.xpose.msra.mxu0 %v2946
    %3509 = vmatpush.bf16.xpose.msra.mxu0 %v2944
    %3510 = vmatpush.bf16.xpose.msra.mxu0 %v2942
    %3511 = vmatmul.bf16.gmra.mxu0 %v1832
    %v3512 = vpop.f32.mrf.mxu0
    %v3513 = vadd.f32 %v3499, %v3512
    %v3514 = vpop.f32.mrf.mxu0
    %v3515 = vadd.f32 %v3501, %v3514
    %3516 = vdwg.mxu0
    %3517 = vmatpush.bf16.xpose.msra.mxu0 %v2971
    %3518 = vmatpush.bf16.xpose.msra.mxu0 %v2969
    %3519 = vmatpush.bf16.xpose.msra.mxu0 %v2967
    %3520 = vmatpush.bf16.xpose.msra.mxu0 %v2965
    %3521 = vmatpush.bf16.xpose.msra.mxu0 %v2963
    %3522 = vmatpush.bf16.xpose.msra.mxu0 %v2961
    %3523 = vmatpush.bf16.xpose.msra.mxu0 %v2959
    %3524 = vmatpush.bf16.xpose.msra.mxu0 %v2957
    %3525 = vmatmul.bf16.gmra.mxu0 %v1831
    %v3526 = vpop.f32.mrf.mxu0
    %v3527 = vadd.f32 %v2097, %v3526
    %v3528 = vpop.f32.mrf.mxu0
    %v3529 = vadd.f32 %v2097, %v3528
    %3530 = vdwg.mxu0
    %3531 = vmatpush.bf16.xpose.msra.mxu0 %v2972
    %3532 = vmatpush.bf16.xpose.msra.mxu0 %v2970
    %3533 = vmatpush.bf16.xpose.msra.mxu0 %v2968
    %3534 = vmatpush.bf16.xpose.msra.mxu0 %v2966
    %3535 = vmatpush.bf16.xpose.msra.mxu0 %v2964
    %3536 = vmatpush.bf16.xpose.msra.mxu0 %v2962
    %3537 = vmatpush.bf16.xpose.msra.mxu0 %v2960
    %3538 = vmatpush.bf16.xpose.msra.mxu0 %v2958
    %3539 = vmatmul.bf16.gmra.mxu0 %v1832
    %v3540 = vpop.f32.mrf.mxu0
    %v3541 = vadd.f32 %v3527, %v3540
    %v3542 = vpop.f32.mrf.mxu0
    %v3543 = vadd.f32 %v3529, %v3542
    %3544 = vdwg.mxu0
    %3545 = vmatpush.bf16.xpose.msra.mxu0 %v2987
    %3546 = vmatpush.bf16.xpose.msra.mxu0 %v2985
    %3547 = vmatpush.bf16.xpose.msra.mxu0 %v2983
    %3548 = vmatpush.bf16.xpose.msra.mxu0 %v2981
    %3549 = vmatpush.bf16.xpose.msra.mxu0 %v2979
    %3550 = vmatpush.bf16.xpose.msra.mxu0 %v2977
    %3551 = vmatpush.bf16.xpose.msra.mxu0 %v2975
    %3552 = vmatpush.bf16.xpose.msra.mxu0 %v2973
    %3553 = vmatmul.bf16.gmra.mxu0 %v1831
    %v3554 = vpop.f32.mrf.mxu0
    %v3555 = vadd.f32 %v2098, %v3554
    %v3556 = vpop.f32.mrf.mxu0
    %v3557 = vadd.f32 %v2098, %v3556
    %3558 = vdwg.mxu0
    %3559 = vmatpush.bf16.xpose.msra.mxu0 %v2988
    %3560 = vmatpush.bf16.xpose.msra.mxu0 %v2986
    %3561 = vmatpush.bf16.xpose.msra.mxu0 %v2984
    %3562 = vmatpush.bf16.xpose.msra.mxu0 %v2982
    %3563 = vmatpush.bf16.xpose.msra.mxu0 %v2980
    %3564 = vmatpush.bf16.xpose.msra.mxu0 %v2978
    %3565 = vmatpush.bf16.xpose.msra.mxu0 %v2976
    %3566 = vmatpush.bf16.xpose.msra.mxu0 %v2974
    %3567 = vmatmul.bf16.gmra.mxu0 %v1832
    %v3568 = vpop.f32.mrf.mxu0
    %v3569 = vadd.f32 %v3555, %v3568
    %v3570 = vpop.f32.mrf.mxu0
    %v3571 = vadd.f32 %v3557, %v3570
    %3572 = vdwg.mxu0
    %3573 = vmatpush.bf16.xpose.msra.mxu0 %v3003
    %3574 = vmatpush.bf16.xpose.msra.mxu0 %v3001
    %3575 = vmatpush.bf16.xpose.msra.mxu0 %v2999
    %3576 = vmatpush.bf16.xpose.msra.mxu0 %v2997
    %3577 = vmatpush.bf16.xpose.msra.mxu0 %v2995
    %3578 = vmatpush.bf16.xpose.msra.mxu0 %v2993
    %3579 = vmatpush.bf16.xpose.msra.mxu0 %v2991
    %3580 = vmatpush.bf16.xpose.msra.mxu0 %v2989
    %3581 = vmatmul.bf16.gmra.mxu0 %v1831
    %v3582 = vpop.f32.mrf.mxu0
    %v3583 = vadd.f32 %v2099, %v3582
    %v3584 = vpop.f32.mrf.mxu0
    %v3585 = vadd.f32 %v2099, %v3584
    %3586 = vdwg.mxu0
    %3587 = vmatpush.bf16.xpose.msra.mxu0 %v3004
    %3588 = vmatpush.bf16.xpose.msra.mxu0 %v3002
    %3589 = vmatpush.bf16.xpose.msra.mxu0 %v3000
    %3590 = vmatpush.bf16.xpose.msra.mxu0 %v2998
    %3591 = vmatpush.bf16.xpose.msra.mxu0 %v2996
    %3592 = vmatpush.bf16.xpose.msra.mxu0 %v2994
    %3593 = vmatpush.bf16.xpose.msra.mxu0 %v2992
    %3594 = vmatpush.bf16.xpose.msra.mxu0 %v2990
    %3595 = vmatmul.bf16.gmra.mxu0 %v1832
    %v3596 = vpop.f32.mrf.mxu0
    %v3597 = vadd.f32 %v3583, %v3596
    %v3598 = vpop.f32.mrf.mxu0
    %v3599 = vadd.f32 %v3585, %v3598
    %3600 = vdwg.mxu0
    %3601 = vmatpush.bf16.xpose.msra.mxu0 %v3019
    %3602 = vmatpush.bf16.xpose.msra.mxu0 %v3017
    %3603 = vmatpush.bf16.xpose.msra.mxu0 %v3015
    %3604 = vmatpush.bf16.xpose.msra.mxu0 %v3013
    %3605 = vmatpush.bf16.xpose.msra.mxu0 %v3011
    %3606 = vmatpush.bf16.xpose.msra.mxu0 %v3009
    %3607 = vmatpush.bf16.xpose.msra.mxu0 %v3007
    %3608 = vmatpush.bf16.xpose.msra.mxu0 %v3005
    %3609 = vmatmul.bf16.gmra.mxu0 %v1831
    %v3610 = vpop.f32.mrf.mxu0
    %v3611 = vadd.f32 %v2100, %v3610
    %v3612 = vpop.f32.mrf.mxu0
    %v3613 = vadd.f32 %v2100, %v3612
    %3614 = vdwg.mxu0
    %3615 = vmatpush.bf16.xpose.msra.mxu0 %v3020
    %3616 = vmatpush.bf16.xpose.msra.mxu0 %v3018
    %3617 = vmatpush.bf16.xpose.msra.mxu0 %v3016
    %3618 = vmatpush.bf16.xpose.msra.mxu0 %v3014
    %3619 = vmatpush.bf16.xpose.msra.mxu0 %v3012
    %3620 = vmatpush.bf16.xpose.msra.mxu0 %v3010
    %3621 = vmatpush.bf16.xpose.msra.mxu0 %v3008
    %3622 = vmatpush.bf16.xpose.msra.mxu0 %v3006
    %3623 = vmatmul.bf16.gmra.mxu0 %v1832
    %v3624 = vpop.f32.mrf.mxu0
    %v3625 = vadd.f32 %v3611, %v3624
    %v3626 = vpop.f32.mrf.mxu0
    %v3627 = vadd.f32 %v3613, %v3626
    %3628 = vdwg.mxu0
    %3629 = vmatpush.bf16.xpose.msra.mxu0 %v3035
    %3630 = vmatpush.bf16.xpose.msra.mxu0 %v3033
    %3631 = vmatpush.bf16.xpose.msra.mxu0 %v3031
    %3632 = vmatpush.bf16.xpose.msra.mxu0 %v3029
    %3633 = vmatpush.bf16.xpose.msra.mxu0 %v3027
    %3634 = vmatpush.bf16.xpose.msra.mxu0 %v3025
    %3635 = vmatpush.bf16.xpose.msra.mxu0 %v3023
    %3636 = vmatpush.bf16.xpose.msra.mxu0 %v3021
    %3637 = vmatmul.bf16.gmra.mxu0 %v1831
    %v3638 = vpop.f32.mrf.mxu0
    %v3639 = vadd.f32 %v2101, %v3638
    %v3640 = vpop.f32.mrf.mxu0
    %v3641 = vadd.f32 %v2101, %v3640
    %3642 = vdwg.mxu0
    %3643 = vmatpush.bf16.xpose.msra.mxu0 %v3036
    %3644 = vmatpush.bf16.xpose.msra.mxu0 %v3034
    %3645 = vmatpush.bf16.xpose.msra.mxu0 %v3032
    %3646 = vmatpush.bf16.xpose.msra.mxu0 %v3030
    %3647 = vmatpush.bf16.xpose.msra.mxu0 %v3028
    %3648 = vmatpush.bf16.xpose.msra.mxu0 %v3026
    %3649 = vmatpush.bf16.xpose.msra.mxu0 %v3024
    %3650 = vmatpush.bf16.xpose.msra.mxu0 %v3022
    %3651 = vmatmul.bf16.gmra.mxu0 %v1832
    %v3652 = vpop.f32.mrf.mxu0
    %v3653 = vadd.f32 %v3639, %v3652
    %v3654 = vpop.f32.mrf.mxu0
    %v3655 = vadd.f32 %v3641, %v3654
    %3656 = vdwg.mxu0
    %3657 = vmatpush.bf16.xpose.msra.mxu0 %v3051
    %3658 = vmatpush.bf16.xpose.msra.mxu0 %v3049
    %3659 = vmatpush.bf16.xpose.msra.mxu0 %v3047
    %3660 = vmatpush.bf16.xpose.msra.mxu0 %v3045
    %3661 = vmatpush.bf16.xpose.msra.mxu0 %v3043
    %3662 = vmatpush.bf16.xpose.msra.mxu0 %v3041
    %3663 = vmatpush.bf16.xpose.msra.mxu0 %v3039
    %3664 = vmatpush.bf16.xpose.msra.mxu0 %v3037
    %3665 = vmatmul.bf16.gmra.mxu0 %v1831
    %v3666 = vpop.f32.mrf.mxu0
    %v3667 = vadd.f32 %v2102, %v3666
    %v3668 = vpop.f32.mrf.mxu0
    %v3669 = vadd.f32 %v2102, %v3668
    %3670 = vdwg.mxu0
    %3671 = vmatpush.bf16.xpose.msra.mxu0 %v3052
    %3672 = vmatpush.bf16.xpose.msra.mxu0 %v3050
    %3673 = vmatpush.bf16.xpose.msra.mxu0 %v3048
    %3674 = vmatpush.bf16.xpose.msra.mxu0 %v3046
    %3675 = vmatpush.bf16.xpose.msra.mxu0 %v3044
    %3676 = vmatpush.bf16.xpose.msra.mxu0 %v3042
    %3677 = vmatpush.bf16.xpose.msra.mxu0 %v3040
    %3678 = vmatpush.bf16.xpose.msra.mxu0 %v3038
    %3679 = vmatmul.bf16.gmra.mxu0 %v1832
    %v3680 = vpop.f32.mrf.mxu0
    %v3681 = vadd.f32 %v3667, %v3680
    %v3682 = vpop.f32.mrf.mxu0
    %v3683 = vadd.f32 %v3669, %v3682
    %3684 = vdwg.mxu0
    %3685 = vmatpush.bf16.xpose.msra.mxu0 %v3067
    %3686 = vmatpush.bf16.xpose.msra.mxu0 %v3065
    %3687 = vmatpush.bf16.xpose.msra.mxu0 %v3063
    %3688 = vmatpush.bf16.xpose.msra.mxu0 %v3061
    %3689 = vmatpush.bf16.xpose.msra.mxu0 %v3059
    %3690 = vmatpush.bf16.xpose.msra.mxu0 %v3057
    %3691 = vmatpush.bf16.xpose.msra.mxu0 %v3055
    %3692 = vmatpush.bf16.xpose.msra.mxu0 %v3053
    %3693 = vmatmul.bf16.gmra.mxu0 %v1831
    %v3694 = vpop.f32.mrf.mxu0
    %v3695 = vadd.f32 %v2103, %v3694
    %v3696 = vpop.f32.mrf.mxu0
    %v3697 = vadd.f32 %v2103, %v3696
    %3698 = vdwg.mxu0
    %3699 = vmatpush.bf16.xpose.msra.mxu0 %v3068
    %3700 = vmatpush.bf16.xpose.msra.mxu0 %v3066
    %3701 = vmatpush.bf16.xpose.msra.mxu0 %v3064
    %3702 = vmatpush.bf16.xpose.msra.mxu0 %v3062
    %3703 = vmatpush.bf16.xpose.msra.mxu0 %v3060
    %3704 = vmatpush.bf16.xpose.msra.mxu0 %v3058
    %3705 = vmatpush.bf16.xpose.msra.mxu0 %v3056
    %3706 = vmatpush.bf16.xpose.msra.mxu0 %v3054
    %3707 = vmatmul.bf16.gmra.mxu0 %v1832
    %v3708 = vpop.f32.mrf.mxu0
    %v3709 = vadd.f32 %v3695, %v3708
    %v3710 = vpop.f32.mrf.mxu0
    %v3711 = vadd.f32 %v3697, %v3710
    %3712 = vdwg.mxu0
    %3713 = vmatpush.bf16.xpose.msra.mxu0 %v3083
    %3714 = vmatpush.bf16.xpose.msra.mxu0 %v3081
    %3715 = vmatpush.bf16.xpose.msra.mxu0 %v3079
    %3716 = vmatpush.bf16.xpose.msra.mxu0 %v3077
    %3717 = vmatpush.bf16.xpose.msra.mxu0 %v3075
    %3718 = vmatpush.bf16.xpose.msra.mxu0 %v3073
    %3719 = vmatpush.bf16.xpose.msra.mxu0 %v3071
    %3720 = vmatpush.bf16.xpose.msra.mxu0 %v3069
    %3721 = vmatmul.bf16.gmra.mxu0 %v1831
    %v3722 = vpop.f32.mrf.mxu0
    %v3723 = vadd.f32 %v2104, %v3722
    %v3724 = vpop.f32.mrf.mxu0
    %v3725 = vadd.f32 %v2104, %v3724
    %3726 = vdwg.mxu0
    %3727 = vmatpush.bf16.xpose.msra.mxu0 %v3084
    %3728 = vmatpush.bf16.xpose.msra.mxu0 %v3082
    %3729 = vmatpush.bf16.xpose.msra.mxu0 %v3080
    %3730 = vmatpush.bf16.xpose.msra.mxu0 %v3078
    %3731 = vmatpush.bf16.xpose.msra.mxu0 %v3076
    %3732 = vmatpush.bf16.xpose.msra.mxu0 %v3074
    %3733 = vmatpush.bf16.xpose.msra.mxu0 %v3072
    %3734 = vmatpush.bf16.xpose.msra.mxu0 %v3070
    %3735 = vmatmul.bf16.gmra.mxu0 %v1832
    %v3736 = vpop.f32.mrf.mxu0
    %v3737 = vadd.f32 %v3723, %v3736
    %v3738 = vpop.f32.mrf.mxu0
    %v3739 = vadd.f32 %v3725, %v3738
    %3740 = vdwg.mxu0
    %3741 = vmatpush.bf16.xpose.msra.mxu0 %v3099
    %3742 = vmatpush.bf16.xpose.msra.mxu0 %v3097
    %3743 = vmatpush.bf16.xpose.msra.mxu0 %v3095
    %3744 = vmatpush.bf16.xpose.msra.mxu0 %v3093
    %3745 = vmatpush.bf16.xpose.msra.mxu0 %v3091
    %3746 = vmatpush.bf16.xpose.msra.mxu0 %v3089
    %3747 = vmatpush.bf16.xpose.msra.mxu0 %v3087
    %3748 = vmatpush.bf16.xpose.msra.mxu0 %v3085
    %3749 = vmatmul.bf16.gmra.mxu0 %v1831
    %v3750 = vpop.f32.mrf.mxu0
    %v3751 = vadd.f32 %v2105, %v3750
    %v3752 = vpop.f32.mrf.mxu0
    %v3753 = vadd.f32 %v2105, %v3752
    %3754 = vdwg.mxu0
    %3755 = vmatpush.bf16.xpose.msra.mxu0 %v3100
    %3756 = vmatpush.bf16.xpose.msra.mxu0 %v3098
    %3757 = vmatpush.bf16.xpose.msra.mxu0 %v3096
    %3758 = vmatpush.bf16.xpose.msra.mxu0 %v3094
    %3759 = vmatpush.bf16.xpose.msra.mxu0 %v3092
    %3760 = vmatpush.bf16.xpose.msra.mxu0 %v3090
    %3761 = vmatpush.bf16.xpose.msra.mxu0 %v3088
    %3762 = vmatpush.bf16.xpose.msra.mxu0 %v3086
    %3763 = vmatmul.bf16.gmra.mxu0 %v1832
    %v3764 = vpop.f32.mrf.mxu0
    %v3765 = vadd.f32 %v3751, %v3764
    %v3766 = vpop.f32.mrf.mxu0
    %v3767 = vadd.f32 %v3753, %v3766
    %3768 = vdwg.mxu0
    %3769 = vmatpush.bf16.xpose.msra.mxu0 %v3115
    %3770 = vmatpush.bf16.xpose.msra.mxu0 %v3113
    %3771 = vmatpush.bf16.xpose.msra.mxu0 %v3111
    %3772 = vmatpush.bf16.xpose.msra.mxu0 %v3109
    %3773 = vmatpush.bf16.xpose.msra.mxu0 %v3107
    %3774 = vmatpush.bf16.xpose.msra.mxu0 %v3105
    %3775 = vmatpush.bf16.xpose.msra.mxu0 %v3103
    %3776 = vmatpush.bf16.xpose.msra.mxu0 %v3101
    %3777 = vmatmul.bf16.gmra.mxu0 %v1831
    %v3778 = vpop.f32.mrf.mxu0
    %v3779 = vadd.f32 %v2106, %v3778
    %v3780 = vpop.f32.mrf.mxu0
    %v3781 = vadd.f32 %v2106, %v3780
    %3782 = vdwg.mxu0
    %3783 = vmatpush.bf16.xpose.msra.mxu0 %v3116
    %3784 = vmatpush.bf16.xpose.msra.mxu0 %v3114
    %3785 = vmatpush.bf16.xpose.msra.mxu0 %v3112
    %3786 = vmatpush.bf16.xpose.msra.mxu0 %v3110
    %3787 = vmatpush.bf16.xpose.msra.mxu0 %v3108
    %3788 = vmatpush.bf16.xpose.msra.mxu0 %v3106
    %3789 = vmatpush.bf16.xpose.msra.mxu0 %v3104
    %3790 = vmatpush.bf16.xpose.msra.mxu0 %v3102
    %3791 = vmatmul.bf16.gmra.mxu0 %v1832
    %v3792 = vpop.f32.mrf.mxu0
    %v3793 = vadd.f32 %v3779, %v3792
    %v3794 = vpop.f32.mrf.mxu0
    %v3795 = vadd.f32 %v3781, %v3794
    %3796 = vdwg.mxu0
    %3797 = vmatpush.bf16.xpose.msra.mxu0 %v3131
    %3798 = vmatpush.bf16.xpose.msra.mxu0 %v3129
    %3799 = vmatpush.bf16.xpose.msra.mxu0 %v3127
    %3800 = vmatpush.bf16.xpose.msra.mxu0 %v3125
    %3801 = vmatpush.bf16.xpose.msra.mxu0 %v3123
    %3802 = vmatpush.bf16.xpose.msra.mxu0 %v3121
    %3803 = vmatpush.bf16.xpose.msra.mxu0 %v3119
    %3804 = vmatpush.bf16.xpose.msra.mxu0 %v3117
    %3805 = vmatmul.bf16.gmra.mxu0 %v1831
    %v3806 = vpop.f32.mrf.mxu0
    %v3807 = vadd.f32 %v2107, %v3806
    %v3808 = vpop.f32.mrf.mxu0
    %v3809 = vadd.f32 %v2107, %v3808
    %3810 = vdwg.mxu0
    %3811 = vmatpush.bf16.xpose.msra.mxu0 %v3132
    %3812 = vmatpush.bf16.xpose.msra.mxu0 %v3130
    %3813 = vmatpush.bf16.xpose.msra.mxu0 %v3128
    %3814 = vmatpush.bf16.xpose.msra.mxu0 %v3126
    %3815 = vmatpush.bf16.xpose.msra.mxu0 %v3124
    %3816 = vmatpush.bf16.xpose.msra.mxu0 %v3122
    %3817 = vmatpush.bf16.xpose.msra.mxu0 %v3120
    %3818 = vmatpush.bf16.xpose.msra.mxu0 %v3118
    %3819 = vmatmul.bf16.gmra.mxu0 %v1832
    %v3820 = vpop.f32.mrf.mxu0
    %v3821 = vadd.f32 %v3807, %v3820
    %v3822 = vpop.f32.mrf.mxu0
    %v3823 = vadd.f32 %v3809, %v3822
    %3824 = vdwg.mxu0
    %3825 = vmatpush.bf16.xpose.msra.mxu0 %v3147
    %3826 = vmatpush.bf16.xpose.msra.mxu0 %v3145
    %3827 = vmatpush.bf16.xpose.msra.mxu0 %v3143
    %3828 = vmatpush.bf16.xpose.msra.mxu0 %v3141
    %3829 = vmatpush.bf16.xpose.msra.mxu0 %v3139
    %3830 = vmatpush.bf16.xpose.msra.mxu0 %v3137
    %3831 = vmatpush.bf16.xpose.msra.mxu0 %v3135
    %3832 = vmatpush.bf16.xpose.msra.mxu0 %v3133
    %3833 = vmatmul.bf16.gmra.mxu0 %v1831
    %v3834 = vpop.f32.mrf.mxu0
    %v3835 = vadd.f32 %v2108, %v3834
    %v3836 = vpop.f32.mrf.mxu0
    %v3837 = vadd.f32 %v2108, %v3836
    %3838 = vdwg.mxu0
    %3839 = vmatpush.bf16.xpose.msra.mxu0 %v3148
    %3840 = vmatpush.bf16.xpose.msra.mxu0 %v3146
    %3841 = vmatpush.bf16.xpose.msra.mxu0 %v3144
    %3842 = vmatpush.bf16.xpose.msra.mxu0 %v3142
    %3843 = vmatpush.bf16.xpose.msra.mxu0 %v3140
    %3844 = vmatpush.bf16.xpose.msra.mxu0 %v3138
    %3845 = vmatpush.bf16.xpose.msra.mxu0 %v3136
    %3846 = vmatpush.bf16.xpose.msra.mxu0 %v3134
    %3847 = vmatmul.bf16.gmra.mxu0 %v1832
    %v3848 = vpop.f32.mrf.mxu0
    %v3849 = vadd.f32 %v3835, %v3848
    %v3850 = vpop.f32.mrf.mxu0
    %v3851 = vadd.f32 %v3837, %v3850
    %3852 = vdwg.mxu0
    %v3853 = vmax.f32 %v3429, 0.0
    %v3854 = vmax.f32 %v3457, 0.0
    %v3855 = vmax.f32 %v3485, 0.0
    %v3856 = vmax.f32 %v3513, 0.0
    %v3857 = vmax.f32 %v3541, 0.0
    %v3858 = vmax.f32 %v3569, 0.0
    %v3859 = vmax.f32 %v3597, 0.0
    %v3860 = vmax.f32 %v3625, 0.0
    %v3861 = vmax.f32 %v3653, 0.0
    %v3862 = vmax.f32 %v3681, 0.0
    %v3863 = vmax.f32 %v3709, 0.0
    %v3864 = vmax.f32 %v3737, 0.0
    %v3865 = vmax.f32 %v3765, 0.0
    %v3866 = vmax.f32 %v3793, 0.0
    %v3867 = vmax.f32 %v3821, 0.0
    %v3868 = vmax.f32 %v3849, 0.0
    %v3869 = vmax.f32 %v3431, 0.0
    %v3870 = vmax.f32 %v3459, 0.0
    %v3871 = vmax.f32 %v3487, 0.0
    %v3872 = vmax.f32 %v3515, 0.0
    %v3873 = vmax.f32 %v3543, 0.0
    %v3874 = vmax.f32 %v3571, 0.0
    %v3875 = vmax.f32 %v3599, 0.0
    %v3876 = vmax.f32 %v3627, 0.0
    %v3877 = vmax.f32 %v3655, 0.0
    %v3878 = vmax.f32 %v3683, 0.0
    %v3879 = vmax.f32 %v3711, 0.0
    %v3880 = vmax.f32 %v3739, 0.0
    %v3881 = vmax.f32 %v3767, 0.0
    %v3882 = vmax.f32 %v3795, 0.0
    %v3883 = vmax.f32 %v3823, 0.0
    %v3884 = vmax.f32 %v3851, 0.0
    %v3885 = vpack.c.bf16 %v3869, %v3853
    %v3886 = vpack.c.bf16 %v3870, %v3854
    %v3887 = vpack.c.bf16 %v3871, %v3855
    %v3888 = vpack.c.bf16 %v3872, %v3856
    %v3889 = vpack.c.bf16 %v3873, %v3857
    %v3890 = vpack.c.bf16 %v3874, %v3858
    %v3891 = vpack.c.bf16 %v3875, %v3859
    %v3892 = vpack.c.bf16 %v3876, %v3860
    %v3893 = vpack.c.bf16 %v3877, %v3861
    %v3894 = vpack.c.bf16 %v3878, %v3862
    %v3895 = vpack.c.bf16 %v3879, %v3863
    %v3896 = vpack.c.bf16 %v3880, %v3864
    %v3897 = vpack.c.bf16 %v3881, %v3865
    %v3898 = vpack.c.bf16 %v3882, %v3866
    %v3899 = vpack.c.bf16 %v3883, %v3867
    %v3900 = vpack.c.bf16 %v3884, %v3868
    %v3901 = vld [vmem:[#allocation13] sm:$0xff]
    %v3902 = vld [vmem:[#allocation13 + $0x8] sm:$0xff]
    %v3903 = vld [vmem:[#allocation13 + $0x10] sm:$0xff]
    %v3904 = vld [vmem:[#allocation13 + $0x18] sm:$0xff]
    %v3905 = vld [vmem:[#allocation13 + $0x20] sm:$0xff]
    %v3906 = vld [vmem:[#allocation13 + $0x28] sm:$0xff]
    %v3907 = vld [vmem:[#allocation13 + $0x30] sm:$0xff]
    %v3908 = vld [vmem:[#allocation13 + $0x38] sm:$0xff]
    %v3909 = vld [vmem:[#allocation13 + $0x40] sm:$0xff]
    %v3910 = vld [vmem:[#allocation13 + $0x48] sm:$0xff]
    %v3911 = vld [vmem:[#allocation13 + $0x50] sm:$0xff]
    %v3912 = vld [vmem:[#allocation13 + $0x58] sm:$0xff]
    %v3913 = vld [vmem:[#allocation13 + $0x60] sm:$0xff]
    %v3914 = vld [vmem:[#allocation13 + $0x68] sm:$0xff]
    %v3915 = vld [vmem:[#allocation13 + $0x70] sm:$0xff]
    %v3916 = vld [vmem:[#allocation13 + $0x78] sm:$0xff]
    %v3917 = vld [vmem:[#allocation13 + $0x80] sm:$0xff]
    %v3918 = vld [vmem:[#allocation13 + $0x88] sm:$0xff]
    %v3919 = vld [vmem:[#allocation13 + $0x90] sm:$0xff]
    %v3920 = vld [vmem:[#allocation13 + $0x98] sm:$0xff]
    %v3921 = vld [vmem:[#allocation13 + $0xa0] sm:$0xff]
    %v3922 = vld [vmem:[#allocation13 + $0xa8] sm:$0xff]
    %v3923 = vld [vmem:[#allocation13 + $0xb0] sm:$0xff]
    %v3924 = vld [vmem:[#allocation13 + $0xb8] sm:$0xff]
    %v3925 = vld [vmem:[#allocation13 + $0xc0] sm:$0xff]
    %v3926 = vld [vmem:[#allocation13 + $0xc8] sm:$0xff]
    %v3927 = vld [vmem:[#allocation13 + $0xd0] sm:$0xff]
    %v3928 = vld [vmem:[#allocation13 + $0xd8] sm:$0xff]
    %v3929 = vld [vmem:[#allocation13 + $0xe0] sm:$0xff]
    %v3930 = vld [vmem:[#allocation13 + $0xe8] sm:$0xff]
    %v3931 = vld [vmem:[#allocation13 + $0xf0] sm:$0xff]
    %v3932 = vld [vmem:[#allocation13 + $0xf8] sm:$0xff]
    %v3933 = vld [vmem:[#allocation13 + $0x100] sm:$0xff]
    %v3934 = vld [vmem:[#allocation13 + $0x108] sm:$0xff]
    %v3935 = vld [vmem:[#allocation13 + $0x110] sm:$0xff]
    %v3936 = vld [vmem:[#allocation13 + $0x118] sm:$0xff]
    %v3937 = vld [vmem:[#allocation13 + $0x120] sm:$0xff]
    %v3938 = vld [vmem:[#allocation13 + $0x128] sm:$0xff]
    %v3939 = vld [vmem:[#allocation13 + $0x130] sm:$0xff]
    %v3940 = vld [vmem:[#allocation13 + $0x138] sm:$0xff]
    %v3941 = vld [vmem:[#allocation13 + $0x140] sm:$0xff]
    %v3942 = vld [vmem:[#allocation13 + $0x148] sm:$0xff]
    %v3943 = vld [vmem:[#allocation13 + $0x150] sm:$0xff]
    %v3944 = vld [vmem:[#allocation13 + $0x158] sm:$0xff]
    %v3945 = vld [vmem:[#allocation13 + $0x160] sm:$0xff]
    %v3946 = vld [vmem:[#allocation13 + $0x168] sm:$0xff]
    %v3947 = vld [vmem:[#allocation13 + $0x170] sm:$0xff]
    %v3948 = vld [vmem:[#allocation13 + $0x178] sm:$0xff]
    %v3949 = vld [vmem:[#allocation13 + $0x180] sm:$0xff]
    %v3950 = vld [vmem:[#allocation13 + $0x188] sm:$0xff]
    %v3951 = vld [vmem:[#allocation13 + $0x190] sm:$0xff]
    %v3952 = vld [vmem:[#allocation13 + $0x198] sm:$0xff]
    %v3953 = vld [vmem:[#allocation13 + $0x1a0] sm:$0xff]
    %v3954 = vld [vmem:[#allocation13 + $0x1a8] sm:$0xff]
    %v3955 = vld [vmem:[#allocation13 + $0x1b0] sm:$0xff]
    %v3956 = vld [vmem:[#allocation13 + $0x1b8] sm:$0xff]
    %v3957 = vld [vmem:[#allocation13 + $0x1c0] sm:$0xff]
    %v3958 = vld [vmem:[#allocation13 + $0x1c8] sm:$0xff]
    %v3959 = vld [vmem:[#allocation13 + $0x1d0] sm:$0xff]
    %v3960 = vld [vmem:[#allocation13 + $0x1d8] sm:$0xff]
    %v3961 = vld [vmem:[#allocation13 + $0x1e0] sm:$0xff]
    %v3962 = vld [vmem:[#allocation13 + $0x1e8] sm:$0xff]
    %v3963 = vld [vmem:[#allocation13 + $0x1f0] sm:$0xff]
    %v3964 = vld [vmem:[#allocation13 + $0x1f8] sm:$0xff]
    %v3965 = vld [vmem:[#allocation13 + $0x200] sm:$0xff]
    %v3966 = vld [vmem:[#allocation13 + $0x208] sm:$0xff]
    %v3967 = vld [vmem:[#allocation13 + $0x210] sm:$0xff]
    %v3968 = vld [vmem:[#allocation13 + $0x218] sm:$0xff]
    %v3969 = vld [vmem:[#allocation13 + $0x220] sm:$0xff]
    %v3970 = vld [vmem:[#allocation13 + $0x228] sm:$0xff]
    %v3971 = vld [vmem:[#allocation13 + $0x230] sm:$0xff]
    %v3972 = vld [vmem:[#allocation13 + $0x238] sm:$0xff]
    %v3973 = vld [vmem:[#allocation13 + $0x240] sm:$0xff]
    %v3974 = vld [vmem:[#allocation13 + $0x248] sm:$0xff]
    %v3975 = vld [vmem:[#allocation13 + $0x250] sm:$0xff]
    %v3976 = vld [vmem:[#allocation13 + $0x258] sm:$0xff]
    %v3977 = vld [vmem:[#allocation13 + $0x260] sm:$0xff]
    %v3978 = vld [vmem:[#allocation13 + $0x268] sm:$0xff]
    %v3979 = vld [vmem:[#allocation13 + $0x270] sm:$0xff]
    %v3980 = vld [vmem:[#allocation13 + $0x278] sm:$0xff]
    %v3981 = vld [vmem:[#allocation13 + $0x280] sm:$0xff]
    %v3982 = vld [vmem:[#allocation13 + $0x288] sm:$0xff]
    %v3983 = vld [vmem:[#allocation13 + $0x290] sm:$0xff]
    %v3984 = vld [vmem:[#allocation13 + $0x298] sm:$0xff]
    %v3985 = vld [vmem:[#allocation13 + $0x2a0] sm:$0xff]
    %v3986 = vld [vmem:[#allocation13 + $0x2a8] sm:$0xff]
    %v3987 = vld [vmem:[#allocation13 + $0x2b0] sm:$0xff]
    %v3988 = vld [vmem:[#allocation13 + $0x2b8] sm:$0xff]
    %v3989 = vld [vmem:[#allocation13 + $0x2c0] sm:$0xff]
    %v3990 = vld [vmem:[#allocation13 + $0x2c8] sm:$0xff]
    %v3991 = vld [vmem:[#allocation13 + $0x2d0] sm:$0xff]
    %v3992 = vld [vmem:[#allocation13 + $0x2d8] sm:$0xff]
    %v3993 = vld [vmem:[#allocation13 + $0x2e0] sm:$0xff]
    %v3994 = vld [vmem:[#allocation13 + $0x2e8] sm:$0xff]
    %v3995 = vld [vmem:[#allocation13 + $0x2f0] sm:$0xff]
    %v3996 = vld [vmem:[#allocation13 + $0x2f8] sm:$0xff]
    %v3997 = vld [vmem:[#allocation13 + $0x300] sm:$0xff]
    %v3998 = vld [vmem:[#allocation13 + $0x308] sm:$0xff]
    %v3999 = vld [vmem:[#allocation13 + $0x310] sm:$0xff]
    %v4000 = vld [vmem:[#allocation13 + $0x318] sm:$0xff]
    %v4001 = vld [vmem:[#allocation13 + $0x320] sm:$0xff]
    %v4002 = vld [vmem:[#allocation13 + $0x328] sm:$0xff]
    %v4003 = vld [vmem:[#allocation13 + $0x330] sm:$0xff]
    %v4004 = vld [vmem:[#allocation13 + $0x338] sm:$0xff]
    %v4005 = vld [vmem:[#allocation13 + $0x340] sm:$0xff]
    %v4006 = vld [vmem:[#allocation13 + $0x348] sm:$0xff]
    %v4007 = vld [vmem:[#allocation13 + $0x350] sm:$0xff]
    %v4008 = vld [vmem:[#allocation13 + $0x358] sm:$0xff]
    %v4009 = vld [vmem:[#allocation13 + $0x360] sm:$0xff]
    %v4010 = vld [vmem:[#allocation13 + $0x368] sm:$0xff]
    %v4011 = vld [vmem:[#allocation13 + $0x370] sm:$0xff]
    %v4012 = vld [vmem:[#allocation13 + $0x378] sm:$0xff]
    %v4013 = vld [vmem:[#allocation13 + $0x380] sm:$0xff]
    %v4014 = vld [vmem:[#allocation13 + $0x388] sm:$0xff]
    %v4015 = vld [vmem:[#allocation13 + $0x390] sm:$0xff]
    %v4016 = vld [vmem:[#allocation13 + $0x398] sm:$0xff]
    %v4017 = vld [vmem:[#allocation13 + $0x3a0] sm:$0xff]
    %v4018 = vld [vmem:[#allocation13 + $0x3a8] sm:$0xff]
    %v4019 = vld [vmem:[#allocation13 + $0x3b0] sm:$0xff]
    %v4020 = vld [vmem:[#allocation13 + $0x3b8] sm:$0xff]
    %v4021 = vld [vmem:[#allocation13 + $0x3c0] sm:$0xff]
    %v4022 = vld [vmem:[#allocation13 + $0x3c8] sm:$0xff]
    %v4023 = vld [vmem:[#allocation13 + $0x3d0] sm:$0xff]
    %v4024 = vld [vmem:[#allocation13 + $0x3d8] sm:$0xff]
    %v4025 = vld [vmem:[#allocation13 + $0x3e0] sm:$0xff]
    %v4026 = vld [vmem:[#allocation13 + $0x3e8] sm:$0xff]
    %v4027 = vld [vmem:[#allocation13 + $0x3f0] sm:$0xff]
    %v4028 = vld [vmem:[#allocation13 + $0x3f8] sm:$0xff]
    %v4029 = vld [vmem:[#allocation13 + $0x400] sm:$0xff]
    %v4030 = vld [vmem:[#allocation13 + $0x408] sm:$0xff]
    %v4031 = vld [vmem:[#allocation13 + $0x410] sm:$0xff]
    %v4032 = vld [vmem:[#allocation13 + $0x418] sm:$0xff]
    %v4033 = vld [vmem:[#allocation13 + $0x420] sm:$0xff]
    %v4034 = vld [vmem:[#allocation13 + $0x428] sm:$0xff]
    %v4035 = vld [vmem:[#allocation13 + $0x430] sm:$0xff]
    %v4036 = vld [vmem:[#allocation13 + $0x438] sm:$0xff]
    %v4037 = vld [vmem:[#allocation13 + $0x440] sm:$0xff]
    %v4038 = vld [vmem:[#allocation13 + $0x448] sm:$0xff]
    %v4039 = vld [vmem:[#allocation13 + $0x450] sm:$0xff]
    %v4040 = vld [vmem:[#allocation13 + $0x458] sm:$0xff]
    %v4041 = vld [vmem:[#allocation13 + $0x460] sm:$0xff]
    %v4042 = vld [vmem:[#allocation13 + $0x468] sm:$0xff]
    %v4043 = vld [vmem:[#allocation13 + $0x470] sm:$0xff]
    %v4044 = vld [vmem:[#allocation13 + $0x478] sm:$0xff]
    %v4045 = vld [vmem:[#allocation13 + $0x480] sm:$0xff]
    %v4046 = vld [vmem:[#allocation13 + $0x488] sm:$0xff]
    %v4047 = vld [vmem:[#allocation13 + $0x490] sm:$0xff]
    %v4048 = vld [vmem:[#allocation13 + $0x498] sm:$0xff]
    %v4049 = vld [vmem:[#allocation13 + $0x4a0] sm:$0xff]
    %v4050 = vld [vmem:[#allocation13 + $0x4a8] sm:$0xff]
    %v4051 = vld [vmem:[#allocation13 + $0x4b0] sm:$0xff]
    %v4052 = vld [vmem:[#allocation13 + $0x4b8] sm:$0xff]
    %v4053 = vld [vmem:[#allocation13 + $0x4c0] sm:$0xff]
    %v4054 = vld [vmem:[#allocation13 + $0x4c8] sm:$0xff]
    %v4055 = vld [vmem:[#allocation13 + $0x4d0] sm:$0xff]
    %v4056 = vld [vmem:[#allocation13 + $0x4d8] sm:$0xff]
    %v4057 = vld [vmem:[#allocation13 + $0x4e0] sm:$0xff]
    %v4058 = vld [vmem:[#allocation13 + $0x4e8] sm:$0xff]
    %v4059 = vld [vmem:[#allocation13 + $0x4f0] sm:$0xff]
    %v4060 = vld [vmem:[#allocation13 + $0x4f8] sm:$0xff]
    %v4061 = vld [vmem:[#allocation13 + $0x500] sm:$0xff]
    %v4062 = vld [vmem:[#allocation13 + $0x508] sm:$0xff]
    %v4063 = vld [vmem:[#allocation13 + $0x510] sm:$0xff]
    %v4064 = vld [vmem:[#allocation13 + $0x518] sm:$0xff]
    %v4065 = vld [vmem:[#allocation13 + $0x520] sm:$0xff]
    %v4066 = vld [vmem:[#allocation13 + $0x528] sm:$0xff]
    %v4067 = vld [vmem:[#allocation13 + $0x530] sm:$0xff]
    %v4068 = vld [vmem:[#allocation13 + $0x538] sm:$0xff]
    %v4069 = vld [vmem:[#allocation13 + $0x540] sm:$0xff]
    %v4070 = vld [vmem:[#allocation13 + $0x548] sm:$0xff]
    %v4071 = vld [vmem:[#allocation13 + $0x550] sm:$0xff]
    %v4072 = vld [vmem:[#allocation13 + $0x558] sm:$0xff]
    %v4073 = vld [vmem:[#allocation13 + $0x560] sm:$0xff]
    %v4074 = vld [vmem:[#allocation13 + $0x568] sm:$0xff]
    %v4075 = vld [vmem:[#allocation13 + $0x570] sm:$0xff]
    %v4076 = vld [vmem:[#allocation13 + $0x578] sm:$0xff]
    %v4077 = vld [vmem:[#allocation13 + $0x580] sm:$0xff]
    %v4078 = vld [vmem:[#allocation13 + $0x588] sm:$0xff]
    %v4079 = vld [vmem:[#allocation13 + $0x590] sm:$0xff]
    %v4080 = vld [vmem:[#allocation13 + $0x598] sm:$0xff]
    %v4081 = vld [vmem:[#allocation13 + $0x5a0] sm:$0xff]
    %v4082 = vld [vmem:[#allocation13 + $0x5a8] sm:$0xff]
    %v4083 = vld [vmem:[#allocation13 + $0x5b0] sm:$0xff]
    %v4084 = vld [vmem:[#allocation13 + $0x5b8] sm:$0xff]
    %v4085 = vld [vmem:[#allocation13 + $0x5c0] sm:$0xff]
    %v4086 = vld [vmem:[#allocation13 + $0x5c8] sm:$0xff]
    %v4087 = vld [vmem:[#allocation13 + $0x5d0] sm:$0xff]
    %v4088 = vld [vmem:[#allocation13 + $0x5d8] sm:$0xff]
    %v4089 = vld [vmem:[#allocation13 + $0x5e0] sm:$0xff]
    %v4090 = vld [vmem:[#allocation13 + $0x5e8] sm:$0xff]
    %v4091 = vld [vmem:[#allocation13 + $0x5f0] sm:$0xff]
    %v4092 = vld [vmem:[#allocation13 + $0x5f8] sm:$0xff]
    %v4093 = vld [vmem:[#allocation13 + $0x600] sm:$0xff]
    %v4094 = vld [vmem:[#allocation13 + $0x608] sm:$0xff]
    %v4095 = vld [vmem:[#allocation13 + $0x610] sm:$0xff]
    %v4096 = vld [vmem:[#allocation13 + $0x618] sm:$0xff]
    %v4097 = vld [vmem:[#allocation13 + $0x620] sm:$0xff]
    %v4098 = vld [vmem:[#allocation13 + $0x628] sm:$0xff]
    %v4099 = vld [vmem:[#allocation13 + $0x630] sm:$0xff]
    %v4100 = vld [vmem:[#allocation13 + $0x638] sm:$0xff]
    %v4101 = vld [vmem:[#allocation13 + $0x640] sm:$0xff]
    %v4102 = vld [vmem:[#allocation13 + $0x648] sm:$0xff]
    %v4103 = vld [vmem:[#allocation13 + $0x650] sm:$0xff]
    %v4104 = vld [vmem:[#allocation13 + $0x658] sm:$0xff]
    %v4105 = vld [vmem:[#allocation13 + $0x660] sm:$0xff]
    %v4106 = vld [vmem:[#allocation13 + $0x668] sm:$0xff]
    %v4107 = vld [vmem:[#allocation13 + $0x670] sm:$0xff]
    %v4108 = vld [vmem:[#allocation13 + $0x678] sm:$0xff]
    %v4109 = vld [vmem:[#allocation13 + $0x680] sm:$0xff]
    %v4110 = vld [vmem:[#allocation13 + $0x688] sm:$0xff]
    %v4111 = vld [vmem:[#allocation13 + $0x690] sm:$0xff]
    %v4112 = vld [vmem:[#allocation13 + $0x698] sm:$0xff]
    %v4113 = vld [vmem:[#allocation13 + $0x6a0] sm:$0xff]
    %v4114 = vld [vmem:[#allocation13 + $0x6a8] sm:$0xff]
    %v4115 = vld [vmem:[#allocation13 + $0x6b0] sm:$0xff]
    %v4116 = vld [vmem:[#allocation13 + $0x6b8] sm:$0xff]
    %v4117 = vld [vmem:[#allocation13 + $0x6c0] sm:$0xff]
    %v4118 = vld [vmem:[#allocation13 + $0x6c8] sm:$0xff]
    %v4119 = vld [vmem:[#allocation13 + $0x6d0] sm:$0xff]
    %v4120 = vld [vmem:[#allocation13 + $0x6d8] sm:$0xff]
    %v4121 = vld [vmem:[#allocation13 + $0x6e0] sm:$0xff]
    %v4122 = vld [vmem:[#allocation13 + $0x6e8] sm:$0xff]
    %v4123 = vld [vmem:[#allocation13 + $0x6f0] sm:$0xff]
    %v4124 = vld [vmem:[#allocation13 + $0x6f8] sm:$0xff]
    %v4125 = vld [vmem:[#allocation13 + $0x700] sm:$0xff]
    %v4126 = vld [vmem:[#allocation13 + $0x708] sm:$0xff]
    %v4127 = vld [vmem:[#allocation13 + $0x710] sm:$0xff]
    %v4128 = vld [vmem:[#allocation13 + $0x718] sm:$0xff]
    %v4129 = vld [vmem:[#allocation13 + $0x720] sm:$0xff]
    %v4130 = vld [vmem:[#allocation13 + $0x728] sm:$0xff]
    %v4131 = vld [vmem:[#allocation13 + $0x730] sm:$0xff]
    %v4132 = vld [vmem:[#allocation13 + $0x738] sm:$0xff]
    %v4133 = vld [vmem:[#allocation13 + $0x740] sm:$0xff]
    %v4134 = vld [vmem:[#allocation13 + $0x748] sm:$0xff]
    %v4135 = vld [vmem:[#allocation13 + $0x750] sm:$0xff]
    %v4136 = vld [vmem:[#allocation13 + $0x758] sm:$0xff]
    %v4137 = vld [vmem:[#allocation13 + $0x760] sm:$0xff]
    %v4138 = vld [vmem:[#allocation13 + $0x768] sm:$0xff]
    %v4139 = vld [vmem:[#allocation13 + $0x770] sm:$0xff]
    %v4140 = vld [vmem:[#allocation13 + $0x778] sm:$0xff]
    %v4141 = vld [vmem:[#allocation13 + $0x780] sm:$0xff]
    %v4142 = vld [vmem:[#allocation13 + $0x788] sm:$0xff]
    %v4143 = vld [vmem:[#allocation13 + $0x790] sm:$0xff]
    %v4144 = vld [vmem:[#allocation13 + $0x798] sm:$0xff]
    %v4145 = vld [vmem:[#allocation13 + $0x7a0] sm:$0xff]
    %v4146 = vld [vmem:[#allocation13 + $0x7a8] sm:$0xff]
    %v4147 = vld [vmem:[#allocation13 + $0x7b0] sm:$0xff]
    %v4148 = vld [vmem:[#allocation13 + $0x7b8] sm:$0xff]
    %v4149 = vld [vmem:[#allocation13 + $0x7c0] sm:$0xff]
    %v4150 = vld [vmem:[#allocation13 + $0x7c8] sm:$0xff]
    %v4151 = vld [vmem:[#allocation13 + $0x7d0] sm:$0xff]
    %v4152 = vld [vmem:[#allocation13 + $0x7d8] sm:$0xff]
    %v4153 = vld [vmem:[#allocation13 + $0x7e0] sm:$0xff]
    %v4154 = vld [vmem:[#allocation13 + $0x7e8] sm:$0xff]
    %v4155 = vld [vmem:[#allocation13 + $0x7f0] sm:$0xff]
    %v4156 = vld [vmem:[#allocation13 + $0x7f8] sm:$0xff]
    %v4157 = vld [vmem:[%s12] sm:$0x3]
    %v4159 = vperm.slane %v4157, 0
    %v4160 = vperm.slane %v4157, 1
    %v4419 = vunpack.c.l.b16 %v3901
    %v4420 = vunpack.c.h.b16 %v3901
    %v4421 = vunpack.c.l.b16 %v3902
    %v4422 = vunpack.c.h.b16 %v3902
    %v4423 = vunpack.c.l.b16 %v3903
    %v4424 = vunpack.c.h.b16 %v3903
    %v4425 = vunpack.c.l.b16 %v3904
    %v4426 = vunpack.c.h.b16 %v3904
    %v4427 = vunpack.c.l.b16 %v3905
    %v4428 = vunpack.c.h.b16 %v3905
    %v4429 = vunpack.c.l.b16 %v3906
    %v4430 = vunpack.c.h.b16 %v3906
    %v4431 = vunpack.c.l.b16 %v3907
    %v4432 = vunpack.c.h.b16 %v3907
    %v4433 = vunpack.c.l.b16 %v3908
    %v4434 = vunpack.c.h.b16 %v3908
    %v4435 = vunpack.c.l.b16 %v3909
    %v4436 = vunpack.c.h.b16 %v3909
    %v4437 = vunpack.c.l.b16 %v3910
    %v4438 = vunpack.c.h.b16 %v3910
    %v4439 = vunpack.c.l.b16 %v3911
    %v4440 = vunpack.c.h.b16 %v3911
    %v4441 = vunpack.c.l.b16 %v3912
    %v4442 = vunpack.c.h.b16 %v3912
    %v4443 = vunpack.c.l.b16 %v3913
    %v4444 = vunpack.c.h.b16 %v3913
    %v4445 = vunpack.c.l.b16 %v3914
    %v4446 = vunpack.c.h.b16 %v3914
    %v4447 = vunpack.c.l.b16 %v3915
    %v4448 = vunpack.c.h.b16 %v3915
    %v4449 = vunpack.c.l.b16 %v3916
    %v4450 = vunpack.c.h.b16 %v3916
    %v4451 = vunpack.c.l.b16 %v3917
    %v4452 = vunpack.c.h.b16 %v3917
    %v4453 = vunpack.c.l.b16 %v3918
    %v4454 = vunpack.c.h.b16 %v3918
    %v4455 = vunpack.c.l.b16 %v3919
    %v4456 = vunpack.c.h.b16 %v3919
    %v4457 = vunpack.c.l.b16 %v3920
    %v4458 = vunpack.c.h.b16 %v3920
    %v4459 = vunpack.c.l.b16 %v3921
    %v4460 = vunpack.c.h.b16 %v3921
    %v4461 = vunpack.c.l.b16 %v3922
    %v4462 = vunpack.c.h.b16 %v3922
    %v4463 = vunpack.c.l.b16 %v3923
    %v4464 = vunpack.c.h.b16 %v3923
    %v4465 = vunpack.c.l.b16 %v3924
    %v4466 = vunpack.c.h.b16 %v3924
    %v4467 = vunpack.c.l.b16 %v3925
    %v4468 = vunpack.c.h.b16 %v3925
    %v4469 = vunpack.c.l.b16 %v3926
    %v4470 = vunpack.c.h.b16 %v3926
    %v4471 = vunpack.c.l.b16 %v3927
    %v4472 = vunpack.c.h.b16 %v3927
    %v4473 = vunpack.c.l.b16 %v3928
    %v4474 = vunpack.c.h.b16 %v3928
    %v4475 = vunpack.c.l.b16 %v3929
    %v4476 = vunpack.c.h.b16 %v3929
    %v4477 = vunpack.c.l.b16 %v3930
    %v4478 = vunpack.c.h.b16 %v3930
    %v4479 = vunpack.c.l.b16 %v3931
    %v4480 = vunpack.c.h.b16 %v3931
    %v4481 = vunpack.c.l.b16 %v3932
    %v4482 = vunpack.c.h.b16 %v3932
    %v4483 = vunpack.c.l.b16 %v3933
    %v4484 = vunpack.c.h.b16 %v3933
    %v4485 = vunpack.c.l.b16 %v3934
    %v4486 = vunpack.c.h.b16 %v3934
    %v4487 = vunpack.c.l.b16 %v3935
    %v4488 = vunpack.c.h.b16 %v3935
    %v4489 = vunpack.c.l.b16 %v3936
    %v4490 = vunpack.c.h.b16 %v3936
    %v4491 = vunpack.c.l.b16 %v3937
    %v4492 = vunpack.c.h.b16 %v3937
    %v4493 = vunpack.c.l.b16 %v3938
    %v4494 = vunpack.c.h.b16 %v3938
    %v4495 = vunpack.c.l.b16 %v3939
    %v4496 = vunpack.c.h.b16 %v3939
    %v4497 = vunpack.c.l.b16 %v3940
    %v4498 = vunpack.c.h.b16 %v3940
    %v4499 = vunpack.c.l.b16 %v3941
    %v4500 = vunpack.c.h.b16 %v3941
    %v4501 = vunpack.c.l.b16 %v3942
    %v4502 = vunpack.c.h.b16 %v3942
    %v4503 = vunpack.c.l.b16 %v3943
    %v4504 = vunpack.c.h.b16 %v3943
    %v4505 = vunpack.c.l.b16 %v3944
    %v4506 = vunpack.c.h.b16 %v3944
    %v4507 = vunpack.c.l.b16 %v3945
    %v4508 = vunpack.c.h.b16 %v3945
    %v4509 = vunpack.c.l.b16 %v3946
    %v4510 = vunpack.c.h.b16 %v3946
    %v4511 = vunpack.c.l.b16 %v3947
    %v4512 = vunpack.c.h.b16 %v3947
    %v4513 = vunpack.c.l.b16 %v3948
    %v4514 = vunpack.c.h.b16 %v3948
    %v4515 = vunpack.c.l.b16 %v3949
    %v4516 = vunpack.c.h.b16 %v3949
    %v4517 = vunpack.c.l.b16 %v3950
    %v4518 = vunpack.c.h.b16 %v3950
    %v4519 = vunpack.c.l.b16 %v3951
    %v4520 = vunpack.c.h.b16 %v3951
    %v4521 = vunpack.c.l.b16 %v3952
    %v4522 = vunpack.c.h.b16 %v3952
    %v4523 = vunpack.c.l.b16 %v3953
    %v4524 = vunpack.c.h.b16 %v3953
    %v4525 = vunpack.c.l.b16 %v3954
    %v4526 = vunpack.c.h.b16 %v3954
    %v4527 = vunpack.c.l.b16 %v3955
    %v4528 = vunpack.c.h.b16 %v3955
    %v4529 = vunpack.c.l.b16 %v3956
    %v4530 = vunpack.c.h.b16 %v3956
    %v4531 = vunpack.c.l.b16 %v3957
    %v4532 = vunpack.c.h.b16 %v3957
    %v4533 = vunpack.c.l.b16 %v3958
    %v4534 = vunpack.c.h.b16 %v3958
    %v4535 = vunpack.c.l.b16 %v3959
    %v4536 = vunpack.c.h.b16 %v3959
    %v4537 = vunpack.c.l.b16 %v3960
    %v4538 = vunpack.c.h.b16 %v3960
    %v4539 = vunpack.c.l.b16 %v3961
    %v4540 = vunpack.c.h.b16 %v3961
    %v4541 = vunpack.c.l.b16 %v3962
    %v4542 = vunpack.c.h.b16 %v3962
    %v4543 = vunpack.c.l.b16 %v3963
    %v4544 = vunpack.c.h.b16 %v3963
    %v4545 = vunpack.c.l.b16 %v3964
    %v4546 = vunpack.c.h.b16 %v3964
    %v4547 = vunpack.c.l.b16 %v3965
    %v4548 = vunpack.c.h.b16 %v3965
    %v4549 = vunpack.c.l.b16 %v3966
    %v4550 = vunpack.c.h.b16 %v3966
    %v4551 = vunpack.c.l.b16 %v3967
    %v4552 = vunpack.c.h.b16 %v3967
    %v4553 = vunpack.c.l.b16 %v3968
    %v4554 = vunpack.c.h.b16 %v3968
    %v4555 = vunpack.c.l.b16 %v3969
    %v4556 = vunpack.c.h.b16 %v3969
    %v4557 = vunpack.c.l.b16 %v3970
    %v4558 = vunpack.c.h.b16 %v3970
    %v4559 = vunpack.c.l.b16 %v3971
    %v4560 = vunpack.c.h.b16 %v3971
    %v4561 = vunpack.c.l.b16 %v3972
    %v4562 = vunpack.c.h.b16 %v3972
    %v4563 = vunpack.c.l.b16 %v3973
    %v4564 = vunpack.c.h.b16 %v3973
    %v4565 = vunpack.c.l.b16 %v3974
    %v4566 = vunpack.c.h.b16 %v3974
    %v4567 = vunpack.c.l.b16 %v3975
    %v4568 = vunpack.c.h.b16 %v3975
    %v4569 = vunpack.c.l.b16 %v3976
    %v4570 = vunpack.c.h.b16 %v3976
    %v4571 = vunpack.c.l.b16 %v3977
    %v4572 = vunpack.c.h.b16 %v3977
    %v4573 = vunpack.c.l.b16 %v3978
    %v4574 = vunpack.c.h.b16 %v3978
    %v4575 = vunpack.c.l.b16 %v3979
    %v4576 = vunpack.c.h.b16 %v3979
    %v4577 = vunpack.c.l.b16 %v3980
    %v4578 = vunpack.c.h.b16 %v3980
    %v4579 = vunpack.c.l.b16 %v3981
    %v4580 = vunpack.c.h.b16 %v3981
    %v4581 = vunpack.c.l.b16 %v3982
    %v4582 = vunpack.c.h.b16 %v3982
    %v4583 = vunpack.c.l.b16 %v3983
    %v4584 = vunpack.c.h.b16 %v3983
    %v4585 = vunpack.c.l.b16 %v3984
    %v4586 = vunpack.c.h.b16 %v3984
    %v4587 = vunpack.c.l.b16 %v3985
    %v4588 = vunpack.c.h.b16 %v3985
    %v4589 = vunpack.c.l.b16 %v3986
    %v4590 = vunpack.c.h.b16 %v3986
    %v4591 = vunpack.c.l.b16 %v3987
    %v4592 = vunpack.c.h.b16 %v3987
    %v4593 = vunpack.c.l.b16 %v3988
    %v4594 = vunpack.c.h.b16 %v3988
    %v4595 = vunpack.c.l.b16 %v3989
    %v4596 = vunpack.c.h.b16 %v3989
    %v4597 = vunpack.c.l.b16 %v3990
    %v4598 = vunpack.c.h.b16 %v3990
    %v4599 = vunpack.c.l.b16 %v3991
    %v4600 = vunpack.c.h.b16 %v3991
    %v4601 = vunpack.c.l.b16 %v3992
    %v4602 = vunpack.c.h.b16 %v3992
    %v4603 = vunpack.c.l.b16 %v3993
    %v4604 = vunpack.c.h.b16 %v3993
    %v4605 = vunpack.c.l.b16 %v3994
    %v4606 = vunpack.c.h.b16 %v3994
    %v4607 = vunpack.c.l.b16 %v3995
    %v4608 = vunpack.c.h.b16 %v3995
    %v4609 = vunpack.c.l.b16 %v3996
    %v4610 = vunpack.c.h.b16 %v3996
    %v4611 = vunpack.c.l.b16 %v3997
    %v4612 = vunpack.c.h.b16 %v3997
    %v4613 = vunpack.c.l.b16 %v3998
    %v4614 = vunpack.c.h.b16 %v3998
    %v4615 = vunpack.c.l.b16 %v3999
    %v4616 = vunpack.c.h.b16 %v3999
    %v4617 = vunpack.c.l.b16 %v4000
    %v4618 = vunpack.c.h.b16 %v4000
    %v4619 = vunpack.c.l.b16 %v4001
    %v4620 = vunpack.c.h.b16 %v4001
    %v4621 = vunpack.c.l.b16 %v4002
    %v4622 = vunpack.c.h.b16 %v4002
    %v4623 = vunpack.c.l.b16 %v4003
    %v4624 = vunpack.c.h.b16 %v4003
    %v4625 = vunpack.c.l.b16 %v4004
    %v4626 = vunpack.c.h.b16 %v4004
    %v4627 = vunpack.c.l.b16 %v4005
    %v4628 = vunpack.c.h.b16 %v4005
    %v4629 = vunpack.c.l.b16 %v4006
    %v4630 = vunpack.c.h.b16 %v4006
    %v4631 = vunpack.c.l.b16 %v4007
    %v4632 = vunpack.c.h.b16 %v4007
    %v4633 = vunpack.c.l.b16 %v4008
    %v4634 = vunpack.c.h.b16 %v4008
    %v4635 = vunpack.c.l.b16 %v4009
    %v4636 = vunpack.c.h.b16 %v4009
    %v4637 = vunpack.c.l.b16 %v4010
    %v4638 = vunpack.c.h.b16 %v4010
    %v4639 = vunpack.c.l.b16 %v4011
    %v4640 = vunpack.c.h.b16 %v4011
    %v4641 = vunpack.c.l.b16 %v4012
    %v4642 = vunpack.c.h.b16 %v4012
    %v4643 = vunpack.c.l.b16 %v4013
    %v4644 = vunpack.c.h.b16 %v4013
    %v4645 = vunpack.c.l.b16 %v4014
    %v4646 = vunpack.c.h.b16 %v4014
    %v4647 = vunpack.c.l.b16 %v4015
    %v4648 = vunpack.c.h.b16 %v4015
    %v4649 = vunpack.c.l.b16 %v4016
    %v4650 = vunpack.c.h.b16 %v4016
    %v4651 = vunpack.c.l.b16 %v4017
    %v4652 = vunpack.c.h.b16 %v4017
    %v4653 = vunpack.c.l.b16 %v4018
    %v4654 = vunpack.c.h.b16 %v4018
    %v4655 = vunpack.c.l.b16 %v4019
    %v4656 = vunpack.c.h.b16 %v4019
    %v4657 = vunpack.c.l.b16 %v4020
    %v4658 = vunpack.c.h.b16 %v4020
    %v4659 = vunpack.c.l.b16 %v4021
    %v4660 = vunpack.c.h.b16 %v4021
    %v4661 = vunpack.c.l.b16 %v4022
    %v4662 = vunpack.c.h.b16 %v4022
    %v4663 = vunpack.c.l.b16 %v4023
    %v4664 = vunpack.c.h.b16 %v4023
    %v4665 = vunpack.c.l.b16 %v4024
    %v4666 = vunpack.c.h.b16 %v4024
    %v4667 = vunpack.c.l.b16 %v4025
    %v4668 = vunpack.c.h.b16 %v4025
    %v4669 = vunpack.c.l.b16 %v4026
    %v4670 = vunpack.c.h.b16 %v4026
    %v4671 = vunpack.c.l.b16 %v4027
    %v4672 = vunpack.c.h.b16 %v4027
    %v4673 = vunpack.c.l.b16 %v4028
    %v4674 = vunpack.c.h.b16 %v4028
    %v4675 = vunpack.c.l.b16 %v4029
    %v4676 = vunpack.c.h.b16 %v4029
    %v4677 = vunpack.c.l.b16 %v4030
    %v4678 = vunpack.c.h.b16 %v4030
    %v4679 = vunpack.c.l.b16 %v4031
    %v4680 = vunpack.c.h.b16 %v4031
    %v4681 = vunpack.c.l.b16 %v4032
    %v4682 = vunpack.c.h.b16 %v4032
    %v4683 = vunpack.c.l.b16 %v4033
    %v4684 = vunpack.c.h.b16 %v4033
    %v4685 = vunpack.c.l.b16 %v4034
    %v4686 = vunpack.c.h.b16 %v4034
    %v4687 = vunpack.c.l.b16 %v4035
    %v4688 = vunpack.c.h.b16 %v4035
    %v4689 = vunpack.c.l.b16 %v4036
    %v4690 = vunpack.c.h.b16 %v4036
    %v4691 = vunpack.c.l.b16 %v4037
    %v4692 = vunpack.c.h.b16 %v4037
    %v4693 = vunpack.c.l.b16 %v4038
    %v4694 = vunpack.c.h.b16 %v4038
    %v4695 = vunpack.c.l.b16 %v4039
    %v4696 = vunpack.c.h.b16 %v4039
    %v4697 = vunpack.c.l.b16 %v4040
    %v4698 = vunpack.c.h.b16 %v4040
    %v4699 = vunpack.c.l.b16 %v4041
    %v4700 = vunpack.c.h.b16 %v4041
    %v4701 = vunpack.c.l.b16 %v4042
    %v4702 = vunpack.c.h.b16 %v4042
    %v4703 = vunpack.c.l.b16 %v4043
    %v4704 = vunpack.c.h.b16 %v4043
    %v4705 = vunpack.c.l.b16 %v4044
    %v4706 = vunpack.c.h.b16 %v4044
    %v4707 = vunpack.c.l.b16 %v4045
    %v4708 = vunpack.c.h.b16 %v4045
    %v4709 = vunpack.c.l.b16 %v4046
    %v4710 = vunpack.c.h.b16 %v4046
    %v4711 = vunpack.c.l.b16 %v4047
    %v4712 = vunpack.c.h.b16 %v4047
    %v4713 = vunpack.c.l.b16 %v4048
    %v4714 = vunpack.c.h.b16 %v4048
    %v4715 = vunpack.c.l.b16 %v4049
    %v4716 = vunpack.c.h.b16 %v4049
    %v4717 = vunpack.c.l.b16 %v4050
    %v4718 = vunpack.c.h.b16 %v4050
    %v4719 = vunpack.c.l.b16 %v4051
    %v4720 = vunpack.c.h.b16 %v4051
    %v4721 = vunpack.c.l.b16 %v4052
    %v4722 = vunpack.c.h.b16 %v4052
    %v4723 = vunpack.c.l.b16 %v4053
    %v4724 = vunpack.c.h.b16 %v4053
    %v4725 = vunpack.c.l.b16 %v4054
    %v4726 = vunpack.c.h.b16 %v4054
    %v4727 = vunpack.c.l.b16 %v4055
    %v4728 = vunpack.c.h.b16 %v4055
    %v4729 = vunpack.c.l.b16 %v4056
    %v4730 = vunpack.c.h.b16 %v4056
    %v4731 = vunpack.c.l.b16 %v4057
    %v4732 = vunpack.c.h.b16 %v4057
    %v4733 = vunpack.c.l.b16 %v4058
    %v4734 = vunpack.c.h.b16 %v4058
    %v4735 = vunpack.c.l.b16 %v4059
    %v4736 = vunpack.c.h.b16 %v4059
    %v4737 = vunpack.c.l.b16 %v4060
    %v4738 = vunpack.c.h.b16 %v4060
    %v4739 = vunpack.c.l.b16 %v4061
    %v4740 = vunpack.c.h.b16 %v4061
    %v4741 = vunpack.c.l.b16 %v4062
    %v4742 = vunpack.c.h.b16 %v4062
    %v4743 = vunpack.c.l.b16 %v4063
    %v4744 = vunpack.c.h.b16 %v4063
    %v4745 = vunpack.c.l.b16 %v4064
    %v4746 = vunpack.c.h.b16 %v4064
    %v4747 = vunpack.c.l.b16 %v4065
    %v4748 = vunpack.c.h.b16 %v4065
    %v4749 = vunpack.c.l.b16 %v4066
    %v4750 = vunpack.c.h.b16 %v4066
    %v4751 = vunpack.c.l.b16 %v4067
    %v4752 = vunpack.c.h.b16 %v4067
    %v4753 = vunpack.c.l.b16 %v4068
    %v4754 = vunpack.c.h.b16 %v4068
    %v4755 = vunpack.c.l.b16 %v4069
    %v4756 = vunpack.c.h.b16 %v4069
    %v4757 = vunpack.c.l.b16 %v4070
    %v4758 = vunpack.c.h.b16 %v4070
    %v4759 = vunpack.c.l.b16 %v4071
    %v4760 = vunpack.c.h.b16 %v4071
    %v4761 = vunpack.c.l.b16 %v4072
    %v4762 = vunpack.c.h.b16 %v4072
    %v4763 = vunpack.c.l.b16 %v4073
    %v4764 = vunpack.c.h.b16 %v4073
    %v4765 = vunpack.c.l.b16 %v4074
    %v4766 = vunpack.c.h.b16 %v4074
    %v4767 = vunpack.c.l.b16 %v4075
    %v4768 = vunpack.c.h.b16 %v4075
    %v4769 = vunpack.c.l.b16 %v4076
    %v4770 = vunpack.c.h.b16 %v4076
    %v4771 = vunpack.c.l.b16 %v4077
    %v4772 = vunpack.c.h.b16 %v4077
    %v4773 = vunpack.c.l.b16 %v4078
    %v4774 = vunpack.c.h.b16 %v4078
    %v4775 = vunpack.c.l.b16 %v4079
    %v4776 = vunpack.c.h.b16 %v4079
    %v4777 = vunpack.c.l.b16 %v4080
    %v4778 = vunpack.c.h.b16 %v4080
    %v4779 = vunpack.c.l.b16 %v4081
    %v4780 = vunpack.c.h.b16 %v4081
    %v4781 = vunpack.c.l.b16 %v4082
    %v4782 = vunpack.c.h.b16 %v4082
    %v4783 = vunpack.c.l.b16 %v4083
    %v4784 = vunpack.c.h.b16 %v4083
    %v4785 = vunpack.c.l.b16 %v4084
    %v4786 = vunpack.c.h.b16 %v4084
    %v4787 = vunpack.c.l.b16 %v4085
    %v4788 = vunpack.c.h.b16 %v4085
    %v4789 = vunpack.c.l.b16 %v4086
    %v4790 = vunpack.c.h.b16 %v4086
    %v4791 = vunpack.c.l.b16 %v4087
    %v4792 = vunpack.c.h.b16 %v4087
    %v4793 = vunpack.c.l.b16 %v4088
    %v4794 = vunpack.c.h.b16 %v4088
    %v4795 = vunpack.c.l.b16 %v4089
    %v4796 = vunpack.c.h.b16 %v4089
    %v4797 = vunpack.c.l.b16 %v4090
    %v4798 = vunpack.c.h.b16 %v4090
    %v4799 = vunpack.c.l.b16 %v4091
    %v4800 = vunpack.c.h.b16 %v4091
    %v4801 = vunpack.c.l.b16 %v4092
    %v4802 = vunpack.c.h.b16 %v4092
    %v4803 = vunpack.c.l.b16 %v4093
    %v4804 = vunpack.c.h.b16 %v4093
    %v4805 = vunpack.c.l.b16 %v4094
    %v4806 = vunpack.c.h.b16 %v4094
    %v4807 = vunpack.c.l.b16 %v4095
    %v4808 = vunpack.c.h.b16 %v4095
    %v4809 = vunpack.c.l.b16 %v4096
    %v4810 = vunpack.c.h.b16 %v4096
    %v4811 = vunpack.c.l.b16 %v4097
    %v4812 = vunpack.c.h.b16 %v4097
    %v4813 = vunpack.c.l.b16 %v4098
    %v4814 = vunpack.c.h.b16 %v4098
    %v4815 = vunpack.c.l.b16 %v4099
    %v4816 = vunpack.c.h.b16 %v4099
    %v4817 = vunpack.c.l.b16 %v4100
    %v4818 = vunpack.c.h.b16 %v4100
    %v4819 = vunpack.c.l.b16 %v4101
    %v4820 = vunpack.c.h.b16 %v4101
    %v4821 = vunpack.c.l.b16 %v4102
    %v4822 = vunpack.c.h.b16 %v4102
    %v4823 = vunpack.c.l.b16 %v4103
    %v4824 = vunpack.c.h.b16 %v4103
    %v4825 = vunpack.c.l.b16 %v4104
    %v4826 = vunpack.c.h.b16 %v4104
    %v4827 = vunpack.c.l.b16 %v4105
    %v4828 = vunpack.c.h.b16 %v4105
    %v4829 = vunpack.c.l.b16 %v4106
    %v4830 = vunpack.c.h.b16 %v4106
    %v4831 = vunpack.c.l.b16 %v4107
    %v4832 = vunpack.c.h.b16 %v4107
    %v4833 = vunpack.c.l.b16 %v4108
    %v4834 = vunpack.c.h.b16 %v4108
    %v4835 = vunpack.c.l.b16 %v4109
    %v4836 = vunpack.c.h.b16 %v4109
    %v4837 = vunpack.c.l.b16 %v4110
    %v4838 = vunpack.c.h.b16 %v4110
    %v4839 = vunpack.c.l.b16 %v4111
    %v4840 = vunpack.c.h.b16 %v4111
    %v4841 = vunpack.c.l.b16 %v4112
    %v4842 = vunpack.c.h.b16 %v4112
    %v4843 = vunpack.c.l.b16 %v4113
    %v4844 = vunpack.c.h.b16 %v4113
    %v4845 = vunpack.c.l.b16 %v4114
    %v4846 = vunpack.c.h.b16 %v4114
    %v4847 = vunpack.c.l.b16 %v4115
    %v4848 = vunpack.c.h.b16 %v4115
    %v4849 = vunpack.c.l.b16 %v4116
    %v4850 = vunpack.c.h.b16 %v4116
    %v4851 = vunpack.c.l.b16 %v4117
    %v4852 = vunpack.c.h.b16 %v4117
    %v4853 = vunpack.c.l.b16 %v4118
    %v4854 = vunpack.c.h.b16 %v4118
    %v4855 = vunpack.c.l.b16 %v4119
    %v4856 = vunpack.c.h.b16 %v4119
    %v4857 = vunpack.c.l.b16 %v4120
    %v4858 = vunpack.c.h.b16 %v4120
    %v4859 = vunpack.c.l.b16 %v4121
    %v4860 = vunpack.c.h.b16 %v4121
    %v4861 = vunpack.c.l.b16 %v4122
    %v4862 = vunpack.c.h.b16 %v4122
    %v4863 = vunpack.c.l.b16 %v4123
    %v4864 = vunpack.c.h.b16 %v4123
    %v4865 = vunpack.c.l.b16 %v4124
    %v4866 = vunpack.c.h.b16 %v4124
    %v4867 = vunpack.c.l.b16 %v4125
    %v4868 = vunpack.c.h.b16 %v4125
    %v4869 = vunpack.c.l.b16 %v4126
    %v4870 = vunpack.c.h.b16 %v4126
    %v4871 = vunpack.c.l.b16 %v4127
    %v4872 = vunpack.c.h.b16 %v4127
    %v4873 = vunpack.c.l.b16 %v4128
    %v4874 = vunpack.c.h.b16 %v4128
    %v4875 = vunpack.c.l.b16 %v4129
    %v4876 = vunpack.c.h.b16 %v4129
    %v4877 = vunpack.c.l.b16 %v4130
    %v4878 = vunpack.c.h.b16 %v4130
    %v4879 = vunpack.c.l.b16 %v4131
    %v4880 = vunpack.c.h.b16 %v4131
    %v4881 = vunpack.c.l.b16 %v4132
    %v4882 = vunpack.c.h.b16 %v4132
    %v4883 = vunpack.c.l.b16 %v4133
    %v4884 = vunpack.c.h.b16 %v4133
    %v4885 = vunpack.c.l.b16 %v4134
    %v4886 = vunpack.c.h.b16 %v4134
    %v4887 = vunpack.c.l.b16 %v4135
    %v4888 = vunpack.c.h.b16 %v4135
    %v4889 = vunpack.c.l.b16 %v4136
    %v4890 = vunpack.c.h.b16 %v4136
    %v4891 = vunpack.c.l.b16 %v4137
    %v4892 = vunpack.c.h.b16 %v4137
    %v4893 = vunpack.c.l.b16 %v4138
    %v4894 = vunpack.c.h.b16 %v4138
    %v4895 = vunpack.c.l.b16 %v4139
    %v4896 = vunpack.c.h.b16 %v4139
    %v4897 = vunpack.c.l.b16 %v4140
    %v4898 = vunpack.c.h.b16 %v4140
    %v4899 = vunpack.c.l.b16 %v4141
    %v4900 = vunpack.c.h.b16 %v4141
    %v4901 = vunpack.c.l.b16 %v4142
    %v4902 = vunpack.c.h.b16 %v4142
    %v4903 = vunpack.c.l.b16 %v4143
    %v4904 = vunpack.c.h.b16 %v4143
    %v4905 = vunpack.c.l.b16 %v4144
    %v4906 = vunpack.c.h.b16 %v4144
    %v4907 = vunpack.c.l.b16 %v4145
    %v4908 = vunpack.c.h.b16 %v4145
    %v4909 = vunpack.c.l.b16 %v4146
    %v4910 = vunpack.c.h.b16 %v4146
    %v4911 = vunpack.c.l.b16 %v4147
    %v4912 = vunpack.c.h.b16 %v4147
    %v4913 = vunpack.c.l.b16 %v4148
    %v4914 = vunpack.c.h.b16 %v4148
    %v4915 = vunpack.c.l.b16 %v4149
    %v4916 = vunpack.c.h.b16 %v4149
    %v4917 = vunpack.c.l.b16 %v4150
    %v4918 = vunpack.c.h.b16 %v4150
    %v4919 = vunpack.c.l.b16 %v4151
    %v4920 = vunpack.c.h.b16 %v4151
    %v4921 = vunpack.c.l.b16 %v4152
    %v4922 = vunpack.c.h.b16 %v4152
    %v4923 = vunpack.c.l.b16 %v4153
    %v4924 = vunpack.c.h.b16 %v4153
    %v4925 = vunpack.c.l.b16 %v4154
    %v4926 = vunpack.c.h.b16 %v4154
    %v4927 = vunpack.c.l.b16 %v4155
    %v4928 = vunpack.c.h.b16 %v4155
    %v4929 = vunpack.c.l.b16 %v4156
    %v4930 = vunpack.c.h.b16 %v4156
    %v4931 = vpack.c.b16 %v4435, %v4419
    %v4932 = vpack.c.b16 %v4436, %v4420
    %v4933 = vpack.c.b16 %v4437, %v4421
    %v4934 = vpack.c.b16 %v4438, %v4422
    %v4935 = vpack.c.b16 %v4439, %v4423
    %v4936 = vpack.c.b16 %v4440, %v4424
    %v4937 = vpack.c.b16 %v4441, %v4425
    %v4938 = vpack.c.b16 %v4442, %v4426
    %v4939 = vpack.c.b16 %v4443, %v4427
    %v4940 = vpack.c.b16 %v4444, %v4428
    %v4941 = vpack.c.b16 %v4445, %v4429
    %v4942 = vpack.c.b16 %v4446, %v4430
    %v4943 = vpack.c.b16 %v4447, %v4431
    %v4944 = vpack.c.b16 %v4448, %v4432
    %v4945 = vpack.c.b16 %v4449, %v4433
    %v4946 = vpack.c.b16 %v4450, %v4434
    %v4947 = vpack.c.b16 %v4467, %v4451
    %v4948 = vpack.c.b16 %v4468, %v4452
    %v4949 = vpack.c.b16 %v4469, %v4453
    %v4950 = vpack.c.b16 %v4470, %v4454
    %v4951 = vpack.c.b16 %v4471, %v4455
    %v4952 = vpack.c.b16 %v4472, %v4456
    %v4953 = vpack.c.b16 %v4473, %v4457
    %v4954 = vpack.c.b16 %v4474, %v4458
    %v4955 = vpack.c.b16 %v4475, %v4459
    %v4956 = vpack.c.b16 %v4476, %v4460
    %v4957 = vpack.c.b16 %v4477, %v4461
    %v4958 = vpack.c.b16 %v4478, %v4462
    %v4959 = vpack.c.b16 %v4479, %v4463
    %v4960 = vpack.c.b16 %v4480, %v4464
    %v4961 = vpack.c.b16 %v4481, %v4465
    %v4962 = vpack.c.b16 %v4482, %v4466
    %v4963 = vpack.c.b16 %v4499, %v4483
    %v4964 = vpack.c.b16 %v4500, %v4484
    %v4965 = vpack.c.b16 %v4501, %v4485
    %v4966 = vpack.c.b16 %v4502, %v4486
    %v4967 = vpack.c.b16 %v4503, %v4487
    %v4968 = vpack.c.b16 %v4504, %v4488
    %v4969 = vpack.c.b16 %v4505, %v4489
    %v4970 = vpack.c.b16 %v4506, %v4490
    %v4971 = vpack.c.b16 %v4507, %v4491
    %v4972 = vpack.c.b16 %v4508, %v4492
    %v4973 = vpack.c.b16 %v4509, %v4493
    %v4974 = vpack.c.b16 %v4510, %v4494
    %v4975 = vpack.c.b16 %v4511, %v4495
    %v4976 = vpack.c.b16 %v4512, %v4496
    %v4977 = vpack.c.b16 %v4513, %v4497
    %v4978 = vpack.c.b16 %v4514, %v4498
    %v4979 = vpack.c.b16 %v4531, %v4515
    %v4980 = vpack.c.b16 %v4532, %v4516
    %v4981 = vpack.c.b16 %v4533, %v4517
    %v4982 = vpack.c.b16 %v4534, %v4518
    %v4983 = vpack.c.b16 %v4535, %v4519
    %v4984 = vpack.c.b16 %v4536, %v4520
    %v4985 = vpack.c.b16 %v4537, %v4521
    %v4986 = vpack.c.b16 %v4538, %v4522
    %v4987 = vpack.c.b16 %v4539, %v4523
    %v4988 = vpack.c.b16 %v4540, %v4524
    %v4989 = vpack.c.b16 %v4541, %v4525
    %v4990 = vpack.c.b16 %v4542, %v4526
    %v4991 = vpack.c.b16 %v4543, %v4527
    %v4992 = vpack.c.b16 %v4544, %v4528
    %v4993 = vpack.c.b16 %v4545, %v4529
    %v4994 = vpack.c.b16 %v4546, %v4530
    %v4995 = vpack.c.b16 %v4563, %v4547
    %v4996 = vpack.c.b16 %v4564, %v4548
    %v4997 = vpack.c.b16 %v4565, %v4549
    %v4998 = vpack.c.b16 %v4566, %v4550
    %v4999 = vpack.c.b16 %v4567, %v4551
    %v5000 = vpack.c.b16 %v4568, %v4552
    %v5001 = vpack.c.b16 %v4569, %v4553
    %v5002 = vpack.c.b16 %v4570, %v4554
    %v5003 = vpack.c.b16 %v4571, %v4555
    %v5004 = vpack.c.b16 %v4572, %v4556
    %v5005 = vpack.c.b16 %v4573, %v4557
    %v5006 = vpack.c.b16 %v4574, %v4558
    %v5007 = vpack.c.b16 %v4575, %v4559
    %v5008 = vpack.c.b16 %v4576, %v4560
    %v5009 = vpack.c.b16 %v4577, %v4561
    %v5010 = vpack.c.b16 %v4578, %v4562
    %v5011 = vpack.c.b16 %v4595, %v4579
    %v5012 = vpack.c.b16 %v4596, %v4580
    %v5013 = vpack.c.b16 %v4597, %v4581
    %v5014 = vpack.c.b16 %v4598, %v4582
    %v5015 = vpack.c.b16 %v4599, %v4583
    %v5016 = vpack.c.b16 %v4600, %v4584
    %v5017 = vpack.c.b16 %v4601, %v4585
    %v5018 = vpack.c.b16 %v4602, %v4586
    %v5019 = vpack.c.b16 %v4603, %v4587
    %v5020 = vpack.c.b16 %v4604, %v4588
    %v5021 = vpack.c.b16 %v4605, %v4589
    %v5022 = vpack.c.b16 %v4606, %v4590
    %v5023 = vpack.c.b16 %v4607, %v4591
    %v5024 = vpack.c.b16 %v4608, %v4592
    %v5025 = vpack.c.b16 %v4609, %v4593
    %v5026 = vpack.c.b16 %v4610, %v4594
    %v5027 = vpack.c.b16 %v4627, %v4611
    %v5028 = vpack.c.b16 %v4628, %v4612
    %v5029 = vpack.c.b16 %v4629, %v4613
    %v5030 = vpack.c.b16 %v4630, %v4614
    %v5031 = vpack.c.b16 %v4631, %v4615
    %v5032 = vpack.c.b16 %v4632, %v4616
    %v5033 = vpack.c.b16 %v4633, %v4617
    %v5034 = vpack.c.b16 %v4634, %v4618
    %v5035 = vpack.c.b16 %v4635, %v4619
    %v5036 = vpack.c.b16 %v4636, %v4620
    %v5037 = vpack.c.b16 %v4637, %v4621
    %v5038 = vpack.c.b16 %v4638, %v4622
    %v5039 = vpack.c.b16 %v4639, %v4623
    %v5040 = vpack.c.b16 %v4640, %v4624
    %v5041 = vpack.c.b16 %v4641, %v4625
    %v5042 = vpack.c.b16 %v4642, %v4626
    %v5043 = vpack.c.b16 %v4659, %v4643
    %v5044 = vpack.c.b16 %v4660, %v4644
    %v5045 = vpack.c.b16 %v4661, %v4645
    %v5046 = vpack.c.b16 %v4662, %v4646
    %v5047 = vpack.c.b16 %v4663, %v4647
    %v5048 = vpack.c.b16 %v4664, %v4648
    %v5049 = vpack.c.b16 %v4665, %v4649
    %v5050 = vpack.c.b16 %v4666, %v4650
    %v5051 = vpack.c.b16 %v4667, %v4651
    %v5052 = vpack.c.b16 %v4668, %v4652
    %v5053 = vpack.c.b16 %v4669, %v4653
    %v5054 = vpack.c.b16 %v4670, %v4654
    %v5055 = vpack.c.b16 %v4671, %v4655
    %v5056 = vpack.c.b16 %v4672, %v4656
    %v5057 = vpack.c.b16 %v4673, %v4657
    %v5058 = vpack.c.b16 %v4674, %v4658
    %v5059 = vpack.c.b16 %v4691, %v4675
    %v5060 = vpack.c.b16 %v4692, %v4676
    %v5061 = vpack.c.b16 %v4693, %v4677
    %v5062 = vpack.c.b16 %v4694, %v4678
    %v5063 = vpack.c.b16 %v4695, %v4679
    %v5064 = vpack.c.b16 %v4696, %v4680
    %v5065 = vpack.c.b16 %v4697, %v4681
    %v5066 = vpack.c.b16 %v4698, %v4682
    %v5067 = vpack.c.b16 %v4699, %v4683
    %v5068 = vpack.c.b16 %v4700, %v4684
    %v5069 = vpack.c.b16 %v4701, %v4685
    %v5070 = vpack.c.b16 %v4702, %v4686
    %v5071 = vpack.c.b16 %v4703, %v4687
    %v5072 = vpack.c.b16 %v4704, %v4688
    %v5073 = vpack.c.b16 %v4705, %v4689
    %v5074 = vpack.c.b16 %v4706, %v4690
    %v5075 = vpack.c.b16 %v4723, %v4707
    %v5076 = vpack.c.b16 %v4724, %v4708
    %v5077 = vpack.c.b16 %v4725, %v4709
    %v5078 = vpack.c.b16 %v4726, %v4710
    %v5079 = vpack.c.b16 %v4727, %v4711
    %v5080 = vpack.c.b16 %v4728, %v4712
    %v5081 = vpack.c.b16 %v4729, %v4713
    %v5082 = vpack.c.b16 %v4730, %v4714
    %v5083 = vpack.c.b16 %v4731, %v4715
    %v5084 = vpack.c.b16 %v4732, %v4716
    %v5085 = vpack.c.b16 %v4733, %v4717
    %v5086 = vpack.c.b16 %v4734, %v4718
    %v5087 = vpack.c.b16 %v4735, %v4719
    %v5088 = vpack.c.b16 %v4736, %v4720
    %v5089 = vpack.c.b16 %v4737, %v4721
    %v5090 = vpack.c.b16 %v4738, %v4722
    %v5091 = vpack.c.b16 %v4755, %v4739
    %v5092 = vpack.c.b16 %v4756, %v4740
    %v5093 = vpack.c.b16 %v4757, %v4741
    %v5094 = vpack.c.b16 %v4758, %v4742
    %v5095 = vpack.c.b16 %v4759, %v4743
    %v5096 = vpack.c.b16 %v4760, %v4744
    %v5097 = vpack.c.b16 %v4761, %v4745
    %v5098 = vpack.c.b16 %v4762, %v4746
    %v5099 = vpack.c.b16 %v4763, %v4747
    %v5100 = vpack.c.b16 %v4764, %v4748
    %v5101 = vpack.c.b16 %v4765, %v4749
    %v5102 = vpack.c.b16 %v4766, %v4750
    %v5103 = vpack.c.b16 %v4767, %v4751
    %v5104 = vpack.c.b16 %v4768, %v4752
    %v5105 = vpack.c.b16 %v4769, %v4753
    %v5106 = vpack.c.b16 %v4770, %v4754
    %v5107 = vpack.c.b16 %v4787, %v4771
    %v5108 = vpack.c.b16 %v4788, %v4772
    %v5109 = vpack.c.b16 %v4789, %v4773
    %v5110 = vpack.c.b16 %v4790, %v4774
    %v5111 = vpack.c.b16 %v4791, %v4775
    %v5112 = vpack.c.b16 %v4792, %v4776
    %v5113 = vpack.c.b16 %v4793, %v4777
    %v5114 = vpack.c.b16 %v4794, %v4778
    %v5115 = vpack.c.b16 %v4795, %v4779
    %v5116 = vpack.c.b16 %v4796, %v4780
    %v5117 = vpack.c.b16 %v4797, %v4781
    %v5118 = vpack.c.b16 %v4798, %v4782
    %v5119 = vpack.c.b16 %v4799, %v4783
    %v5120 = vpack.c.b16 %v4800, %v4784
    %v5121 = vpack.c.b16 %v4801, %v4785
    %v5122 = vpack.c.b16 %v4802, %v4786
    %v5123 = vpack.c.b16 %v4819, %v4803
    %v5124 = vpack.c.b16 %v4820, %v4804
    %v5125 = vpack.c.b16 %v4821, %v4805
    %v5126 = vpack.c.b16 %v4822, %v4806
    %v5127 = vpack.c.b16 %v4823, %v4807
    %v5128 = vpack.c.b16 %v4824, %v4808
    %v5129 = vpack.c.b16 %v4825, %v4809
    %v5130 = vpack.c.b16 %v4826, %v4810
    %v5131 = vpack.c.b16 %v4827, %v4811
    %v5132 = vpack.c.b16 %v4828, %v4812
    %v5133 = vpack.c.b16 %v4829, %v4813
    %v5134 = vpack.c.b16 %v4830, %v4814
    %v5135 = vpack.c.b16 %v4831, %v4815
    %v5136 = vpack.c.b16 %v4832, %v4816
    %v5137 = vpack.c.b16 %v4833, %v4817
    %v5138 = vpack.c.b16 %v4834, %v4818
    %v5139 = vpack.c.b16 %v4851, %v4835
    %v5140 = vpack.c.b16 %v4852, %v4836
    %v5141 = vpack.c.b16 %v4853, %v4837
    %v5142 = vpack.c.b16 %v4854, %v4838
    %v5143 = vpack.c.b16 %v4855, %v4839
    %v5144 = vpack.c.b16 %v4856, %v4840
    %v5145 = vpack.c.b16 %v4857, %v4841
    %v5146 = vpack.c.b16 %v4858, %v4842
    %v5147 = vpack.c.b16 %v4859, %v4843
    %v5148 = vpack.c.b16 %v4860, %v4844
    %v5149 = vpack.c.b16 %v4861, %v4845
    %v5150 = vpack.c.b16 %v4862, %v4846
    %v5151 = vpack.c.b16 %v4863, %v4847
    %v5152 = vpack.c.b16 %v4864, %v4848
    %v5153 = vpack.c.b16 %v4865, %v4849
    %v5154 = vpack.c.b16 %v4866, %v4850
    %v5155 = vpack.c.b16 %v4883, %v4867
    %v5156 = vpack.c.b16 %v4884, %v4868
    %v5157 = vpack.c.b16 %v4885, %v4869
    %v5158 = vpack.c.b16 %v4886, %v4870
    %v5159 = vpack.c.b16 %v4887, %v4871
    %v5160 = vpack.c.b16 %v4888, %v4872
    %v5161 = vpack.c.b16 %v4889, %v4873
    %v5162 = vpack.c.b16 %v4890, %v4874
    %v5163 = vpack.c.b16 %v4891, %v4875
    %v5164 = vpack.c.b16 %v4892, %v4876
    %v5165 = vpack.c.b16 %v4893, %v4877
    %v5166 = vpack.c.b16 %v4894, %v4878
    %v5167 = vpack.c.b16 %v4895, %v4879
    %v5168 = vpack.c.b16 %v4896, %v4880
    %v5169 = vpack.c.b16 %v4897, %v4881
    %v5170 = vpack.c.b16 %v4898, %v4882
    %v5171 = vpack.c.b16 %v4915, %v4899
    %v5172 = vpack.c.b16 %v4916, %v4900
    %v5173 = vpack.c.b16 %v4917, %v4901
    %v5174 = vpack.c.b16 %v4918, %v4902
    %v5175 = vpack.c.b16 %v4919, %v4903
    %v5176 = vpack.c.b16 %v4920, %v4904
    %v5177 = vpack.c.b16 %v4921, %v4905
    %v5178 = vpack.c.b16 %v4922, %v4906
    %v5179 = vpack.c.b16 %v4923, %v4907
    %v5180 = vpack.c.b16 %v4924, %v4908
    %v5181 = vpack.c.b16 %v4925, %v4909
    %v5182 = vpack.c.b16 %v4926, %v4910
    %v5183 = vpack.c.b16 %v4927, %v4911
    %v5184 = vpack.c.b16 %v4928, %v4912
    %v5185 = vpack.c.b16 %v4929, %v4913
    %v5186 = vpack.c.b16 %v4930, %v4914
    %5443 = vmatpush.bf16.xpose.msra.mxu0 %v5043
    %5444 = vmatpush.bf16.xpose.msra.mxu0 %v5027
    %5445 = vmatpush.bf16.xpose.msra.mxu0 %v5011
    %5446 = vmatpush.bf16.xpose.msra.mxu0 %v4995
    %5447 = vmatpush.bf16.xpose.msra.mxu0 %v4979
    %5448 = vmatpush.bf16.xpose.msra.mxu0 %v4963
    %5449 = vmatpush.bf16.xpose.msra.mxu0 %v4947
    %5450 = vmatpush.bf16.xpose.msra.mxu0 %v4931
    %5451 = vmatmul.bf16.gmra.mxu0 %v3885
    %v5452 = vpop.f32.mrf.mxu0
    %v5453 = vadd.f32 %v4159, %v5452
    %v5454 = vpop.f32.mrf.mxu0
    %v5455 = vadd.f32 %v4159, %v5454
    %5456 = vdwg.mxu0
    %5457 = vmatpush.bf16.xpose.msra.mxu0 %v5044
    %5458 = vmatpush.bf16.xpose.msra.mxu0 %v5028
    %5459 = vmatpush.bf16.xpose.msra.mxu0 %v5012
    %5460 = vmatpush.bf16.xpose.msra.mxu0 %v4996
    %5461 = vmatpush.bf16.xpose.msra.mxu0 %v4980
    %5462 = vmatpush.bf16.xpose.msra.mxu0 %v4964
    %5463 = vmatpush.bf16.xpose.msra.mxu0 %v4948
    %5464 = vmatpush.bf16.xpose.msra.mxu0 %v4932
    %5465 = vmatmul.bf16.gmra.mxu0 %v3886
    %v5466 = vpop.f32.mrf.mxu0
    %v5467 = vadd.f32 %v5453, %v5466
    %v5468 = vpop.f32.mrf.mxu0
    %v5469 = vadd.f32 %v5455, %v5468
    %5470 = vdwg.mxu0
    %5471 = vmatpush.bf16.xpose.msra.mxu0 %v5045
    %5472 = vmatpush.bf16.xpose.msra.mxu0 %v5029
    %5473 = vmatpush.bf16.xpose.msra.mxu0 %v5013
    %5474 = vmatpush.bf16.xpose.msra.mxu0 %v4997
    %5475 = vmatpush.bf16.xpose.msra.mxu0 %v4981
    %5476 = vmatpush.bf16.xpose.msra.mxu0 %v4965
    %5477 = vmatpush.bf16.xpose.msra.mxu0 %v4949
    %5478 = vmatpush.bf16.xpose.msra.mxu0 %v4933
    %5479 = vmatmul.bf16.gmra.mxu0 %v3887
    %v5480 = vpop.f32.mrf.mxu0
    %v5481 = vadd.f32 %v5467, %v5480
    %v5482 = vpop.f32.mrf.mxu0
    %v5483 = vadd.f32 %v5469, %v5482
    %5484 = vdwg.mxu0
    %5485 = vmatpush.bf16.xpose.msra.mxu0 %v5046
    %5486 = vmatpush.bf16.xpose.msra.mxu0 %v5030
    %5487 = vmatpush.bf16.xpose.msra.mxu0 %v5014
    %5488 = vmatpush.bf16.xpose.msra.mxu0 %v4998
    %5489 = vmatpush.bf16.xpose.msra.mxu0 %v4982
    %5490 = vmatpush.bf16.xpose.msra.mxu0 %v4966
    %5491 = vmatpush.bf16.xpose.msra.mxu0 %v4950
    %5492 = vmatpush.bf16.xpose.msra.mxu0 %v4934
    %5493 = vmatmul.bf16.gmra.mxu0 %v3888
    %v5494 = vpop.f32.mrf.mxu0
    %v5495 = vadd.f32 %v5481, %v5494
    %v5496 = vpop.f32.mrf.mxu0
    %v5497 = vadd.f32 %v5483, %v5496
    %5498 = vdwg.mxu0
    %5499 = vmatpush.bf16.xpose.msra.mxu0 %v5047
    %5500 = vmatpush.bf16.xpose.msra.mxu0 %v5031
    %5501 = vmatpush.bf16.xpose.msra.mxu0 %v5015
    %5502 = vmatpush.bf16.xpose.msra.mxu0 %v4999
    %5503 = vmatpush.bf16.xpose.msra.mxu0 %v4983
    %5504 = vmatpush.bf16.xpose.msra.mxu0 %v4967
    %5505 = vmatpush.bf16.xpose.msra.mxu0 %v4951
    %5506 = vmatpush.bf16.xpose.msra.mxu0 %v4935
    %5507 = vmatmul.bf16.gmra.mxu0 %v3889
    %v5508 = vpop.f32.mrf.mxu0
    %v5509 = vadd.f32 %v5495, %v5508
    %v5510 = vpop.f32.mrf.mxu0
    %v5511 = vadd.f32 %v5497, %v5510
    %5512 = vdwg.mxu0
    %5513 = vmatpush.bf16.xpose.msra.mxu0 %v5048
    %5514 = vmatpush.bf16.xpose.msra.mxu0 %v5032
    %5515 = vmatpush.bf16.xpose.msra.mxu0 %v5016
    %5516 = vmatpush.bf16.xpose.msra.mxu0 %v5000
    %5517 = vmatpush.bf16.xpose.msra.mxu0 %v4984
    %5518 = vmatpush.bf16.xpose.msra.mxu0 %v4968
    %5519 = vmatpush.bf16.xpose.msra.mxu0 %v4952
    %5520 = vmatpush.bf16.xpose.msra.mxu0 %v4936
    %5521 = vmatmul.bf16.gmra.mxu0 %v3890
    %v5522 = vpop.f32.mrf.mxu0
    %v5523 = vadd.f32 %v5509, %v5522
    %v5524 = vpop.f32.mrf.mxu0
    %v5525 = vadd.f32 %v5511, %v5524
    %5526 = vdwg.mxu0
    %5527 = vmatpush.bf16.xpose.msra.mxu0 %v5049
    %5528 = vmatpush.bf16.xpose.msra.mxu0 %v5033
    %5529 = vmatpush.bf16.xpose.msra.mxu0 %v5017
    %5530 = vmatpush.bf16.xpose.msra.mxu0 %v5001
    %5531 = vmatpush.bf16.xpose.msra.mxu0 %v4985
    %5532 = vmatpush.bf16.xpose.msra.mxu0 %v4969
    %5533 = vmatpush.bf16.xpose.msra.mxu0 %v4953
    %5534 = vmatpush.bf16.xpose.msra.mxu0 %v4937
    %5535 = vmatmul.bf16.gmra.mxu0 %v3891
    %v5536 = vpop.f32.mrf.mxu0
    %v5537 = vadd.f32 %v5523, %v5536
    %v5538 = vpop.f32.mrf.mxu0
    %v5539 = vadd.f32 %v5525, %v5538
    %5540 = vdwg.mxu0
    %5541 = vmatpush.bf16.xpose.msra.mxu0 %v5050
    %5542 = vmatpush.bf16.xpose.msra.mxu0 %v5034
    %5543 = vmatpush.bf16.xpose.msra.mxu0 %v5018
    %5544 = vmatpush.bf16.xpose.msra.mxu0 %v5002
    %5545 = vmatpush.bf16.xpose.msra.mxu0 %v4986
    %5546 = vmatpush.bf16.xpose.msra.mxu0 %v4970
    %5547 = vmatpush.bf16.xpose.msra.mxu0 %v4954
    %5548 = vmatpush.bf16.xpose.msra.mxu0 %v4938
    %5549 = vmatmul.bf16.gmra.mxu0 %v3892
    %v5550 = vpop.f32.mrf.mxu0
    %v5551 = vadd.f32 %v5537, %v5550
    %v5552 = vpop.f32.mrf.mxu0
    %v5553 = vadd.f32 %v5539, %v5552
    %5554 = vdwg.mxu0
    %5555 = vmatpush.bf16.xpose.msra.mxu0 %v5051
    %5556 = vmatpush.bf16.xpose.msra.mxu0 %v5035
    %5557 = vmatpush.bf16.xpose.msra.mxu0 %v5019
    %5558 = vmatpush.bf16.xpose.msra.mxu0 %v5003
    %5559 = vmatpush.bf16.xpose.msra.mxu0 %v4987
    %5560 = vmatpush.bf16.xpose.msra.mxu0 %v4971
    %5561 = vmatpush.bf16.xpose.msra.mxu0 %v4955
    %5562 = vmatpush.bf16.xpose.msra.mxu0 %v4939
    %5563 = vmatmul.bf16.gmra.mxu0 %v3893
    %v5564 = vpop.f32.mrf.mxu0
    %v5565 = vadd.f32 %v5551, %v5564
    %v5566 = vpop.f32.mrf.mxu0
    %v5567 = vadd.f32 %v5553, %v5566
    %5568 = vdwg.mxu0
    %5569 = vmatpush.bf16.xpose.msra.mxu0 %v5052
    %5570 = vmatpush.bf16.xpose.msra.mxu0 %v5036
    %5571 = vmatpush.bf16.xpose.msra.mxu0 %v5020
    %5572 = vmatpush.bf16.xpose.msra.mxu0 %v5004
    %5573 = vmatpush.bf16.xpose.msra.mxu0 %v4988
    %5574 = vmatpush.bf16.xpose.msra.mxu0 %v4972
    %5575 = vmatpush.bf16.xpose.msra.mxu0 %v4956
    %5576 = vmatpush.bf16.xpose.msra.mxu0 %v4940
    %5577 = vmatmul.bf16.gmra.mxu0 %v3894
    %v5578 = vpop.f32.mrf.mxu0
    %v5579 = vadd.f32 %v5565, %v5578
    %v5580 = vpop.f32.mrf.mxu0
    %v5581 = vadd.f32 %v5567, %v5580
    %5582 = vdwg.mxu0
    %5583 = vmatpush.bf16.xpose.msra.mxu0 %v5053
    %5584 = vmatpush.bf16.xpose.msra.mxu0 %v5037
    %5585 = vmatpush.bf16.xpose.msra.mxu0 %v5021
    %5586 = vmatpush.bf16.xpose.msra.mxu0 %v5005
    %5587 = vmatpush.bf16.xpose.msra.mxu0 %v4989
    %5588 = vmatpush.bf16.xpose.msra.mxu0 %v4973
    %5589 = vmatpush.bf16.xpose.msra.mxu0 %v4957
    %5590 = vmatpush.bf16.xpose.msra.mxu0 %v4941
    %5591 = vmatmul.bf16.gmra.mxu0 %v3895
    %v5592 = vpop.f32.mrf.mxu0
    %v5593 = vadd.f32 %v5579, %v5592
    %v5594 = vpop.f32.mrf.mxu0
    %v5595 = vadd.f32 %v5581, %v5594
    %5596 = vdwg.mxu0
    %5597 = vmatpush.bf16.xpose.msra.mxu0 %v5054
    %5598 = vmatpush.bf16.xpose.msra.mxu0 %v5038
    %5599 = vmatpush.bf16.xpose.msra.mxu0 %v5022
    %5600 = vmatpush.bf16.xpose.msra.mxu0 %v5006
    %5601 = vmatpush.bf16.xpose.msra.mxu0 %v4990
    %5602 = vmatpush.bf16.xpose.msra.mxu0 %v4974
    %5603 = vmatpush.bf16.xpose.msra.mxu0 %v4958
    %5604 = vmatpush.bf16.xpose.msra.mxu0 %v4942
    %5605 = vmatmul.bf16.gmra.mxu0 %v3896
    %v5606 = vpop.f32.mrf.mxu0
    %v5607 = vadd.f32 %v5593, %v5606
    %v5608 = vpop.f32.mrf.mxu0
    %v5609 = vadd.f32 %v5595, %v5608
    %5610 = vdwg.mxu0
    %5611 = vmatpush.bf16.xpose.msra.mxu0 %v5055
    %5612 = vmatpush.bf16.xpose.msra.mxu0 %v5039
    %5613 = vmatpush.bf16.xpose.msra.mxu0 %v5023
    %5614 = vmatpush.bf16.xpose.msra.mxu0 %v5007
    %5615 = vmatpush.bf16.xpose.msra.mxu0 %v4991
    %5616 = vmatpush.bf16.xpose.msra.mxu0 %v4975
    %5617 = vmatpush.bf16.xpose.msra.mxu0 %v4959
    %5618 = vmatpush.bf16.xpose.msra.mxu0 %v4943
    %5619 = vmatmul.bf16.gmra.mxu0 %v3897
    %v5620 = vpop.f32.mrf.mxu0
    %v5621 = vadd.f32 %v5607, %v5620
    %v5622 = vpop.f32.mrf.mxu0
    %v5623 = vadd.f32 %v5609, %v5622
    %5624 = vdwg.mxu0
    %5625 = vmatpush.bf16.xpose.msra.mxu0 %v5056
    %5626 = vmatpush.bf16.xpose.msra.mxu0 %v5040
    %5627 = vmatpush.bf16.xpose.msra.mxu0 %v5024
    %5628 = vmatpush.bf16.xpose.msra.mxu0 %v5008
    %5629 = vmatpush.bf16.xpose.msra.mxu0 %v4992
    %5630 = vmatpush.bf16.xpose.msra.mxu0 %v4976
    %5631 = vmatpush.bf16.xpose.msra.mxu0 %v4960
    %5632 = vmatpush.bf16.xpose.msra.mxu0 %v4944
    %5633 = vmatmul.bf16.gmra.mxu0 %v3898
    %v5634 = vpop.f32.mrf.mxu0
    %v5635 = vadd.f32 %v5621, %v5634
    %v5636 = vpop.f32.mrf.mxu0
    %v5637 = vadd.f32 %v5623, %v5636
    %5638 = vdwg.mxu0
    %5639 = vmatpush.bf16.xpose.msra.mxu0 %v5057
    %5640 = vmatpush.bf16.xpose.msra.mxu0 %v5041
    %5641 = vmatpush.bf16.xpose.msra.mxu0 %v5025
    %5642 = vmatpush.bf16.xpose.msra.mxu0 %v5009
    %5643 = vmatpush.bf16.xpose.msra.mxu0 %v4993
    %5644 = vmatpush.bf16.xpose.msra.mxu0 %v4977
    %5645 = vmatpush.bf16.xpose.msra.mxu0 %v4961
    %5646 = vmatpush.bf16.xpose.msra.mxu0 %v4945
    %5647 = vmatmul.bf16.gmra.mxu0 %v3899
    %v5648 = vpop.f32.mrf.mxu0
    %v5649 = vadd.f32 %v5635, %v5648
    %v5650 = vpop.f32.mrf.mxu0
    %v5651 = vadd.f32 %v5637, %v5650
    %5652 = vdwg.mxu0
    %5653 = vmatpush.bf16.xpose.msra.mxu0 %v5058
    %5654 = vmatpush.bf16.xpose.msra.mxu0 %v5042
    %5655 = vmatpush.bf16.xpose.msra.mxu0 %v5026
    %5656 = vmatpush.bf16.xpose.msra.mxu0 %v5010
    %5657 = vmatpush.bf16.xpose.msra.mxu0 %v4994
    %5658 = vmatpush.bf16.xpose.msra.mxu0 %v4978
    %5659 = vmatpush.bf16.xpose.msra.mxu0 %v4962
    %5660 = vmatpush.bf16.xpose.msra.mxu0 %v4946
    %5661 = vmatmul.bf16.gmra.mxu0 %v3900
    %v5662 = vpop.f32.mrf.mxu0
    %v5663 = vadd.f32 %v5649, %v5662
    %v5664 = vpop.f32.mrf.mxu0
    %v5665 = vadd.f32 %v5651, %v5664
    %5666 = vdwg.mxu0
    %5667 = vmatpush.bf16.xpose.msra.mxu0 %v5171
    %5668 = vmatpush.bf16.xpose.msra.mxu0 %v5155
    %5669 = vmatpush.bf16.xpose.msra.mxu0 %v5139
    %5670 = vmatpush.bf16.xpose.msra.mxu0 %v5123
    %5671 = vmatpush.bf16.xpose.msra.mxu0 %v5107
    %5672 = vmatpush.bf16.xpose.msra.mxu0 %v5091
    %5673 = vmatpush.bf16.xpose.msra.mxu0 %v5075
    %5674 = vmatpush.bf16.xpose.msra.mxu0 %v5059
    %5675 = vmatmul.bf16.gmra.mxu0 %v3885
    %v5676 = vpop.f32.mrf.mxu0
    %v5677 = vadd.f32 %v4160, %v5676
    %v5678 = vpop.f32.mrf.mxu0
    %v5679 = vadd.f32 %v4160, %v5678
    %5680 = vdwg.mxu0
    %5681 = vmatpush.bf16.xpose.msra.mxu0 %v5172
    %5682 = vmatpush.bf16.xpose.msra.mxu0 %v5156
    %5683 = vmatpush.bf16.xpose.msra.mxu0 %v5140
    %5684 = vmatpush.bf16.xpose.msra.mxu0 %v5124
    %5685 = vmatpush.bf16.xpose.msra.mxu0 %v5108
    %5686 = vmatpush.bf16.xpose.msra.mxu0 %v5092
    %5687 = vmatpush.bf16.xpose.msra.mxu0 %v5076
    %5688 = vmatpush.bf16.xpose.msra.mxu0 %v5060
    %5689 = vmatmul.bf16.gmra.mxu0 %v3886
    %v5690 = vpop.f32.mrf.mxu0
    %v5691 = vadd.f32 %v5677, %v5690
    %v5692 = vpop.f32.mrf.mxu0
    %v5693 = vadd.f32 %v5679, %v5692
    %5694 = vdwg.mxu0
    %5695 = vmatpush.bf16.xpose.msra.mxu0 %v5173
    %5696 = vmatpush.bf16.xpose.msra.mxu0 %v5157
    %5697 = vmatpush.bf16.xpose.msra.mxu0 %v5141
    %5698 = vmatpush.bf16.xpose.msra.mxu0 %v5125
    %5699 = vmatpush.bf16.xpose.msra.mxu0 %v5109
    %5700 = vmatpush.bf16.xpose.msra.mxu0 %v5093
    %5701 = vmatpush.bf16.xpose.msra.mxu0 %v5077
    %5702 = vmatpush.bf16.xpose.msra.mxu0 %v5061
    %5703 = vmatmul.bf16.gmra.mxu0 %v3887
    %v5704 = vpop.f32.mrf.mxu0
    %v5705 = vadd.f32 %v5691, %v5704
    %v5706 = vpop.f32.mrf.mxu0
    %v5707 = vadd.f32 %v5693, %v5706
    %5708 = vdwg.mxu0
    %5709 = vmatpush.bf16.xpose.msra.mxu0 %v5174
    %5710 = vmatpush.bf16.xpose.msra.mxu0 %v5158
    %5711 = vmatpush.bf16.xpose.msra.mxu0 %v5142
    %5712 = vmatpush.bf16.xpose.msra.mxu0 %v5126
    %5713 = vmatpush.bf16.xpose.msra.mxu0 %v5110
    %5714 = vmatpush.bf16.xpose.msra.mxu0 %v5094
    %5715 = vmatpush.bf16.xpose.msra.mxu0 %v5078
    %5716 = vmatpush.bf16.xpose.msra.mxu0 %v5062
    %5717 = vmatmul.bf16.gmra.mxu0 %v3888
    %v5718 = vpop.f32.mrf.mxu0
    %v5719 = vadd.f32 %v5705, %v5718
    %v5720 = vpop.f32.mrf.mxu0
    %v5721 = vadd.f32 %v5707, %v5720
    %5722 = vdwg.mxu0
    %5723 = vmatpush.bf16.xpose.msra.mxu0 %v5175
    %5724 = vmatpush.bf16.xpose.msra.mxu0 %v5159
    %5725 = vmatpush.bf16.xpose.msra.mxu0 %v5143
    %5726 = vmatpush.bf16.xpose.msra.mxu0 %v5127
    %5727 = vmatpush.bf16.xpose.msra.mxu0 %v5111
    %5728 = vmatpush.bf16.xpose.msra.mxu0 %v5095
    %5729 = vmatpush.bf16.xpose.msra.mxu0 %v5079
    %5730 = vmatpush.bf16.xpose.msra.mxu0 %v5063
    %5731 = vmatmul.bf16.gmra.mxu0 %v3889
    %v5732 = vpop.f32.mrf.mxu0
    %v5733 = vadd.f32 %v5719, %v5732
    %v5734 = vpop.f32.mrf.mxu0
    %v5735 = vadd.f32 %v5721, %v5734
    %5736 = vdwg.mxu0
    %5737 = vmatpush.bf16.xpose.msra.mxu0 %v5176
    %5738 = vmatpush.bf16.xpose.msra.mxu0 %v5160
    %5739 = vmatpush.bf16.xpose.msra.mxu0 %v5144
    %5740 = vmatpush.bf16.xpose.msra.mxu0 %v5128
    %5741 = vmatpush.bf16.xpose.msra.mxu0 %v5112
    %5742 = vmatpush.bf16.xpose.msra.mxu0 %v5096
    %5743 = vmatpush.bf16.xpose.msra.mxu0 %v5080
    %5744 = vmatpush.bf16.xpose.msra.mxu0 %v5064
    %5745 = vmatmul.bf16.gmra.mxu0 %v3890
    %v5746 = vpop.f32.mrf.mxu0
    %v5747 = vadd.f32 %v5733, %v5746
    %v5748 = vpop.f32.mrf.mxu0
    %v5749 = vadd.f32 %v5735, %v5748
    %5750 = vdwg.mxu0
    %5751 = vmatpush.bf16.xpose.msra.mxu0 %v5177
    %5752 = vmatpush.bf16.xpose.msra.mxu0 %v5161
    %5753 = vmatpush.bf16.xpose.msra.mxu0 %v5145
    %5754 = vmatpush.bf16.xpose.msra.mxu0 %v5129
    %5755 = vmatpush.bf16.xpose.msra.mxu0 %v5113
    %5756 = vmatpush.bf16.xpose.msra.mxu0 %v5097
    %5757 = vmatpush.bf16.xpose.msra.mxu0 %v5081
    %5758 = vmatpush.bf16.xpose.msra.mxu0 %v5065
    %5759 = vmatmul.bf16.gmra.mxu0 %v3891
    %v5760 = vpop.f32.mrf.mxu0
    %v5761 = vadd.f32 %v5747, %v5760
    %v5762 = vpop.f32.mrf.mxu0
    %v5763 = vadd.f32 %v5749, %v5762
    %5764 = vdwg.mxu0
    %5765 = vmatpush.bf16.xpose.msra.mxu0 %v5178
    %5766 = vmatpush.bf16.xpose.msra.mxu0 %v5162
    %5767 = vmatpush.bf16.xpose.msra.mxu0 %v5146
    %5768 = vmatpush.bf16.xpose.msra.mxu0 %v5130
    %5769 = vmatpush.bf16.xpose.msra.mxu0 %v5114
    %5770 = vmatpush.bf16.xpose.msra.mxu0 %v5098
    %5771 = vmatpush.bf16.xpose.msra.mxu0 %v5082
    %5772 = vmatpush.bf16.xpose.msra.mxu0 %v5066
    %5773 = vmatmul.bf16.gmra.mxu0 %v3892
    %v5774 = vpop.f32.mrf.mxu0
    %v5775 = vadd.f32 %v5761, %v5774
    %v5776 = vpop.f32.mrf.mxu0
    %v5777 = vadd.f32 %v5763, %v5776
    %5778 = vdwg.mxu0
    %5779 = vmatpush.bf16.xpose.msra.mxu0 %v5179
    %5780 = vmatpush.bf16.xpose.msra.mxu0 %v5163
    %5781 = vmatpush.bf16.xpose.msra.mxu0 %v5147
    %5782 = vmatpush.bf16.xpose.msra.mxu0 %v5131
    %5783 = vmatpush.bf16.xpose.msra.mxu0 %v5115
    %5784 = vmatpush.bf16.xpose.msra.mxu0 %v5099
    %5785 = vmatpush.bf16.xpose.msra.mxu0 %v5083
    %5786 = vmatpush.bf16.xpose.msra.mxu0 %v5067
    %5787 = vmatmul.bf16.gmra.mxu0 %v3893
    %v5788 = vpop.f32.mrf.mxu0
    %v5789 = vadd.f32 %v5775, %v5788
    %v5790 = vpop.f32.mrf.mxu0
    %v5791 = vadd.f32 %v5777, %v5790
    %5792 = vdwg.mxu0
    %5793 = vmatpush.bf16.xpose.msra.mxu0 %v5180
    %5794 = vmatpush.bf16.xpose.msra.mxu0 %v5164
    %5795 = vmatpush.bf16.xpose.msra.mxu0 %v5148
    %5796 = vmatpush.bf16.xpose.msra.mxu0 %v5132
    %5797 = vmatpush.bf16.xpose.msra.mxu0 %v5116
    %5798 = vmatpush.bf16.xpose.msra.mxu0 %v5100
    %5799 = vmatpush.bf16.xpose.msra.mxu0 %v5084
    %5800 = vmatpush.bf16.xpose.msra.mxu0 %v5068
    %5801 = vmatmul.bf16.gmra.mxu0 %v3894
    %v5802 = vpop.f32.mrf.mxu0
    %v5803 = vadd.f32 %v5789, %v5802
    %v5804 = vpop.f32.mrf.mxu0
    %v5805 = vadd.f32 %v5791, %v5804
    %5806 = vdwg.mxu0
    %5807 = vmatpush.bf16.xpose.msra.mxu0 %v5181
    %5808 = vmatpush.bf16.xpose.msra.mxu0 %v5165
    %5809 = vmatpush.bf16.xpose.msra.mxu0 %v5149
    %5810 = vmatpush.bf16.xpose.msra.mxu0 %v5133
    %5811 = vmatpush.bf16.xpose.msra.mxu0 %v5117
    %5812 = vmatpush.bf16.xpose.msra.mxu0 %v5101
    %5813 = vmatpush.bf16.xpose.msra.mxu0 %v5085
    %5814 = vmatpush.bf16.xpose.msra.mxu0 %v5069
    %5815 = vmatmul.bf16.gmra.mxu0 %v3895
    %v5816 = vpop.f32.mrf.mxu0
    %v5817 = vadd.f32 %v5803, %v5816
    %v5818 = vpop.f32.mrf.mxu0
    %v5819 = vadd.f32 %v5805, %v5818
    %5820 = vdwg.mxu0
    %5821 = vmatpush.bf16.xpose.msra.mxu0 %v5182
    %5822 = vmatpush.bf16.xpose.msra.mxu0 %v5166
    %5823 = vmatpush.bf16.xpose.msra.mxu0 %v5150
    %5824 = vmatpush.bf16.xpose.msra.mxu0 %v5134
    %5825 = vmatpush.bf16.xpose.msra.mxu0 %v5118
    %5826 = vmatpush.bf16.xpose.msra.mxu0 %v5102
    %5827 = vmatpush.bf16.xpose.msra.mxu0 %v5086
    %5828 = vmatpush.bf16.xpose.msra.mxu0 %v5070
    %5829 = vmatmul.bf16.gmra.mxu0 %v3896
    %v5830 = vpop.f32.mrf.mxu0
    %v5831 = vadd.f32 %v5817, %v5830
    %v5832 = vpop.f32.mrf.mxu0
    %v5833 = vadd.f32 %v5819, %v5832
    %5834 = vdwg.mxu0
    %5835 = vmatpush.bf16.xpose.msra.mxu0 %v5183
    %5836 = vmatpush.bf16.xpose.msra.mxu0 %v5167
    %5837 = vmatpush.bf16.xpose.msra.mxu0 %v5151
    %5838 = vmatpush.bf16.xpose.msra.mxu0 %v5135
    %5839 = vmatpush.bf16.xpose.msra.mxu0 %v5119
    %5840 = vmatpush.bf16.xpose.msra.mxu0 %v5103
    %5841 = vmatpush.bf16.xpose.msra.mxu0 %v5087
    %5842 = vmatpush.bf16.xpose.msra.mxu0 %v5071
    %5843 = vmatmul.bf16.gmra.mxu0 %v3897
    %v5844 = vpop.f32.mrf.mxu0
    %v5845 = vadd.f32 %v5831, %v5844
    %v5846 = vpop.f32.mrf.mxu0
    %v5847 = vadd.f32 %v5833, %v5846
    %5848 = vdwg.mxu0
    %5849 = vmatpush.bf16.xpose.msra.mxu0 %v5184
    %5850 = vmatpush.bf16.xpose.msra.mxu0 %v5168
    %5851 = vmatpush.bf16.xpose.msra.mxu0 %v5152
    %5852 = vmatpush.bf16.xpose.msra.mxu0 %v5136
    %5853 = vmatpush.bf16.xpose.msra.mxu0 %v5120
    %5854 = vmatpush.bf16.xpose.msra.mxu0 %v5104
    %5855 = vmatpush.bf16.xpose.msra.mxu0 %v5088
    %5856 = vmatpush.bf16.xpose.msra.mxu0 %v5072
    %5857 = vmatmul.bf16.gmra.mxu0 %v3898
    %v5858 = vpop.f32.mrf.mxu0
    %v5859 = vadd.f32 %v5845, %v5858
    %v5860 = vpop.f32.mrf.mxu0
    %v5861 = vadd.f32 %v5847, %v5860
    %5862 = vdwg.mxu0
    %5863 = vmatpush.bf16.xpose.msra.mxu0 %v5185
    %5864 = vmatpush.bf16.xpose.msra.mxu0 %v5169
    %5865 = vmatpush.bf16.xpose.msra.mxu0 %v5153
    %5866 = vmatpush.bf16.xpose.msra.mxu0 %v5137
    %5867 = vmatpush.bf16.xpose.msra.mxu0 %v5121
    %5868 = vmatpush.bf16.xpose.msra.mxu0 %v5105
    %5869 = vmatpush.bf16.xpose.msra.mxu0 %v5089
    %5870 = vmatpush.bf16.xpose.msra.mxu0 %v5073
    %5871 = vmatmul.bf16.gmra.mxu0 %v3899
    %v5872 = vpop.f32.mrf.mxu0
    %v5873 = vadd.f32 %v5859, %v5872
    %v5874 = vpop.f32.mrf.mxu0
    %v5875 = vadd.f32 %v5861, %v5874
    %5876 = vdwg.mxu0
    %5877 = vmatpush.bf16.xpose.msra.mxu0 %v5186
    %5878 = vmatpush.bf16.xpose.msra.mxu0 %v5170
    %5879 = vmatpush.bf16.xpose.msra.mxu0 %v5154
    %5880 = vmatpush.bf16.xpose.msra.mxu0 %v5138
    %5881 = vmatpush.bf16.xpose.msra.mxu0 %v5122
    %5882 = vmatpush.bf16.xpose.msra.mxu0 %v5106
    %5883 = vmatpush.bf16.xpose.msra.mxu0 %v5090
    %5884 = vmatpush.bf16.xpose.msra.mxu0 %v5074
    %5885 = vmatmul.bf16.gmra.mxu0 %v3900
    %v5886 = vpop.f32.mrf.mxu0
    %v5887 = vadd.f32 %v5873, %v5886
    %v5888 = vpop.f32.mrf.mxu0
    %v5889 = vadd.f32 %v5875, %v5888
    %5890 = vdwg.mxu0
    %v5891 = vadd.f32 %v1827, %v5663
    %v5892 = vadd.f32 %v1828, %v5887
    %v5893 = vadd.f32 %v1829, %v5665
    %v5894 = vadd.f32 %v1830, %v5889
    %v5895 = vadd.f32 %v5891, %v5892
    %5896 = vadd.xlane.f32.xlu0 %v5895
    %v5897 = vpop.xlane.xlu0 %5896
    %v5898 = vadd.f32 %v5893, %v5894
    %5899 = vadd.xlane.f32.xlu0 %v5898
    %v5900 = vpop.xlane.xlu0 %5899
    %v5901 = vmul.f32 %v5897, %v1766
    %v5902 = vmul.f32 %v5900, %v1766
    %v5903 = vsub.f32 %v5891, %v5901
    %v5904 = vsub.f32 %v5892, %v5901
    %v5905 = vsub.f32 %v5893, %v5902
    %v5906 = vsub.f32 %v5894, %v5902
    %v5907 = vmul.f32 %v5903, %v5903
    %v5908 = vmul.f32 %v5904, %v5904
    %v5909 = vmul.f32 %v5905, %v5905
    %v5910 = vmul.f32 %v5906, %v5906
    %v5911 = vadd.f32 %v5907, %v5908
    %5912 = vadd.xlane.f32.xlu0 %v5911
    %v5913 = vpop.xlane.xlu0 %5912
    %v5914 = vadd.f32 %v5909, %v5910
    %5915 = vadd.xlane.f32.xlu0 %v5914
    %v5916 = vpop.xlane.xlu0 %5915
    %v5917 = vmul.f32 %v5913, %v1766
    %v5918 = vmul.f32 %v5916, %v1766
    %v5919 = vadd.f32 %v5917, 1e-05
    %v5920 = vadd.f32 %v5918, 1e-05
    %v5921 = vrsqrt.pop %v5919
    %v5922 = vmul.f32 %v5921, %v5919
    %v5923 = vmul.f32 %v5922, %v5921
    %v5924 = vmul.f32 0.5, %v5923
    %v5925 = vsub.f32 1.5, %v5924
    %v5926 = vmul.f32 %v5921, %v5925
    %vm5927 = vweird.f32 %v5919
    %vm5928 = vweird.f32 %v5921
    %vm5929 = vmor %vm5927, %vm5928
    %v5930 = vsel %vm5929, %v5921, %v5926
    %v5931 = vrsqrt.pop %v5920
    %v5932 = vmul.f32 %v5931, %v5920
    %v5933 = vmul.f32 %v5932, %v5931
    %v5934 = vmul.f32 0.5, %v5933
    %v5935 = vsub.f32 1.5, %v5934
    %v5936 = vmul.f32 %v5931, %v5935
    %vm5937 = vweird.f32 %v5920
    %vm5938 = vweird.f32 %v5931
    %vm5939 = vmor %vm5937, %vm5938
    %v5940 = vsel %vm5939, %v5931, %v5936
    %v5941 = vmul.f32 %v5903, %v5930
    %v5942 = vmul.f32 %v5904, %v5930
    %v5943 = vmul.f32 %v5905, %v5940
    %v5944 = vmul.f32 %v5906, %v5940
    %v5945 = vld [vmem:[#allocation14] sm:$0x3]
    %v5947 = vperm.slane %v5945, 0
    %v5948 = vperm.slane %v5945, 1
    %v5951 = vmul.f32 %v5941, %v5947
    %v5952 = vmul.f32 %v5942, %v5948
    %v5953 = vmul.f32 %v5943, %v5947
    %v5954 = vmul.f32 %v5944, %v5948
    %v5955 = vld [vmem:[%s14] sm:$0x3]
    %v5957 = vperm.slane %v5955, 0
    %v5958 = vperm.slane %v5955, 1
    %v5961 = vadd.f32 %v5951, %v5957
    %v5962 = vadd.f32 %v5952, %v5958
    %v5963 = vadd.f32 %v5953, %v5957
    %v5964 = vadd.f32 %v5954, %v5958
    %v5965 = vadd.f32 %v5961, 0.0
    %v5966 = vadd.f32 %v5962, 0.0
    %v5967 = vadd.f32 %v5965, %v5963
    %v5968 = vadd.f32 %v5966, %v5964
    %v5969 = vmul.f32 %v5967, 0.5
    %v5970 = vmul.f32 %v5968, 0.5
    %v5971 = vmax.f32 %v5969, 0.0
    %v5972 = vmax.f32 %v5970, 0.0
    %5973 = vst [vmem:[#allocation16] sm:$0xff] %v5971
    %5974 = vst [vmem:[#allocation16 + $0x8] sm:$0xff] %v5972
    // Predicated region
    $region94: #{tpu_custom_call.1} parent=1 // pred_check
      _
    $region95: #{tpu_custom_call.1} parent=1 // pred_check_branch
      %5976 = sbr.rel (0) target = $region97
    $region96: #{tpu_custom_call.1} parent=1 // pred_region
      %5978 = vsyncadd [#allocation4], 0
      %s5980 = sshll.u32 [#allocation16], 4
      %s5981 = int_to_ptr.vmem [resolvable:$true] %s5980
      %s5982 = sshll.u32 %s15, 4
      %s5983 = int_to_ptr.hbm [resolvable:$true] %s5982
      %5985 = dma.vmem_to_hbm [thread:$0]  %s5981, 256, %s5983, [#allocation4]
    $region97: #{tpu_custom_call.1} parent=1 // pred_fallthru
      _
    // Predicated region
    $region98: #{tpu_custom_call.1} parent=1 // pred_check
      _
    $region99: #{tpu_custom_call.1} parent=1 // pred_check_branch
      %5987 = sbr.rel (0) target = $region101
    $region100: #{tpu_custom_call.1} parent=1 // pred_region
      %5989 = dma.done [#allocation4], 256
    $region101: #{tpu_custom_call.1} parent=1 // pred_fallthru
      _
    %5990 = vsyncpa [#allocation3], 1
    %5991 = vsyncpa [#allocation6], 1
    %5992 = vsyncpa [#allocation9], 1
    %5993 = vsyncpa [#allocation12], 1
    %5994 = vsyncpa [#allocation15], 1
    %5995 = vsyncpa [#allocation4], 1

</llo_original>
